<compile_context>
chip_gen: v7x
topology: tpu7x:2x2x1
jax: 0.10.0
libtpu: 0.0.40
codegen_flags: <defaults>
</compile_context>

<pallas_src>
import functools

import jax
import jax.numpy as jnp
from jax.experimental import pallas as pl
from jax.experimental.pallas import tpu as pltpu

FRAMES = 3
H = 7
W = 7
HW = H * W                  # 49
C1 = 16
C2 = 20
FLAT = C2 * HW              # 980 (torch Flatten size)
HIDDEN = 512
N_ACTIONS = 7               # MiniGrid DoorKey action space

# Lane-aligned (padded) widths.
IN_RAW = FRAMES * HW        # 147
IN_PAD = 256
H1_RAW = C1 * HW            # 784
H1_PAD = 896                # 7 * 128
H2_RAW = FLAT               # 980
H2_PAD = 1024               # 8 * 128
OUT_PAD = 128


def _round_up(n, m):
    return (n + m - 1) // m * m


# ---------------------------------------------------------------------------
# Fused kernel: 5 GEMMs + ReLUs, everything stays in VMEM for one batch block.
# ---------------------------------------------------------------------------
def _qnet_kernel(x_ref, m1_ref, b1_ref, m2_ref, b2_ref,
                 w3_ref, b3_ref, w4_ref, b4_ref, w5_ref, b5_ref, o_ref):
    # x_ref: (TB, IN_PAD) f32.  Weights are bf16; accumulate in f32 on the MXU.
    h = x_ref[...].astype(jnp.bfloat16)
    h = jnp.dot(h, m1_ref[...], preferred_element_type=jnp.float32) + b1_ref[...]
    h = jnp.maximum(h, 0.0).astype(jnp.bfloat16)                      # conv1 + ReLU
    h = jnp.dot(h, m2_ref[...], preferred_element_type=jnp.float32) + b2_ref[...]
    h = jnp.maximum(h, 0.0).astype(jnp.bfloat16)                      # conv2 + ReLU (== flatten)
    h = jnp.dot(h, w3_ref[...], preferred_element_type=jnp.float32) + b3_ref[...]
    h = jnp.maximum(h, 0.0).astype(jnp.bfloat16)                      # fc1 + ReLU
    h = jnp.dot(h, w4_ref[...], preferred_element_type=jnp.float32) + b4_ref[...]
    h = jnp.maximum(h, 0.0).astype(jnp.bfloat16)                      # fc2 + ReLU
    o_ref[...] = jnp.dot(h, w5_ref[...], preferred_element_type=jnp.float32) + b5_ref[...]


# ---------------------------------------------------------------------------
# Forward wrapper: batch grid, resident weights, lane-dense padded output.
# ---------------------------------------------------------------------------
@functools.partial(jax.jit, static_argnames=("block_b",))
def qnetwork_forward(x_nchw, params, *, block_b=256):
    x = x_nchw.astype(jnp.float32)
    b = x.shape[0]
    # Channel-major flatten of the NCHW input: column index = c*49 + hw (torch order).
    x_flat = x.reshape(b, IN_RAW)

    # Batch block size: multiple of 8 sublanes, capped at block_b.
    tb = _round_up(b, 8) if b <= block_b else block_b
    b_pad = _round_up(b, tb)

    # Zero-pad batch rows and lane-pad 147 -> 256 (padded weight rows are zero).
    x_p = jnp.zeros((b_pad, IN_PAD), jnp.float32).at[:b, :IN_RAW].set(x_flat)

    grid = (b_pad // tb,)
    const = lambda i: (0, 0)          # weights / biases: same block every grid step (resident)

    out = pl.pallas_call(
        _qnet_kernel,
        out_shape=jax.ShapeDtypeStruct((b_pad, OUT_PAD), jnp.float32),
        grid_spec=pltpu.PrefetchScalarGridSpec(
            num_scalar_prefetch=0,
            grid=grid,
            in_specs=[
                pl.BlockSpec((tb, IN_PAD), lambda i: (i, 0)),        # x block
                pl.BlockSpec((IN_PAD, H1_PAD), const),               # conv1 (kron)
                pl.BlockSpec((1, H1_PAD), const),                    # conv1 bias
                pl.BlockSpec((H1_PAD, H2_PAD), const),               # conv2 (kron)
                pl.BlockSpec((1, H2_PAD), const),                    # conv2 bias
                pl.BlockSpec((H2_PAD, HIDDEN), const),               # fc1
                pl.BlockSpec((1, HIDDEN), const),
                pl.BlockSpec((HIDDEN, HIDDEN), const),               # fc2
                pl.BlockSpec((1, HIDDEN), const),
                pl.BlockSpec((HIDDEN, OUT_PAD), const),              # fc3 (lane-padded)
                pl.BlockSpec((1, OUT_PAD), const),
            ],
            out_specs=pl.BlockSpec((tb, OUT_PAD), lambda i: (i, 0)),
        ),
        compiler_params=pltpu.CompilerParams(
            dimension_semantics=("parallel",),        # batch grid -> both TCs on v7x
            vmem_limit_bytes=32 * 1024 * 1024,        # fits v5e/v6e/v7x with headroom
        ),
    )(x_p,
      params["m1"], params["b1"], params["m2"], params["b2"],
      params["w3"], params["b3"], params["w4"], params["b4"],
      params["w5"], params["b5"])

    # Strip batch padding and the 7->128 lane padding.
    return out[:b, :N_ACTIONS]


# ---------------------------------------------------------------------------
# Deterministic parameter init (mirrors layer_init: orthogonal weights, zero bias)
# ---------------------------------------------------------------------------
def _orthogonal(key, out_dim, in_dim, gain):
    n = max(out_dim, in_dim)
    a = jax.random.normal(key, (n, n), dtype=jnp.float32)
    q, r = jnp.linalg.qr(a)
    d = jnp.diagonal(r)
    q = q * jnp.where(d >= 0.0, 1.0, -1.0)        # sign fix (avoid zeroing on d == 0)
    return (gain * q[:out_dim, :in_dim]).astype(jnp.float32)


def _pad2(a, rows, cols):
    return jnp.zeros((rows, cols), jnp.float32).at[: a.shape[0], : a.shape[1]].set(a)


def init_params(key):
    gain = float(2.0 ** 0.5)
    ks = jax.random.split(key, 5)
    # torch shapes: conv weight (out, in, 1, 1) -> (out, in); linear weight (out, in)
    w1 = _orthogonal(ks[0], C1, FRAMES, gain)          # (16, 3)
    w2 = _orthogonal(ks[1], C2, C1, gain)              # (20, 16)
    w3 = _orthogonal(ks[2], HIDDEN, FLAT, gain)        # (512, 980)
    w4 = _orthogonal(ks[3], HIDDEN, HIDDEN, gain)      # (512, 512)
    w5 = _orthogonal(ks[4], N_ACTIONS, HIDDEN, gain)   # (7, 512)
    b1 = jnp.zeros((C1,), jnp.float32)
    b2 = jnp.zeros((C2,), jnp.float32)
    b3 = jnp.zeros((HIDDEN,), jnp.float32)
    b4 = jnp.zeros((HIDDEN,), jnp.float32)
    b5 = jnp.zeros((N_ACTIONS,), jnp.float32)

    # Fold the 1x1 convs into block-diagonal matrices on the channel-major flat layout:
    #   M[c_in*49 + hw, c_out*49 + hw'] = W[c_out, c_in] * delta(hw, hw')  ==  kron(W.T, I_49)
    eye = jnp.eye(HW, dtype=jnp.float32)
    m1 = jnp.kron(w1.T, eye)                           # (147, 784)
    m2 = jnp.kron(w2.T, eye)                           # (784, 980)
    b1e = jnp.repeat(b1, HW)                           # (784,)  index c*49 + hw
    b2e = jnp.repeat(b2, HW)                           # (980,)

    wdt = jnp.bfloat16
    kernel_params = dict(
        m1=_pad2(m1, IN_PAD, H1_PAD).astype(wdt),
        b1=_pad2(b1e[None, :], 1, H1_PAD),
        m2=_pad2(m2, H1_PAD, H2_PAD).astype(wdt),
        b2=_pad2(b2e[None, :], 1, H2_PAD),
        w3=_pad2(w3.T, H2_PAD, HIDDEN).astype(wdt),    # torch flatten order preserved -> use W3 as-is
        b3=b3[None, :],
        w4=w4.T.astype(wdt),
        b4=b4[None, :],
        w5=_pad2(w5.T, HIDDEN, OUT_PAD).astype(wdt),
        b5=_pad2(b5[None, :], 1, OUT_PAD),
    )
    ref_params = dict(w1=w1, b1=b1, w2=w2, b2=b2, w3=w3, b3=b3, w4=w4, b4=b4, w5=w5, b5=b5)
    return kernel_params, ref_params


# ---------------------------------------------------------------------------
# Pure-JAX reference (torch-order math, f32, highest precision) for validation.
# ---------------------------------------------------------------------------
def qnetwork_reference(x_nchw, ref):
    hp = jax.lax.Precision.HIGHEST
    b = x_nchw.shape[0]
    x = x_nchw.astype(jnp.float32)
    h = jnp.einsum("bchw,kc->bkhw", x, ref["w1"], precision=hp) + ref["b1"][None, :, None, None]
    h = jnp.maximum(h, 0.0)
    h = jnp.einsum("bchw,kc->bkhw", h, ref["w2"], precision=hp) + ref["b2"][None, :, None, None]
    h = jnp.maximum(h, 0.0)
    f = h.reshape(b, FLAT)                             # torch Flatten: channel-major (C, H, W)
    h = jnp.maximum(jnp.dot(f, ref["w3"].T, precision=hp) + ref["b3"], 0.0)
    h = jnp.maximum(jnp.dot(h, ref["w4"].T, precision=hp) + ref["b4"], 0.0)
    return jnp.dot(h, ref["w5"].T, precision=hp) + ref["b5"]


if __name__ == "__main__":
    key = jax.random.PRNGKey(0)
    pkey, xkey = jax.random.split(key)
    params, ref_params = init_params(pkey)

    batch = 2
    x = jax.random.uniform(xkey, (batch, FRAMES, H, W), dtype=jnp.float32)  # NCHW like torch

    q_values = qnetwork_forward(x, params)
    jax.block_until_ready(q_values)

    assert q_values.shape == (batch, N_ACTIONS)
    assert q_values.dtype == jnp.float32

    # Validate against the torch-order f32 reference (tolerance covers bf16 weights/activations).
    q_ref = qnetwork_reference(x, ref_params)
    if not bool(jnp.allclose(q_values, q_ref, rtol=1e-1, atol=1e-1)):
        raise AssertionError(
            f"mismatch vs reference: max abs diff = {float(jnp.max(jnp.abs(q_values - q_ref)))}"
        )

    print("KERNEL_OK")
</pallas_src>

<mosaic_0001>
module attributes {stable_mosaic.version = 11 : i64} {
  func.func @_qnet_kernel(%arg0: i32, %arg1: memref<8x256xf32, #tpu.memory_space<vmem>>, %arg2: memref<256x896xbf16, #tpu.memory_space<vmem>>, %arg3: memref<1x896xf32, #tpu.memory_space<vmem>>, %arg4: memref<896x1024xbf16, #tpu.memory_space<vmem>>, %arg5: memref<1x1024xf32, #tpu.memory_space<vmem>>, %arg6: memref<1024x512xbf16, #tpu.memory_space<vmem>>, %arg7: memref<1x512xf32, #tpu.memory_space<vmem>>, %arg8: memref<512x512xbf16, #tpu.memory_space<vmem>>, %arg9: memref<1x512xf32, #tpu.memory_space<vmem>>, %arg10: memref<512x128xbf16, #tpu.memory_space<vmem>>, %arg11: memref<1x128xf32, #tpu.memory_space<vmem>>, %arg12: memref<8x128xf32, #tpu.memory_space<vmem>>) attributes {dimension_semantics = [#tpu.dimension_semantics<parallel>], iteration_bounds = array<i64: 1>, scalar_prefetch = 0 : i64, scratch_operands = 0 : i64, tpu.core_type = #tpu.core_type<tc>, window_params = [{transform_indices = @transform_0, window_bounds = array<i64: 8, 256>}, {pipeline_mode = #tpu.pipeline_mode<synchronous>, transform_indices = @transform_1, window_bounds = array<i64: 256, 896>}, {pipeline_mode = #tpu.pipeline_mode<synchronous>, transform_indices = @transform_2, window_bounds = array<i64: 1, 896>}, {pipeline_mode = #tpu.pipeline_mode<synchronous>, transform_indices = @transform_3, window_bounds = array<i64: 896, 1024>}, {pipeline_mode = #tpu.pipeline_mode<synchronous>, transform_indices = @transform_4, window_bounds = array<i64: 1, 1024>}, {pipeline_mode = #tpu.pipeline_mode<synchronous>, transform_indices = @transform_5, window_bounds = array<i64: 1024, 512>}, {pipeline_mode = #tpu.pipeline_mode<synchronous>, transform_indices = @transform_6, window_bounds = array<i64: 1, 512>}, {pipeline_mode = #tpu.pipeline_mode<synchronous>, transform_indices = @transform_7, window_bounds = array<i64: 512, 512>}, {pipeline_mode = #tpu.pipeline_mode<synchronous>, transform_indices = @transform_8, window_bounds = array<i64: 1, 512>}, {pipeline_mode = #tpu.pipeline_mode<synchronous>, transform_indices = @transform_9, window_bounds = array<i64: 512, 128>}, {pipeline_mode = #tpu.pipeline_mode<synchronous>, transform_indices = @transform_10, window_bounds = array<i64: 1, 128>}, {transform_indices = @transform_11, window_bounds = array<i64: 8, 128>}]} {
    %c0 = arith.constant 0 : index
    %c0_0 = arith.constant 0 : index
    %0 = vector.load %arg1[%c0, %c0_0] : memref<8x256xf32, #tpu.memory_space<vmem>>, vector<8x256xf32>
    %1 = arith.truncf %0 : vector<8x256xf32> to vector<8x256xbf16>
    %c0_1 = arith.constant 0 : index
    %c0_2 = arith.constant 0 : index
    %2 = vector.load %arg2[%c0_1, %c0_2] : memref<256x896xbf16, #tpu.memory_space<vmem>>, vector<256x896xbf16>
    %cst = arith.constant dense<0.000000e+00> : vector<8x896xf32>
    %3 = tpu.matmul %1, %2, %cst {dimension_numbers = #tpu.dot_dimension_numbers<[1], [0], [0], [1], [0, 0, 1, 1], [], []>} : vector<8x256xbf16>, vector<256x896xbf16>, vector<8x896xf32> -> vector<8x896xf32>
    %c0_3 = arith.constant 0 : index
    %c0_4 = arith.constant 0 : index
    %4 = vector.load %arg3[%c0_3, %c0_4] : memref<1x896xf32, #tpu.memory_space<vmem>>, vector<1x896xf32>
    %5 = vector.broadcast %4 : vector<1x896xf32> to vector<8x896xf32>
    %6 = arith.addf %3, %5 : vector<8x896xf32>
    %cst_5 = arith.constant 0.000000e+00 : f32
    %7 = vector.broadcast %cst_5 : f32 to vector<8x896xf32>
    %8 = arith.maximumf %6, %7 : vector<8x896xf32>
    %9 = arith.truncf %8 : vector<8x896xf32> to vector<8x896xbf16>
    %c0_6 = arith.constant 0 : index
    %c0_7 = arith.constant 0 : index
    %10 = vector.load %arg4[%c0_6, %c0_7] : memref<896x1024xbf16, #tpu.memory_space<vmem>>, vector<896x1024xbf16>
    %cst_8 = arith.constant dense<0.000000e+00> : vector<8x1024xf32>
    %11 = tpu.matmul %9, %10, %cst_8 {dimension_numbers = #tpu.dot_dimension_numbers<[1], [0], [0], [1], [0, 0, 1, 1], [], []>} : vector<8x896xbf16>, vector<896x1024xbf16>, vector<8x1024xf32> -> vector<8x1024xf32>
    %c0_9 = arith.constant 0 : index
    %c0_10 = arith.constant 0 : index
    %12 = vector.load %arg5[%c0_9, %c0_10] : memref<1x1024xf32, #tpu.memory_space<vmem>>, vector<1x1024xf32>
    %13 = vector.broadcast %12 : vector<1x1024xf32> to vector<8x1024xf32>
    %14 = arith.addf %11, %13 : vector<8x1024xf32>
    %cst_11 = arith.constant 0.000000e+00 : f32
    %15 = vector.broadcast %cst_11 : f32 to vector<8x1024xf32>
    %16 = arith.maximumf %14, %15 : vector<8x1024xf32>
    %17 = arith.truncf %16 : vector<8x1024xf32> to vector<8x1024xbf16>
    %c0_12 = arith.constant 0 : index
    %c0_13 = arith.constant 0 : index
    %18 = vector.load %arg6[%c0_12, %c0_13] : memref<1024x512xbf16, #tpu.memory_space<vmem>>, vector<1024x512xbf16>
    %cst_14 = arith.constant dense<0.000000e+00> : vector<8x512xf32>
    %19 = tpu.matmul %17, %18, %cst_14 {dimension_numbers = #tpu.dot_dimension_numbers<[1], [0], [0], [1], [0, 0, 1, 1], [], []>} : vector<8x1024xbf16>, vector<1024x512xbf16>, vector<8x512xf32> -> vector<8x512xf32>
    %c0_15 = arith.constant 0 : index
    %c0_16 = arith.constant 0 : index
    %20 = vector.load %arg7[%c0_15, %c0_16] : memref<1x512xf32, #tpu.memory_space<vmem>>, vector<1x512xf32>
    %21 = vector.broadcast %20 : vector<1x512xf32> to vector<8x512xf32>
    %22 = arith.addf %19, %21 : vector<8x512xf32>
    %cst_17 = arith.constant 0.000000e+00 : f32
    %23 = vector.broadcast %cst_17 : f32 to vector<8x512xf32>
    %24 = arith.maximumf %22, %23 : vector<8x512xf32>
    %25 = arith.truncf %24 : vector<8x512xf32> to vector<8x512xbf16>
    %c0_18 = arith.constant 0 : index
    %c0_19 = arith.constant 0 : index
    %26 = vector.load %arg8[%c0_18, %c0_19] : memref<512x512xbf16, #tpu.memory_space<vmem>>, vector<512x512xbf16>
    %cst_20 = arith.constant dense<0.000000e+00> : vector<8x512xf32>
    %27 = tpu.matmul %25, %26, %cst_20 {dimension_numbers = #tpu.dot_dimension_numbers<[1], [0], [0], [1], [0, 0, 1, 1], [], []>} : vector<8x512xbf16>, vector<512x512xbf16>, vector<8x512xf32> -> vector<8x512xf32>
    %c0_21 = arith.constant 0 : index
    %c0_22 = arith.constant 0 : index
    %28 = vector.load %arg9[%c0_21, %c0_22] : memref<1x512xf32, #tpu.memory_space<vmem>>, vector<1x512xf32>
    %29 = vector.broadcast %28 : vector<1x512xf32> to vector<8x512xf32>
    %30 = arith.addf %27, %29 : vector<8x512xf32>
    %cst_23 = arith.constant 0.000000e+00 : f32
    %31 = vector.broadcast %cst_23 : f32 to vector<8x512xf32>
    %32 = arith.maximumf %30, %31 : vector<8x512xf32>
    %33 = arith.truncf %32 : vector<8x512xf32> to vector<8x512xbf16>
    %c0_24 = arith.constant 0 : index
    %c0_25 = arith.constant 0 : index
    %34 = vector.load %arg10[%c0_24, %c0_25] : memref<512x128xbf16, #tpu.memory_space<vmem>>, vector<512x128xbf16>
    %cst_26 = arith.constant dense<0.000000e+00> : vector<8x128xf32>
    %35 = tpu.matmul %33, %34, %cst_26 {dimension_numbers = #tpu.dot_dimension_numbers<[1], [0], [0], [1], [0, 0, 1, 1], [], []>} : vector<8x512xbf16>, vector<512x128xbf16>, vector<8x128xf32> -> vector<8x128xf32>
    %c0_27 = arith.constant 0 : index
    %c0_28 = arith.constant 0 : index
    %36 = vector.load %arg11[%c0_27, %c0_28] : memref<1x128xf32, #tpu.memory_space<vmem>>, vector<1x128xf32>
    %37 = vector.broadcast %36 : vector<1x128xf32> to vector<8x128xf32>
    %38 = arith.addf %35, %37 : vector<8x128xf32>
    %c0_29 = arith.constant 0 : index
    %c0_30 = arith.constant 0 : index
    %39 = vector.load %arg12[%c0_29, %c0_30] : memref<8x128xf32, #tpu.memory_space<vmem>>, vector<8x128xf32>
    tpu.vector_store %arg12[%c0_29, %c0_30], %38 {strides = array<i32>} : memref<8x128xf32, #tpu.memory_space<vmem>>, vector<8x128xf32>,
    return
  }
  func.func @transform_0(%arg0: i32) -> (i32, i32) {
    %c0_i32 = arith.constant 0 : i32
    %c0_i32_0 = arith.constant 0 : i32
    return %arg0, %c0_i32 : i32, i32
  }
  func.func @transform_1(%arg0: i32) -> (i32, i32) {
    %c0_i32 = arith.constant 0 : i32
    %c0_i32_0 = arith.constant 0 : i32
    %c0_i32_1 = arith.constant 0 : i32
    return %c0_i32, %c0_i32_0 : i32, i32
  }
  func.func @transform_2(%arg0: i32) -> (i32, i32) {
    %c0_i32 = arith.constant 0 : i32
    %c0_i32_0 = arith.constant 0 : i32
    %c0_i32_1 = arith.constant 0 : i32
    return %c0_i32, %c0_i32_0 : i32, i32
  }
  func.func @transform_3(%arg0: i32) -> (i32, i32) {
    %c0_i32 = arith.constant 0 : i32
    %c0_i32_0 = arith.constant 0 : i32
    %c0_i32_1 = arith.constant 0 : i32
    return %c0_i32, %c0_i32_0 : i32, i32
  }
  func.func @transform_4(%arg0: i32) -> (i32, i32) {
    %c0_i32 = arith.constant 0 : i32
    %c0_i32_0 = arith.constant 0 : i32
    %c0_i32_1 = arith.constant 0 : i32
    return %c0_i32, %c0_i32_0 : i32, i32
  }
  func.func @transform_5(%arg0: i32) -> (i32, i32) {
    %c0_i32 = arith.constant 0 : i32
    %c0_i32_0 = arith.constant 0 : i32
    %c0_i32_1 = arith.constant 0 : i32
    return %c0_i32, %c0_i32_0 : i32, i32
  }
  func.func @transform_6(%arg0: i32) -> (i32, i32) {
    %c0_i32 = arith.constant 0 : i32
    %c0_i32_0 = arith.constant 0 : i32
    %c0_i32_1 = arith.constant 0 : i32
    return %c0_i32, %c0_i32_0 : i32, i32
  }
  func.func @transform_7(%arg0: i32) -> (i32, i32) {
    %c0_i32 = arith.constant 0 : i32
    %c0_i32_0 = arith.constant 0 : i32
    %c0_i32_1 = arith.constant 0 : i32
    return %c0_i32, %c0_i32_0 : i32, i32
  }
  func.func @transform_8(%arg0: i32) -> (i32, i32) {
    %c0_i32 = arith.constant 0 : i32
    %c0_i32_0 = arith.constant 0 : i32
    %c0_i32_1 = arith.constant 0 : i32
    return %c0_i32, %c0_i32_0 : i32, i32
  }
  func.func @transform_9(%arg0: i32) -> (i32, i32) {
    %c0_i32 = arith.constant 0 : i32
    %c0_i32_0 = arith.constant 0 : i32
    %c0_i32_1 = arith.constant 0 : i32
    return %c0_i32, %c0_i32_0 : i32, i32
  }
  func.func @transform_10(%arg0: i32) -> (i32, i32) {
    %c0_i32 = arith.constant 0 : i32
    %c0_i32_0 = arith.constant 0 : i32
    %c0_i32_1 = arith.constant 0 : i32
    return %c0_i32, %c0_i32_0 : i32, i32
  }
  func.func @transform_11(%arg0: i32) -> (i32, i32) {
    %c0_i32 = arith.constant 0 : i32
    %c0_i32_0 = arith.constant 0 : i32
    return %arg0, %c0_i32 : i32, i32
  }
}

</mosaic_0001>

<llo_original>
// kernel: qnetwork_forward.1
$region0: #{qnetwork_forward.1}
  #allocation0 [shape = 'u32[]', space=smem, size = 0x4, offset = 0x4, fixed_abs, tag = 'smem constant byte address 0x4 - core index']
  #allocation1 [shape = 'u32[144,128]{1,0:T(1,128)}', space=vmem, size = 0x12000, scoped, tag = 'internal scratch']
  %s0 = inlined_call_operand.vmem [shape: f32[8,256], index: 0, kind: input, shape index: {}]
  %s1 = inlined_call_operand.hbm [shape: bf16[256,896], index: 1, kind: input, shape index: {}]
  %s2 = inlined_call_operand.hbm [shape: f32[1,896], index: 2, kind: input, shape index: {}]
  %s3 = inlined_call_operand.hbm [shape: bf16[896,1024], index: 3, kind: input, shape index: {}]
  %s4 = inlined_call_operand.hbm [shape: f32[1,1024], index: 4, kind: input, shape index: {}]
  %s5 = inlined_call_operand.hbm [shape: bf16[1024,512], index: 5, kind: input, shape index: {}]
  %s6 = inlined_call_operand.hbm [shape: f32[1,512], index: 6, kind: input, shape index: {}]
  %s7 = inlined_call_operand.hbm [shape: bf16[512,512], index: 7, kind: input, shape index: {}]
  %s8 = inlined_call_operand.hbm [shape: f32[1,512], index: 8, kind: input, shape index: {}]
  %s9 = inlined_call_operand.hbm [shape: bf16[512,128], index: 9, kind: input, shape index: {}]
  %s10 = inlined_call_operand.hbm [shape: f32[1,128], index: 10, kind: input, shape index: {}]
  %s11 = inlined_call_operand.vmem [shape: f32[8,128], index: 11, kind: output, shape index: {}]
  %s12 = sld [smem:[#allocation0]]
  $region94: #{qnetwork_forward.1} parent=0
    _
  %s14 = ssub.s32 1, %s12
  %s15 = scalar_select 0, %s14, %s12
  $region1: #{qnetwork_forward.1} parent=0
    #allocation2 [shape = 'u8[458752]{0}', space=vmem, size = 0x70000, scoped, tag = 'input window, operand 1, single buffered']
    #allocation3 [shape = 's32[1]{0}', space=sflag, size = 0x4, scoped, tag = 'scoped memory for qnetwork_forward.1']
    #allocation4 [shape = 'u8[3584]{0}', space=vmem, size = 0x1000, scoped, tag = 'input window, operand 2, single buffered']
    #allocation5 [shape = 's32[1]{0}', space=sflag, size = 0x4, scoped, tag = 'scoped memory for qnetwork_forward.1']
    #allocation6 [shape = 'u8[1835008]{0}', space=vmem, size = 0x1c0000, scoped, tag = 'input window, operand 3, single buffered']
    #allocation7 [shape = 'u8[4096]{0}', space=vmem, size = 0x1000, scoped, tag = 'input window, operand 4, single buffered']
    #allocation8 [shape = 's32[1]{0}', space=sflag, size = 0x4, scoped, tag = 'scoped memory for qnetwork_forward.1']
    #allocation9 [shape = 'u8[1048576]{0}', space=vmem, size = 0x100000, scoped, tag = 'input window, operand 5, single buffered']
    #allocation10 [shape = 'u8[2048]{0}', space=vmem, size = 0x800, scoped, tag = 'input window, operand 6, single buffered']
    #allocation11 [shape = 's32[1]{0}', space=sflag, size = 0x4, scoped, tag = 'scoped memory for qnetwork_forward.1']
    #allocation12 [shape = 'u8[524288]{0}', space=vmem, size = 0x80000, scoped, tag = 'input window, operand 7, single buffered']
    #allocation13 [shape = 'u8[2048]{0}', space=vmem, size = 0x800, scoped, tag = 'input window, operand 8, single buffered']
    #allocation14 [shape = 's32[1]{0}', space=sflag, size = 0x4, scoped, tag = 'scoped memory for qnetwork_forward.1']
    #allocation15 [shape = 'u8[131072]{0}', space=vmem, size = 0x20000, scoped, tag = 'input window, operand 9, single buffered']
    #allocation16 [shape = 'u8[512]{0}', space=vmem, size = 0x400, scoped, tag = 'input window, operand 10, single buffered']
    #allocation17 [shape = 's32[1]{0}', space=sflag, size = 0x4, scoped, tag = 'scoped memory for qnetwork_forward.1']
    %16 = vsyncpa [#allocation3], 0
    %17 = vsyncpa [#allocation5], 0
    %18 = vsyncpa [#allocation8], 0
    %19 = vsyncpa [#allocation11], 0
    %20 = vsyncpa [#allocation14], 0
    %21 = vsyncpa [#allocation17], 0
    // Predicated region
    $region2: #{qnetwork_forward.1} parent=1 // pred_check
      _
    $region3: #{qnetwork_forward.1} parent=1 // pred_check_branch
      %23 = sbr.rel (0) target = $region5
    $region4: #{qnetwork_forward.1} parent=1 // pred_region
      _
    $region5: #{qnetwork_forward.1} parent=1 // pred_fallthru
      _
    // Predicated region
    $region6: #{qnetwork_forward.1} parent=1 // pred_check
      _
    $region7: #{qnetwork_forward.1} parent=1 // pred_check_branch
      %25 = sbr.rel (0) target = $region9
    $region8: #{qnetwork_forward.1} parent=1 // pred_region
      %s27 = ssub.s32 14336, 14336
      %28 = vsyncadd [#allocation3], %s27
      %s29 = sshll.u32 [#allocation2], 4
      %s30 = int_to_ptr.vmem [resolvable:$true] %s29
      %35 = dma.hbm_to_vmem [thread:$0]  %s1, 14336, %s30, [#allocation3], 448, 448, 28
    $region9: #{qnetwork_forward.1} parent=1 // pred_fallthru
      _
    // Predicated region
    $region10: #{qnetwork_forward.1} parent=1 // pred_check
      _
    $region11: #{qnetwork_forward.1} parent=1 // pred_check_branch
      %37 = sbr.rel (0) target = $region13
    $region12: #{qnetwork_forward.1} parent=1 // pred_region
      %s39 = ssub.s32 112, 112
      %40 = vsyncadd [#allocation5], %s39
      %s42 = sshll.u32 [#allocation4], 4
      %s43 = int_to_ptr.vmem [resolvable:$true] %s42
      %45 = dma.hbm_to_vmem [thread:$0]  %s2, 112, %s43, [#allocation5]
    $region13: #{qnetwork_forward.1} parent=1 // pred_fallthru
      _
    // Predicated region
    $region14: #{qnetwork_forward.1} parent=1 // pred_check
      _
    $region15: #{qnetwork_forward.1} parent=1 // pred_check_branch
      %47 = sbr.rel (0) target = $region17
    $region16: #{qnetwork_forward.1} parent=1 // pred_region
      %s49 = ssub.s32 57344, 57344
      %50 = vsyncadd [#allocation5], %s49
      %s51 = sshll.u32 [#allocation6], 4
      %s52 = int_to_ptr.vmem [resolvable:$true] %s51
      %57 = dma.hbm_to_vmem [thread:$0]  %s3, 57344, %s52, [#allocation5], 512, 512, 32
    $region17: #{qnetwork_forward.1} parent=1 // pred_fallthru
      _
    // Predicated region
    $region18: #{qnetwork_forward.1} parent=1 // pred_check
      _
    $region19: #{qnetwork_forward.1} parent=1 // pred_check_branch
      %59 = sbr.rel (0) target = $region21
    $region20: #{qnetwork_forward.1} parent=1 // pred_region
      %s61 = ssub.s32 128, 128
      %62 = vsyncadd [#allocation8], %s61
      %s64 = sshll.u32 [#allocation7], 4
      %s65 = int_to_ptr.vmem [resolvable:$true] %s64
      %67 = dma.hbm_to_vmem [thread:$0]  %s4, 128, %s65, [#allocation8]
    $region21: #{qnetwork_forward.1} parent=1 // pred_fallthru
      _
    // Predicated region
    $region22: #{qnetwork_forward.1} parent=1 // pred_check
      _
    $region23: #{qnetwork_forward.1} parent=1 // pred_check_branch
      %69 = sbr.rel (0) target = $region25
    $region24: #{qnetwork_forward.1} parent=1 // pred_region
      %s71 = ssub.s32 32768, 32768
      %72 = vsyncadd [#allocation8], %s71
      %s73 = sshll.u32 [#allocation9], 4
      %s74 = int_to_ptr.vmem [resolvable:$true] %s73
      %79 = dma.hbm_to_vmem [thread:$0]  %s5, 32768, %s74, [#allocation8], 256, 256, 16
    $region25: #{qnetwork_forward.1} parent=1 // pred_fallthru
      _
    // Predicated region
    $region26: #{qnetwork_forward.1} parent=1 // pred_check
      _
    $region27: #{qnetwork_forward.1} parent=1 // pred_check_branch
      %81 = sbr.rel (0) target = $region29
    $region28: #{qnetwork_forward.1} parent=1 // pred_region
      %s83 = ssub.s32 64, 64
      %84 = vsyncadd [#allocation11], %s83
      %s86 = sshll.u32 [#allocation10], 4
      %s87 = int_to_ptr.vmem [resolvable:$true] %s86
      %89 = dma.hbm_to_vmem [thread:$0]  %s6, 64, %s87, [#allocation11]
    $region29: #{qnetwork_forward.1} parent=1 // pred_fallthru
      _
    // Predicated region
    $region30: #{qnetwork_forward.1} parent=1 // pred_check
      _
    $region31: #{qnetwork_forward.1} parent=1 // pred_check_branch
      %91 = sbr.rel (0) target = $region33
    $region32: #{qnetwork_forward.1} parent=1 // pred_region
      %s93 = ssub.s32 16384, 16384
      %94 = vsyncadd [#allocation11], %s93
      %s95 = sshll.u32 [#allocation12], 4
      %s96 = int_to_ptr.vmem [resolvable:$true] %s95
      %101 = dma.hbm_to_vmem [thread:$0]  %s7, 16384, %s96, [#allocation11], 256, 256, 16
    $region33: #{qnetwork_forward.1} parent=1 // pred_fallthru
      _
    // Predicated region
    $region34: #{qnetwork_forward.1} parent=1 // pred_check
      _
    $region35: #{qnetwork_forward.1} parent=1 // pred_check_branch
      %103 = sbr.rel (0) target = $region37
    $region36: #{qnetwork_forward.1} parent=1 // pred_region
      %s105 = ssub.s32 64, 64
      %106 = vsyncadd [#allocation14], %s105
      %s108 = sshll.u32 [#allocation13], 4
      %s109 = int_to_ptr.vmem [resolvable:$true] %s108
      %111 = dma.hbm_to_vmem [thread:$0]  %s8, 64, %s109, [#allocation14]
    $region37: #{qnetwork_forward.1} parent=1 // pred_fallthru
      _
    // Predicated region
    $region38: #{qnetwork_forward.1} parent=1 // pred_check
      _
    $region39: #{qnetwork_forward.1} parent=1 // pred_check_branch
      %113 = sbr.rel (0) target = $region41
    $region40: #{qnetwork_forward.1} parent=1 // pred_region
      %s115 = ssub.s32 4096, 4096
      %116 = vsyncadd [#allocation14], %s115
      %s117 = sshll.u32 [#allocation15], 4
      %s118 = int_to_ptr.vmem [resolvable:$true] %s117
      %123 = dma.hbm_to_vmem [thread:$0]  %s9, 4096, %s118, [#allocation14], 64, 64, 4
    $region41: #{qnetwork_forward.1} parent=1 // pred_fallthru
      _
    // Predicated region
    $region42: #{qnetwork_forward.1} parent=1 // pred_check
      _
    $region43: #{qnetwork_forward.1} parent=1 // pred_check_branch
      %125 = sbr.rel (0) target = $region45
    $region44: #{qnetwork_forward.1} parent=1 // pred_region
      %s127 = ssub.s32 16, 16
      %128 = vsyncadd [#allocation17], %s127
      %s130 = sshll.u32 [#allocation16], 4
      %s131 = int_to_ptr.vmem [resolvable:$true] %s130
      %133 = dma.hbm_to_vmem [thread:$0]  %s10, 16, %s131, [#allocation17]
    $region45: #{qnetwork_forward.1} parent=1 // pred_fallthru
      _
    // Predicated region
    $region46: #{qnetwork_forward.1} parent=1 // pred_check
      _
    $region47: #{qnetwork_forward.1} parent=1 // pred_check_branch
      %135 = sbr.rel (0) target = $region49
    $region48: #{qnetwork_forward.1} parent=1 // pred_region
      %136 = dma.done [#allocation3], 14336
    $region49: #{qnetwork_forward.1} parent=1 // pred_fallthru
      _
    // Predicated region
    $region50: #{qnetwork_forward.1} parent=1 // pred_check
      _
    $region51: #{qnetwork_forward.1} parent=1 // pred_check_branch
      %138 = sbr.rel (0) target = $region53
    $region52: #{qnetwork_forward.1} parent=1 // pred_region
      %139 = dma.done [#allocation5], 112
    $region53: #{qnetwork_forward.1} parent=1 // pred_fallthru
      _
    // Predicated region
    $region54: #{qnetwork_forward.1} parent=1 // pred_check
      _
    $region55: #{qnetwork_forward.1} parent=1 // pred_check_branch
      %141 = sbr.rel (0) target = $region57
    $region56: #{qnetwork_forward.1} parent=1 // pred_region
      %142 = dma.done [#allocation5], 57344
    $region57: #{qnetwork_forward.1} parent=1 // pred_fallthru
      _
    // Predicated region
    $region58: #{qnetwork_forward.1} parent=1 // pred_check
      _
    $region59: #{qnetwork_forward.1} parent=1 // pred_check_branch
      %144 = sbr.rel (0) target = $region61
    $region60: #{qnetwork_forward.1} parent=1 // pred_region
      %145 = dma.done [#allocation8], 128
    $region61: #{qnetwork_forward.1} parent=1 // pred_fallthru
      _
    // Predicated region
    $region62: #{qnetwork_forward.1} parent=1 // pred_check
      _
    $region63: #{qnetwork_forward.1} parent=1 // pred_check_branch
      %147 = sbr.rel (0) target = $region65
    $region64: #{qnetwork_forward.1} parent=1 // pred_region
      %148 = dma.done [#allocation8], 32768
    $region65: #{qnetwork_forward.1} parent=1 // pred_fallthru
      _
    // Predicated region
    $region66: #{qnetwork_forward.1} parent=1 // pred_check
      _
    $region67: #{qnetwork_forward.1} parent=1 // pred_check_branch
      %150 = sbr.rel (0) target = $region69
    $region68: #{qnetwork_forward.1} parent=1 // pred_region
      %151 = dma.done [#allocation11], 64
    $region69: #{qnetwork_forward.1} parent=1 // pred_fallthru
      _
    // Predicated region
    $region70: #{qnetwork_forward.1} parent=1 // pred_check
      _
    $region71: #{qnetwork_forward.1} parent=1 // pred_check_branch
      %153 = sbr.rel (0) target = $region73
    $region72: #{qnetwork_forward.1} parent=1 // pred_region
      %154 = dma.done [#allocation11], 16384
    $region73: #{qnetwork_forward.1} parent=1 // pred_fallthru
      _
    // Predicated region
    $region74: #{qnetwork_forward.1} parent=1 // pred_check
      _
    $region75: #{qnetwork_forward.1} parent=1 // pred_check_branch
      %156 = sbr.rel (0) target = $region77
    $region76: #{qnetwork_forward.1} parent=1 // pred_region
      %157 = dma.done [#allocation14], 64
    $region77: #{qnetwork_forward.1} parent=1 // pred_fallthru
      _
    // Predicated region
    $region78: #{qnetwork_forward.1} parent=1 // pred_check
      _
    $region79: #{qnetwork_forward.1} parent=1 // pred_check_branch
      %159 = sbr.rel (0) target = $region81
    $region80: #{qnetwork_forward.1} parent=1 // pred_region
      %160 = dma.done [#allocation14], 4096
    $region81: #{qnetwork_forward.1} parent=1 // pred_fallthru
      _
    // Predicated region
    $region82: #{qnetwork_forward.1} parent=1 // pred_check
      _
    $region83: #{qnetwork_forward.1} parent=1 // pred_check_branch
      %162 = sbr.rel (0) target = $region85
    $region84: #{qnetwork_forward.1} parent=1 // pred_region
      %163 = dma.done [#allocation17], 16
    $region85: #{qnetwork_forward.1} parent=1 // pred_fallthru
      _
    %v165 = vld [vmem:[%s0] sm:$0xff]
    %v166 = vld [vmem:[%s0 + $0x8] sm:$0xff]
    %v167 = vpack.c.bf16 %v165, %v165
    %v168 = vpack.c.bf16 %v166, %v166
    %v169 = vld [vmem:[#allocation2] sm:$0xff]
    %v170 = vld [vmem:[#allocation2 + $0x8] sm:$0xff]
    %v171 = vld [vmem:[#allocation2 + $0x10] sm:$0xff]
    %v172 = vld [vmem:[#allocation2 + $0x18] sm:$0xf]
    %v173 = vld [vmem:[#allocation2 + $0x1c] sm:$0xff]
    %v174 = vld [vmem:[#allocation2 + $0x24] sm:$0xff]
    %v175 = vld [vmem:[#allocation2 + $0x2c] sm:$0xff]
    %v176 = vld [vmem:[#allocation2 + $0x34] sm:$0xf]
    %v177 = vld [vmem:[#allocation2 + $0x38] sm:$0xff]
    %v178 = vld [vmem:[#allocation2 + $0x40] sm:$0xff]
    %v179 = vld [vmem:[#allocation2 + $0x48] sm:$0xff]
    %v180 = vld [vmem:[#allocation2 + $0x50] sm:$0xf]
    %v181 = vld [vmem:[#allocation2 + $0x54] sm:$0xff]
    %v182 = vld [vmem:[#allocation2 + $0x5c] sm:$0xff]
    %v183 = vld [vmem:[#allocation2 + $0x64] sm:$0xff]
    %v184 = vld [vmem:[#allocation2 + $0x6c] sm:$0xf]
    %v185 = vld [vmem:[#allocation2 + $0x70] sm:$0xff]
    %v186 = vld [vmem:[#allocation2 + $0x78] sm:$0xff]
    %v187 = vld [vmem:[#allocation2 + $0x80] sm:$0xff]
    %v188 = vld [vmem:[#allocation2 + $0x88] sm:$0xf]
    %v189 = vld [vmem:[#allocation2 + $0x8c] sm:$0xff]
    %v190 = vld [vmem:[#allocation2 + $0x94] sm:$0xff]
    %v191 = vld [vmem:[#allocation2 + $0x9c] sm:$0xff]
    %v192 = vld [vmem:[#allocation2 + $0xa4] sm:$0xf]
    %v193 = vld [vmem:[#allocation2 + $0xa8] sm:$0xff]
    %v194 = vld [vmem:[#allocation2 + $0xb0] sm:$0xff]
    %v195 = vld [vmem:[#allocation2 + $0xb8] sm:$0xff]
    %v196 = vld [vmem:[#allocation2 + $0xc0] sm:$0xf]
    %v197 = vld [vmem:[#allocation2 + $0xc4] sm:$0xff]
    %v198 = vld [vmem:[#allocation2 + $0xcc] sm:$0xff]
    %v199 = vld [vmem:[#allocation2 + $0xd4] sm:$0xff]
    %v200 = vld [vmem:[#allocation2 + $0xdc] sm:$0xf]
    %v201 = vld [vmem:[#allocation2 + $0xe0] sm:$0xff]
    %v202 = vld [vmem:[#allocation2 + $0xe8] sm:$0xff]
    %v203 = vld [vmem:[#allocation2 + $0xf0] sm:$0xff]
    %v204 = vld [vmem:[#allocation2 + $0xf8] sm:$0xf]
    %v205 = vld [vmem:[#allocation2 + $0xfc] sm:$0xff]
    %v206 = vld [vmem:[#allocation2 + $0x104] sm:$0xff]
    %v207 = vld [vmem:[#allocation2 + $0x10c] sm:$0xff]
    %v208 = vld [vmem:[#allocation2 + $0x114] sm:$0xf]
    %v209 = vld [vmem:[#allocation2 + $0x118] sm:$0xff]
    %v210 = vld [vmem:[#allocation2 + $0x120] sm:$0xff]
    %v211 = vld [vmem:[#allocation2 + $0x128] sm:$0xff]
    %v212 = vld [vmem:[#allocation2 + $0x130] sm:$0xf]
    %v213 = vld [vmem:[#allocation2 + $0x134] sm:$0xff]
    %v214 = vld [vmem:[#allocation2 + $0x13c] sm:$0xff]
    %v215 = vld [vmem:[#allocation2 + $0x144] sm:$0xff]
    %v216 = vld [vmem:[#allocation2 + $0x14c] sm:$0xf]
    %v217 = vld [vmem:[#allocation2 + $0x150] sm:$0xff]
    %v218 = vld [vmem:[#allocation2 + $0x158] sm:$0xff]
    %v219 = vld [vmem:[#allocation2 + $0x160] sm:$0xff]
    %v220 = vld [vmem:[#allocation2 + $0x168] sm:$0xf]
    %v221 = vld [vmem:[#allocation2 + $0x16c] sm:$0xff]
    %v222 = vld [vmem:[#allocation2 + $0x174] sm:$0xff]
    %v223 = vld [vmem:[#allocation2 + $0x17c] sm:$0xff]
    %v224 = vld [vmem:[#allocation2 + $0x184] sm:$0xf]
    %v225 = vld [vmem:[#allocation2 + $0x188] sm:$0xff]
    %v226 = vld [vmem:[#allocation2 + $0x190] sm:$0xff]
    %v227 = vld [vmem:[#allocation2 + $0x198] sm:$0xff]
    %v228 = vld [vmem:[#allocation2 + $0x1a0] sm:$0xf]
    %v229 = vld [vmem:[#allocation2 + $0x1a4] sm:$0xff]
    %v230 = vld [vmem:[#allocation2 + $0x1ac] sm:$0xff]
    %v231 = vld [vmem:[#allocation2 + $0x1b4] sm:$0xff]
    %v232 = vld [vmem:[#allocation2 + $0x1bc] sm:$0xf]
    %v233 = vld [vmem:[#allocation2 + $0x1c0] sm:$0xff]
    %v234 = vld [vmem:[#allocation2 + $0x1c8] sm:$0xff]
    %v235 = vld [vmem:[#allocation2 + $0x1d0] sm:$0xff]
    %v236 = vld [vmem:[#allocation2 + $0x1d8] sm:$0xf]
    %v237 = vld [vmem:[#allocation2 + $0x1dc] sm:$0xff]
    %v238 = vld [vmem:[#allocation2 + $0x1e4] sm:$0xff]
    %v239 = vld [vmem:[#allocation2 + $0x1ec] sm:$0xff]
    %v240 = vld [vmem:[#allocation2 + $0x1f4] sm:$0xf]
    %v241 = vld [vmem:[#allocation2 + $0x1f8] sm:$0xff]
    %v242 = vld [vmem:[#allocation2 + $0x200] sm:$0xff]
    %v243 = vld [vmem:[#allocation2 + $0x208] sm:$0xff]
    %v244 = vld [vmem:[#allocation2 + $0x210] sm:$0xf]
    %v245 = vld [vmem:[#allocation2 + $0x214] sm:$0xff]
    %v246 = vld [vmem:[#allocation2 + $0x21c] sm:$0xff]
    %v247 = vld [vmem:[#allocation2 + $0x224] sm:$0xff]
    %v248 = vld [vmem:[#allocation2 + $0x22c] sm:$0xf]
    %v249 = vld [vmem:[#allocation2 + $0x230] sm:$0xff]
    %v250 = vld [vmem:[#allocation2 + $0x238] sm:$0xff]
    %v251 = vld [vmem:[#allocation2 + $0x240] sm:$0xff]
    %v252 = vld [vmem:[#allocation2 + $0x248] sm:$0xf]
    %v253 = vld [vmem:[#allocation2 + $0x24c] sm:$0xff]
    %v254 = vld [vmem:[#allocation2 + $0x254] sm:$0xff]
    %v255 = vld [vmem:[#allocation2 + $0x25c] sm:$0xff]
    %v256 = vld [vmem:[#allocation2 + $0x264] sm:$0xf]
    %v257 = vld [vmem:[#allocation2 + $0x268] sm:$0xff]
    %v258 = vld [vmem:[#allocation2 + $0x270] sm:$0xff]
    %v259 = vld [vmem:[#allocation2 + $0x278] sm:$0xff]
    %v260 = vld [vmem:[#allocation2 + $0x280] sm:$0xf]
    %v261 = vld [vmem:[#allocation2 + $0x284] sm:$0xff]
    %v262 = vld [vmem:[#allocation2 + $0x28c] sm:$0xff]
    %v263 = vld [vmem:[#allocation2 + $0x294] sm:$0xff]
    %v264 = vld [vmem:[#allocation2 + $0x29c] sm:$0xf]
    %v265 = vld [vmem:[#allocation2 + $0x2a0] sm:$0xff]
    %v266 = vld [vmem:[#allocation2 + $0x2a8] sm:$0xff]
    %v267 = vld [vmem:[#allocation2 + $0x2b0] sm:$0xff]
    %v268 = vld [vmem:[#allocation2 + $0x2b8] sm:$0xf]
    %v269 = vld [vmem:[#allocation2 + $0x2bc] sm:$0xff]
    %v270 = vld [vmem:[#allocation2 + $0x2c4] sm:$0xff]
    %v271 = vld [vmem:[#allocation2 + $0x2cc] sm:$0xff]
    %v272 = vld [vmem:[#allocation2 + $0x2d4] sm:$0xf]
    %v273 = vld [vmem:[#allocation2 + $0x2d8] sm:$0xff]
    %v274 = vld [vmem:[#allocation2 + $0x2e0] sm:$0xff]
    %v275 = vld [vmem:[#allocation2 + $0x2e8] sm:$0xff]
    %v276 = vld [vmem:[#allocation2 + $0x2f0] sm:$0xf]
    %v277 = vld [vmem:[#allocation2 + $0x2f4] sm:$0xff]
    %v278 = vld [vmem:[#allocation2 + $0x2fc] sm:$0xff]
    %v279 = vld [vmem:[#allocation2 + $0x304] sm:$0xff]
    %v280 = vld [vmem:[#allocation2 + $0x30c] sm:$0xf]
    %v281 = vld [vmem:[#allocation2 + $0x310] sm:$0xff]
    %v282 = vld [vmem:[#allocation2 + $0x318] sm:$0xff]
    %v283 = vld [vmem:[#allocation2 + $0x320] sm:$0xff]
    %v284 = vld [vmem:[#allocation2 + $0x328] sm:$0xf]
    %v285 = vld [vmem:[#allocation2 + $0x32c] sm:$0xff]
    %v286 = vld [vmem:[#allocation2 + $0x334] sm:$0xff]
    %v287 = vld [vmem:[#allocation2 + $0x33c] sm:$0xff]
    %v288 = vld [vmem:[#allocation2 + $0x344] sm:$0xf]
    %v289 = vld [vmem:[#allocation2 + $0x348] sm:$0xff]
    %v290 = vld [vmem:[#allocation2 + $0x350] sm:$0xff]
    %v291 = vld [vmem:[#allocation2 + $0x358] sm:$0xff]
    %v292 = vld [vmem:[#allocation2 + $0x360] sm:$0xf]
    %v293 = vld [vmem:[#allocation2 + $0x364] sm:$0xff]
    %v294 = vld [vmem:[#allocation2 + $0x36c] sm:$0xff]
    %v295 = vld [vmem:[#allocation2 + $0x374] sm:$0xff]
    %v296 = vld [vmem:[#allocation2 + $0x37c] sm:$0xf]
    %v297 = vld [vmem:[#allocation4] sm:$0xff]
    %v299 = vlaneseq
    %v300 = vshrl.u32 %v299, 7
    %v301 = vsub.s32 0, %v300
    %v302 = vrot.slane %v297, %v301
    %v303 = vlaneseq
    %v304 = vshrl.u32 %v303, 7
    %v305 = vsub.s32 1, %v304
    %v306 = vrot.slane %v297, %v305
    %v307 = vlaneseq
    %v308 = vshrl.u32 %v307, 7
    %v309 = vsub.s32 2, %v308
    %v310 = vrot.slane %v297, %v309
    %v311 = vlaneseq
    %v312 = vshrl.u32 %v311, 7
    %v313 = vsub.s32 3, %v312
    %v314 = vrot.slane %v297, %v313
    %v315 = vlaneseq
    %v316 = vshrl.u32 %v315, 7
    %v317 = vsub.s32 4, %v316
    %v318 = vrot.slane %v297, %v317
    %v319 = vlaneseq
    %v320 = vshrl.u32 %v319, 7
    %v321 = vsub.s32 5, %v320
    %v322 = vrot.slane %v297, %v321
    %v323 = vlaneseq
    %v324 = vshrl.u32 %v323, 7
    %v325 = vsub.s32 6, %v324
    %v326 = vrot.slane %v297, %v325
    %v462 = vunpack.c.l.b16 %v169
    %v463 = vunpack.c.h.b16 %v169
    %v464 = vunpack.c.l.b16 %v170
    %v465 = vunpack.c.h.b16 %v170
    %v466 = vunpack.c.l.b16 %v171
    %v467 = vunpack.c.h.b16 %v171
    %v468 = vunpack.c.l.b16 %v172
    %v469 = vunpack.c.l.b16 %v173
    %v470 = vunpack.c.h.b16 %v173
    %v471 = vunpack.c.l.b16 %v174
    %v472 = vunpack.c.h.b16 %v174
    %v473 = vunpack.c.l.b16 %v175
    %v474 = vunpack.c.h.b16 %v175
    %v475 = vunpack.c.l.b16 %v176
    %v476 = vunpack.c.l.b16 %v177
    %v477 = vunpack.c.h.b16 %v177
    %v478 = vunpack.c.l.b16 %v178
    %v479 = vunpack.c.h.b16 %v178
    %v480 = vunpack.c.l.b16 %v179
    %v481 = vunpack.c.h.b16 %v179
    %v482 = vunpack.c.l.b16 %v180
    %v483 = vunpack.c.l.b16 %v181
    %v484 = vunpack.c.h.b16 %v181
    %v485 = vunpack.c.l.b16 %v182
    %v486 = vunpack.c.h.b16 %v182
    %v487 = vunpack.c.l.b16 %v183
    %v488 = vunpack.c.h.b16 %v183
    %v489 = vunpack.c.l.b16 %v184
    %v490 = vunpack.c.l.b16 %v185
    %v491 = vunpack.c.h.b16 %v185
    %v492 = vunpack.c.l.b16 %v186
    %v493 = vunpack.c.h.b16 %v186
    %v494 = vunpack.c.l.b16 %v187
    %v495 = vunpack.c.h.b16 %v187
    %v496 = vunpack.c.l.b16 %v188
    %v497 = vunpack.c.l.b16 %v189
    %v498 = vunpack.c.h.b16 %v189
    %v499 = vunpack.c.l.b16 %v190
    %v500 = vunpack.c.h.b16 %v190
    %v501 = vunpack.c.l.b16 %v191
    %v502 = vunpack.c.h.b16 %v191
    %v503 = vunpack.c.l.b16 %v192
    %v504 = vunpack.c.l.b16 %v193
    %v505 = vunpack.c.h.b16 %v193
    %v506 = vunpack.c.l.b16 %v194
    %v507 = vunpack.c.h.b16 %v194
    %v508 = vunpack.c.l.b16 %v195
    %v509 = vunpack.c.h.b16 %v195
    %v510 = vunpack.c.l.b16 %v196
    %v511 = vunpack.c.l.b16 %v197
    %v512 = vunpack.c.h.b16 %v197
    %v513 = vunpack.c.l.b16 %v198
    %v514 = vunpack.c.h.b16 %v198
    %v515 = vunpack.c.l.b16 %v199
    %v516 = vunpack.c.h.b16 %v199
    %v517 = vunpack.c.l.b16 %v200
    %v518 = vunpack.c.l.b16 %v201
    %v519 = vunpack.c.h.b16 %v201
    %v520 = vunpack.c.l.b16 %v202
    %v521 = vunpack.c.h.b16 %v202
    %v522 = vunpack.c.l.b16 %v203
    %v523 = vunpack.c.h.b16 %v203
    %v524 = vunpack.c.l.b16 %v204
    %v525 = vunpack.c.l.b16 %v205
    %v526 = vunpack.c.h.b16 %v205
    %v527 = vunpack.c.l.b16 %v206
    %v528 = vunpack.c.h.b16 %v206
    %v529 = vunpack.c.l.b16 %v207
    %v530 = vunpack.c.h.b16 %v207
    %v531 = vunpack.c.l.b16 %v208
    %v532 = vunpack.c.l.b16 %v209
    %v533 = vunpack.c.h.b16 %v209
    %v534 = vunpack.c.l.b16 %v210
    %v535 = vunpack.c.h.b16 %v210
    %v536 = vunpack.c.l.b16 %v211
    %v537 = vunpack.c.h.b16 %v211
    %v538 = vunpack.c.l.b16 %v212
    %v539 = vunpack.c.l.b16 %v213
    %v540 = vunpack.c.h.b16 %v213
    %v541 = vunpack.c.l.b16 %v214
    %v542 = vunpack.c.h.b16 %v214
    %v543 = vunpack.c.l.b16 %v215
    %v544 = vunpack.c.h.b16 %v215
    %v545 = vunpack.c.l.b16 %v216
    %v546 = vunpack.c.l.b16 %v217
    %v547 = vunpack.c.h.b16 %v217
    %v548 = vunpack.c.l.b16 %v218
    %v549 = vunpack.c.h.b16 %v218
    %v550 = vunpack.c.l.b16 %v219
    %v551 = vunpack.c.h.b16 %v219
    %v552 = vunpack.c.l.b16 %v220
    %v553 = vunpack.c.l.b16 %v221
    %v554 = vunpack.c.h.b16 %v221
    %v555 = vunpack.c.l.b16 %v222
    %v556 = vunpack.c.h.b16 %v222
    %v557 = vunpack.c.l.b16 %v223
    %v558 = vunpack.c.h.b16 %v223
    %v559 = vunpack.c.l.b16 %v224
    %v560 = vunpack.c.l.b16 %v225
    %v561 = vunpack.c.h.b16 %v225
    %v562 = vunpack.c.l.b16 %v226
    %v563 = vunpack.c.h.b16 %v226
    %v564 = vunpack.c.l.b16 %v227
    %v565 = vunpack.c.h.b16 %v227
    %v566 = vunpack.c.l.b16 %v228
    %v567 = vunpack.c.l.b16 %v229
    %v568 = vunpack.c.h.b16 %v229
    %v569 = vunpack.c.l.b16 %v230
    %v570 = vunpack.c.h.b16 %v230
    %v571 = vunpack.c.l.b16 %v231
    %v572 = vunpack.c.h.b16 %v231
    %v573 = vunpack.c.l.b16 %v232
    %v574 = vunpack.c.l.b16 %v233
    %v575 = vunpack.c.h.b16 %v233
    %v576 = vunpack.c.l.b16 %v234
    %v577 = vunpack.c.h.b16 %v234
    %v578 = vunpack.c.l.b16 %v235
    %v579 = vunpack.c.h.b16 %v235
    %v580 = vunpack.c.l.b16 %v236
    %v581 = vunpack.c.l.b16 %v237
    %v582 = vunpack.c.h.b16 %v237
    %v583 = vunpack.c.l.b16 %v238
    %v584 = vunpack.c.h.b16 %v238
    %v585 = vunpack.c.l.b16 %v239
    %v586 = vunpack.c.h.b16 %v239
    %v587 = vunpack.c.l.b16 %v240
    %v588 = vunpack.c.l.b16 %v241
    %v589 = vunpack.c.h.b16 %v241
    %v590 = vunpack.c.l.b16 %v242
    %v591 = vunpack.c.h.b16 %v242
    %v592 = vunpack.c.l.b16 %v243
    %v593 = vunpack.c.h.b16 %v243
    %v594 = vunpack.c.l.b16 %v244
    %v595 = vunpack.c.l.b16 %v245
    %v596 = vunpack.c.h.b16 %v245
    %v597 = vunpack.c.l.b16 %v246
    %v598 = vunpack.c.h.b16 %v246
    %v599 = vunpack.c.l.b16 %v247
    %v600 = vunpack.c.h.b16 %v247
    %v601 = vunpack.c.l.b16 %v248
    %v602 = vunpack.c.l.b16 %v249
    %v603 = vunpack.c.h.b16 %v249
    %v604 = vunpack.c.l.b16 %v250
    %v605 = vunpack.c.h.b16 %v250
    %v606 = vunpack.c.l.b16 %v251
    %v607 = vunpack.c.h.b16 %v251
    %v608 = vunpack.c.l.b16 %v252
    %v609 = vunpack.c.l.b16 %v253
    %v610 = vunpack.c.h.b16 %v253
    %v611 = vunpack.c.l.b16 %v254
    %v612 = vunpack.c.h.b16 %v254
    %v613 = vunpack.c.l.b16 %v255
    %v614 = vunpack.c.h.b16 %v255
    %v615 = vunpack.c.l.b16 %v256
    %v616 = vunpack.c.l.b16 %v257
    %v617 = vunpack.c.h.b16 %v257
    %v618 = vunpack.c.l.b16 %v258
    %v619 = vunpack.c.h.b16 %v258
    %v620 = vunpack.c.l.b16 %v259
    %v621 = vunpack.c.h.b16 %v259
    %v622 = vunpack.c.l.b16 %v260
    %v623 = vunpack.c.l.b16 %v261
    %v624 = vunpack.c.h.b16 %v261
    %v625 = vunpack.c.l.b16 %v262
    %v626 = vunpack.c.h.b16 %v262
    %v627 = vunpack.c.l.b16 %v263
    %v628 = vunpack.c.h.b16 %v263
    %v629 = vunpack.c.l.b16 %v264
    %v630 = vunpack.c.l.b16 %v265
    %v631 = vunpack.c.h.b16 %v265
    %v632 = vunpack.c.l.b16 %v266
    %v633 = vunpack.c.h.b16 %v266
    %v634 = vunpack.c.l.b16 %v267
    %v635 = vunpack.c.h.b16 %v267
    %v636 = vunpack.c.l.b16 %v268
    %v637 = vunpack.c.l.b16 %v269
    %v638 = vunpack.c.h.b16 %v269
    %v639 = vunpack.c.l.b16 %v270
    %v640 = vunpack.c.h.b16 %v270
    %v641 = vunpack.c.l.b16 %v271
    %v642 = vunpack.c.h.b16 %v271
    %v643 = vunpack.c.l.b16 %v272
    %v644 = vunpack.c.l.b16 %v273
    %v645 = vunpack.c.h.b16 %v273
    %v646 = vunpack.c.l.b16 %v274
    %v647 = vunpack.c.h.b16 %v274
    %v648 = vunpack.c.l.b16 %v275
    %v649 = vunpack.c.h.b16 %v275
    %v650 = vunpack.c.l.b16 %v276
    %v651 = vunpack.c.l.b16 %v277
    %v652 = vunpack.c.h.b16 %v277
    %v653 = vunpack.c.l.b16 %v278
    %v654 = vunpack.c.h.b16 %v278
    %v655 = vunpack.c.l.b16 %v279
    %v656 = vunpack.c.h.b16 %v279
    %v657 = vunpack.c.l.b16 %v280
    %v658 = vunpack.c.l.b16 %v281
    %v659 = vunpack.c.h.b16 %v281
    %v660 = vunpack.c.l.b16 %v282
    %v661 = vunpack.c.h.b16 %v282
    %v662 = vunpack.c.l.b16 %v283
    %v663 = vunpack.c.h.b16 %v283
    %v664 = vunpack.c.l.b16 %v284
    %v665 = vunpack.c.l.b16 %v285
    %v666 = vunpack.c.h.b16 %v285
    %v667 = vunpack.c.l.b16 %v286
    %v668 = vunpack.c.h.b16 %v286
    %v669 = vunpack.c.l.b16 %v287
    %v670 = vunpack.c.h.b16 %v287
    %v671 = vunpack.c.l.b16 %v288
    %v672 = vunpack.c.l.b16 %v289
    %v673 = vunpack.c.h.b16 %v289
    %v674 = vunpack.c.l.b16 %v290
    %v675 = vunpack.c.h.b16 %v290
    %v676 = vunpack.c.l.b16 %v291
    %v677 = vunpack.c.h.b16 %v291
    %v678 = vunpack.c.l.b16 %v292
    %v679 = vunpack.c.l.b16 %v293
    %v680 = vunpack.c.h.b16 %v293
    %v681 = vunpack.c.l.b16 %v294
    %v682 = vunpack.c.h.b16 %v294
    %v683 = vunpack.c.l.b16 %v295
    %v684 = vunpack.c.h.b16 %v295
    %v685 = vunpack.c.l.b16 %v296
    %v686 = vpack.c.b16 %v469, %v462
    %v687 = vpack.c.b16 %v470, %v463
    %v688 = vpack.c.b16 %v471, %v464
    %v689 = vpack.c.b16 %v472, %v465
    %v690 = vpack.c.b16 %v473, %v466
    %v691 = vpack.c.b16 %v474, %v467
    %v692 = vpack.c.b16 %v475, %v468
    %v693 = vpack.c.b16 %v483, %v476
    %v694 = vpack.c.b16 %v484, %v477
    %v695 = vpack.c.b16 %v485, %v478
    %v696 = vpack.c.b16 %v486, %v479
    %v697 = vpack.c.b16 %v487, %v480
    %v698 = vpack.c.b16 %v488, %v481
    %v699 = vpack.c.b16 %v489, %v482
    %v700 = vpack.c.b16 %v497, %v490
    %v701 = vpack.c.b16 %v498, %v491
    %v702 = vpack.c.b16 %v499, %v492
    %v703 = vpack.c.b16 %v500, %v493
    %v704 = vpack.c.b16 %v501, %v494
    %v705 = vpack.c.b16 %v502, %v495
    %v706 = vpack.c.b16 %v503, %v496
    %v707 = vpack.c.b16 %v511, %v504
    %v708 = vpack.c.b16 %v512, %v505
    %v709 = vpack.c.b16 %v513, %v506
    %v710 = vpack.c.b16 %v514, %v507
    %v711 = vpack.c.b16 %v515, %v508
    %v712 = vpack.c.b16 %v516, %v509
    %v713 = vpack.c.b16 %v517, %v510
    %v714 = vpack.c.b16 %v525, %v518
    %v715 = vpack.c.b16 %v526, %v519
    %v716 = vpack.c.b16 %v527, %v520
    %v717 = vpack.c.b16 %v528, %v521
    %v718 = vpack.c.b16 %v529, %v522
    %v719 = vpack.c.b16 %v530, %v523
    %v720 = vpack.c.b16 %v531, %v524
    %v721 = vpack.c.b16 %v539, %v532
    %v722 = vpack.c.b16 %v540, %v533
    %v723 = vpack.c.b16 %v541, %v534
    %v724 = vpack.c.b16 %v542, %v535
    %v725 = vpack.c.b16 %v543, %v536
    %v726 = vpack.c.b16 %v544, %v537
    %v727 = vpack.c.b16 %v545, %v538
    %v728 = vpack.c.b16 %v553, %v546
    %v729 = vpack.c.b16 %v554, %v547
    %v730 = vpack.c.b16 %v555, %v548
    %v731 = vpack.c.b16 %v556, %v549
    %v732 = vpack.c.b16 %v557, %v550
    %v733 = vpack.c.b16 %v558, %v551
    %v734 = vpack.c.b16 %v559, %v552
    %v735 = vpack.c.b16 %v567, %v560
    %v736 = vpack.c.b16 %v568, %v561
    %v737 = vpack.c.b16 %v569, %v562
    %v738 = vpack.c.b16 %v570, %v563
    %v739 = vpack.c.b16 %v571, %v564
    %v740 = vpack.c.b16 %v572, %v565
    %v741 = vpack.c.b16 %v573, %v566
    %v742 = vpack.c.b16 %v581, %v574
    %v743 = vpack.c.b16 %v582, %v575
    %v744 = vpack.c.b16 %v583, %v576
    %v745 = vpack.c.b16 %v584, %v577
    %v746 = vpack.c.b16 %v585, %v578
    %v747 = vpack.c.b16 %v586, %v579
    %v748 = vpack.c.b16 %v587, %v580
    %v749 = vpack.c.b16 %v595, %v588
    %v750 = vpack.c.b16 %v596, %v589
    %v751 = vpack.c.b16 %v597, %v590
    %v752 = vpack.c.b16 %v598, %v591
    %v753 = vpack.c.b16 %v599, %v592
    %v754 = vpack.c.b16 %v600, %v593
    %v755 = vpack.c.b16 %v601, %v594
    %v756 = vpack.c.b16 %v609, %v602
    %v757 = vpack.c.b16 %v610, %v603
    %v758 = vpack.c.b16 %v611, %v604
    %v759 = vpack.c.b16 %v612, %v605
    %v760 = vpack.c.b16 %v613, %v606
    %v761 = vpack.c.b16 %v614, %v607
    %v762 = vpack.c.b16 %v615, %v608
    %v763 = vpack.c.b16 %v623, %v616
    %v764 = vpack.c.b16 %v624, %v617
    %v765 = vpack.c.b16 %v625, %v618
    %v766 = vpack.c.b16 %v626, %v619
    %v767 = vpack.c.b16 %v627, %v620
    %v768 = vpack.c.b16 %v628, %v621
    %v769 = vpack.c.b16 %v629, %v622
    %v770 = vpack.c.b16 %v637, %v630
    %v771 = vpack.c.b16 %v638, %v631
    %v772 = vpack.c.b16 %v639, %v632
    %v773 = vpack.c.b16 %v640, %v633
    %v774 = vpack.c.b16 %v641, %v634
    %v775 = vpack.c.b16 %v642, %v635
    %v776 = vpack.c.b16 %v643, %v636
    %v777 = vpack.c.b16 %v651, %v644
    %v778 = vpack.c.b16 %v652, %v645
    %v779 = vpack.c.b16 %v653, %v646
    %v780 = vpack.c.b16 %v654, %v647
    %v781 = vpack.c.b16 %v655, %v648
    %v782 = vpack.c.b16 %v656, %v649
    %v783 = vpack.c.b16 %v657, %v650
    %v784 = vpack.c.b16 %v665, %v658
    %v785 = vpack.c.b16 %v666, %v659
    %v786 = vpack.c.b16 %v667, %v660
    %v787 = vpack.c.b16 %v668, %v661
    %v788 = vpack.c.b16 %v669, %v662
    %v789 = vpack.c.b16 %v670, %v663
    %v790 = vpack.c.b16 %v671, %v664
    %v791 = vpack.c.b16 %v679, %v672
    %v792 = vpack.c.b16 %v680, %v673
    %v793 = vpack.c.b16 %v681, %v674
    %v794 = vpack.c.b16 %v682, %v675
    %v795 = vpack.c.b16 %v683, %v676
    %v796 = vpack.c.b16 %v684, %v677
    %v797 = vpack.c.b16 %v685, %v678
    %910 = vmatprep.subr.bf16.mxu0 %v687
    %911 = vmatpush1.bf16.msra.mxu0 %v686
    %912 = vmatprep.subr.bf16.mxu0 %v694
    %913 = vmatpush1.bf16.msra.mxu0 %v693
    %914 = vmatprep.subr.bf16.mxu0 %v701
    %915 = vmatpush1.bf16.msra.mxu0 %v700
    %916 = vmatprep.subr.bf16.mxu0 %v708
    %917 = vmatpush1.bf16.msra.mxu0 %v707
    %918 = vmatprep.subr.bf16.mxu0 %v715
    %919 = vmatpush1.bf16.msra.mxu0 %v714
    %920 = vmatprep.subr.bf16.mxu0 %v722
    %921 = vmatpush1.bf16.msra.mxu0 %v721
    %922 = vmatprep.subr.bf16.mxu0 %v729
    %923 = vmatpush1.bf16.msra.mxu0 %v728
    %924 = vmatprep.subr.bf16.mxu0 %v736
    %925 = vmatpush1.bf16.msra.mxu0 %v735
    %926 = vmatprep.subr.bf16.mxu0 %v743
    %927 = vmatpush1.bf16.msra.mxu0 %v742
    %928 = vmatprep.subr.bf16.mxu0 %v750
    %929 = vmatpush1.bf16.msra.mxu0 %v749
    %930 = vmatprep.subr.bf16.mxu0 %v757
    %931 = vmatpush1.bf16.msra.mxu0 %v756
    %932 = vmatprep.subr.bf16.mxu0 %v764
    %933 = vmatpush1.bf16.msra.mxu0 %v763
    %934 = vmatprep.subr.bf16.mxu0 %v771
    %935 = vmatpush1.bf16.msra.mxu0 %v770
    %936 = vmatprep.subr.bf16.mxu0 %v778
    %937 = vmatpush1.bf16.msra.mxu0 %v777
    %938 = vmatprep.subr.bf16.mxu0 %v785
    %939 = vmatpush1.bf16.msra.mxu0 %v784
    %940 = vmatprep.subr.bf16.mxu0 %v792
    %941 = vmatpush1.bf16.msra.mxu0 %v791
    %942 = vmatprep.mubr.bf16.mxu0 %v168
    %943 = vmatmul.mubr.bf16.gmra.mrb[0].mxu0 %v167
    %v944 = vpop.f32.mrb[0].mxu0
    %v945 = vadd.f32 %v302, %v944
    %v946 = vpop.f32.mrb[0].mxu0
    %v947 = vadd.f32 %v306, %v946
    %v948 = vpop.f32.mrb[0].mxu0
    %v949 = vpop.f32.mrb[0].mxu0
    %950 = vdwg.mxu0
    %951 = vmatprep.subr.bf16.mxu0 %v689
    %952 = vmatpush1.bf16.msra.mxu0 %v688
    %953 = vmatprep.subr.bf16.mxu0 %v696
    %954 = vmatpush1.bf16.msra.mxu0 %v695
    %955 = vmatprep.subr.bf16.mxu0 %v703
    %956 = vmatpush1.bf16.msra.mxu0 %v702
    %957 = vmatprep.subr.bf16.mxu0 %v710
    %958 = vmatpush1.bf16.msra.mxu0 %v709
    %959 = vmatprep.subr.bf16.mxu0 %v717
    %960 = vmatpush1.bf16.msra.mxu0 %v716
    %961 = vmatprep.subr.bf16.mxu0 %v724
    %962 = vmatpush1.bf16.msra.mxu0 %v723
    %963 = vmatprep.subr.bf16.mxu0 %v731
    %964 = vmatpush1.bf16.msra.mxu0 %v730
    %965 = vmatprep.subr.bf16.mxu0 %v738
    %966 = vmatpush1.bf16.msra.mxu0 %v737
    %967 = vmatprep.subr.bf16.mxu0 %v745
    %968 = vmatpush1.bf16.msra.mxu0 %v744
    %969 = vmatprep.subr.bf16.mxu0 %v752
    %970 = vmatpush1.bf16.msra.mxu0 %v751
    %971 = vmatprep.subr.bf16.mxu0 %v759
    %972 = vmatpush1.bf16.msra.mxu0 %v758
    %973 = vmatprep.subr.bf16.mxu0 %v766
    %974 = vmatpush1.bf16.msra.mxu0 %v765
    %975 = vmatprep.subr.bf16.mxu0 %v773
    %976 = vmatpush1.bf16.msra.mxu0 %v772
    %977 = vmatprep.subr.bf16.mxu0 %v780
    %978 = vmatpush1.bf16.msra.mxu0 %v779
    %979 = vmatprep.subr.bf16.mxu0 %v787
    %980 = vmatpush1.bf16.msra.mxu0 %v786
    %981 = vmatprep.subr.bf16.mxu0 %v794
    %982 = vmatpush1.bf16.msra.mxu0 %v793
    %983 = vmatprep.mubr.bf16.mxu0 %v168
    %984 = vmatmul.mubr.bf16.gmra.mrb[0].mxu0 %v167
    %v985 = vpop.f32.mrb[0].mxu0
    %v986 = vadd.f32 %v310, %v985
    %v987 = vpop.f32.mrb[0].mxu0
    %v988 = vadd.f32 %v314, %v987
    %v989 = vpop.f32.mrb[0].mxu0
    %v990 = vpop.f32.mrb[0].mxu0
    %991 = vdwg.mxu0
    %992 = vmatprep.subr.bf16.mxu0 %v691
    %993 = vmatpush1.bf16.msra.mxu0 %v690
    %994 = vmatprep.subr.bf16.mxu0 %v698
    %995 = vmatpush1.bf16.msra.mxu0 %v697
    %996 = vmatprep.subr.bf16.mxu0 %v705
    %997 = vmatpush1.bf16.msra.mxu0 %v704
    %998 = vmatprep.subr.bf16.mxu0 %v712
    %999 = vmatpush1.bf16.msra.mxu0 %v711
    %1000 = vmatprep.subr.bf16.mxu0 %v719
    %1001 = vmatpush1.bf16.msra.mxu0 %v718
    %1002 = vmatprep.subr.bf16.mxu0 %v726
    %1003 = vmatpush1.bf16.msra.mxu0 %v725
    %1004 = vmatprep.subr.bf16.mxu0 %v733
    %1005 = vmatpush1.bf16.msra.mxu0 %v732
    %1006 = vmatprep.subr.bf16.mxu0 %v740
    %1007 = vmatpush1.bf16.msra.mxu0 %v739
    %1008 = vmatprep.subr.bf16.mxu0 %v747
    %1009 = vmatpush1.bf16.msra.mxu0 %v746
    %1010 = vmatprep.subr.bf16.mxu0 %v754
    %1011 = vmatpush1.bf16.msra.mxu0 %v753
    %1012 = vmatprep.subr.bf16.mxu0 %v761
    %1013 = vmatpush1.bf16.msra.mxu0 %v760
    %1014 = vmatprep.subr.bf16.mxu0 %v768
    %1015 = vmatpush1.bf16.msra.mxu0 %v767
    %1016 = vmatprep.subr.bf16.mxu0 %v775
    %1017 = vmatpush1.bf16.msra.mxu0 %v774
    %1018 = vmatprep.subr.bf16.mxu0 %v782
    %1019 = vmatpush1.bf16.msra.mxu0 %v781
    %1020 = vmatprep.subr.bf16.mxu0 %v789
    %1021 = vmatpush1.bf16.msra.mxu0 %v788
    %1022 = vmatprep.subr.bf16.mxu0 %v796
    %1023 = vmatpush1.bf16.msra.mxu0 %v795
    %1024 = vmatprep.mubr.bf16.mxu0 %v168
    %1025 = vmatmul.mubr.bf16.gmra.mrb[0].mxu0 %v167
    %v1026 = vpop.f32.mrb[0].mxu0
    %v1027 = vadd.f32 %v318, %v1026
    %v1028 = vpop.f32.mrb[0].mxu0
    %v1029 = vadd.f32 %v322, %v1028
    %v1030 = vpop.f32.mrb[0].mxu0
    %v1031 = vpop.f32.mrb[0].mxu0
    %1032 = vdwg.mxu0
    %1033 = vmatprep.subr.bf16.mxu0 0
    %1034 = vmatpush1.bf16.msra.mxu0 %v692
    %1035 = vmatprep.subr.bf16.mxu0 0
    %1036 = vmatpush1.bf16.msra.mxu0 %v699
    %1037 = vmatprep.subr.bf16.mxu0 0
    %1038 = vmatpush1.bf16.msra.mxu0 %v706
    %1039 = vmatprep.subr.bf16.mxu0 0
    %1040 = vmatpush1.bf16.msra.mxu0 %v713
    %1041 = vmatprep.subr.bf16.mxu0 0
    %1042 = vmatpush1.bf16.msra.mxu0 %v720
    %1043 = vmatprep.subr.bf16.mxu0 0
    %1044 = vmatpush1.bf16.msra.mxu0 %v727
    %1045 = vmatprep.subr.bf16.mxu0 0
    %1046 = vmatpush1.bf16.msra.mxu0 %v734
    %1047 = vmatprep.subr.bf16.mxu0 0
    %1048 = vmatpush1.bf16.msra.mxu0 %v741
    %1049 = vmatprep.subr.bf16.mxu0 0
    %1050 = vmatpush1.bf16.msra.mxu0 %v748
    %1051 = vmatprep.subr.bf16.mxu0 0
    %1052 = vmatpush1.bf16.msra.mxu0 %v755
    %1053 = vmatprep.subr.bf16.mxu0 0
    %1054 = vmatpush1.bf16.msra.mxu0 %v762
    %1055 = vmatprep.subr.bf16.mxu0 0
    %1056 = vmatpush1.bf16.msra.mxu0 %v769
    %1057 = vmatprep.subr.bf16.mxu0 0
    %1058 = vmatpush1.bf16.msra.mxu0 %v776
    %1059 = vmatprep.subr.bf16.mxu0 0
    %1060 = vmatpush1.bf16.msra.mxu0 %v783
    %1061 = vmatprep.subr.bf16.mxu0 0
    %1062 = vmatpush1.bf16.msra.mxu0 %v790
    %1063 = vmatprep.subr.bf16.mxu0 0
    %1064 = vmatpush1.bf16.msra.mxu0 %v797
    %1065 = vmatprep.mubr.bf16.mxu0 %v168
    %1066 = vmatmul.mubr.bf16.gmra.mrb[0].mxu0 %v167
    %v1067 = vpop.f32.mrb[0].mxu0
    %v1068 = vadd.f32 %v326, %v1067
    %v1069 = vpop.f32.mrb[0].mxu0
    %v1070 = vpop.f32.mrb[0].mxu0
    %v1071 = vpop.f32.mrb[0].mxu0
    %1072 = vdwg.mxu0
    %v1073 = vmax.f32 %v945, 0.0
    %v1074 = vmax.f32 %v947, 0.0
    %v1075 = vmax.f32 %v986, 0.0
    %v1076 = vmax.f32 %v988, 0.0
    %v1077 = vmax.f32 %v1027, 0.0
    %v1078 = vmax.f32 %v1029, 0.0
    %v1079 = vmax.f32 %v1068, 0.0
    %v1080 = vpack.c.bf16 %v1073, %v1073
    %v1081 = vpack.c.bf16 %v1074, %v1074
    %v1082 = vpack.c.bf16 %v1075, %v1075
    %v1083 = vpack.c.bf16 %v1076, %v1076
    %v1084 = vpack.c.bf16 %v1077, %v1077
    %v1085 = vpack.c.bf16 %v1078, %v1078
    %v1086 = vpack.c.bf16 %v1079, %v1079
    %v1087 = vld [vmem:[#allocation6] sm:$0xff]
    %v1088 = vld [vmem:[#allocation6 + $0x8] sm:$0xff]
    %v1089 = vld [vmem:[#allocation6 + $0x10] sm:$0xff]
    %v1090 = vld [vmem:[#allocation6 + $0x18] sm:$0xff]
    %v1091 = vld [vmem:[#allocation6 + $0x20] sm:$0xff]
    %v1092 = vld [vmem:[#allocation6 + $0x28] sm:$0xff]
    %v1093 = vld [vmem:[#allocation6 + $0x30] sm:$0xff]
    %v1094 = vld [vmem:[#allocation6 + $0x38] sm:$0xff]
    %v1095 = vld [vmem:[#allocation6 + $0x40] sm:$0xff]
    %v1096 = vld [vmem:[#allocation6 + $0x48] sm:$0xff]
    %v1097 = vld [vmem:[#allocation6 + $0x50] sm:$0xff]
    %v1098 = vld [vmem:[#allocation6 + $0x58] sm:$0xff]
    %v1099 = vld [vmem:[#allocation6 + $0x60] sm:$0xff]
    %v1100 = vld [vmem:[#allocation6 + $0x68] sm:$0xff]
    %v1101 = vld [vmem:[#allocation6 + $0x70] sm:$0xff]
    %v1102 = vld [vmem:[#allocation6 + $0x78] sm:$0xff]
    %v1103 = vld [vmem:[#allocation6 + $0x80] sm:$0xff]
    %v1104 = vld [vmem:[#allocation6 + $0x88] sm:$0xff]
    %v1105 = vld [vmem:[#allocation6 + $0x90] sm:$0xff]
    %v1106 = vld [vmem:[#allocation6 + $0x98] sm:$0xff]
    %v1107 = vld [vmem:[#allocation6 + $0xa0] sm:$0xff]
    %v1108 = vld [vmem:[#allocation6 + $0xa8] sm:$0xff]
    %v1109 = vld [vmem:[#allocation6 + $0xb0] sm:$0xff]
    %v1110 = vld [vmem:[#allocation6 + $0xb8] sm:$0xff]
    %v1111 = vld [vmem:[#allocation6 + $0xc0] sm:$0xff]
    %v1112 = vld [vmem:[#allocation6 + $0xc8] sm:$0xff]
    %v1113 = vld [vmem:[#allocation6 + $0xd0] sm:$0xff]
    %v1114 = vld [vmem:[#allocation6 + $0xd8] sm:$0xff]
    %v1115 = vld [vmem:[#allocation6 + $0xe0] sm:$0xff]
    %v1116 = vld [vmem:[#allocation6 + $0xe8] sm:$0xff]
    %v1117 = vld [vmem:[#allocation6 + $0xf0] sm:$0xff]
    %v1118 = vld [vmem:[#allocation6 + $0xf8] sm:$0xff]
    %v1119 = vld [vmem:[#allocation6 + $0x100] sm:$0xff]
    %v1120 = vld [vmem:[#allocation6 + $0x108] sm:$0xff]
    %v1121 = vld [vmem:[#allocation6 + $0x110] sm:$0xff]
    %v1122 = vld [vmem:[#allocation6 + $0x118] sm:$0xff]
    %v1123 = vld [vmem:[#allocation6 + $0x120] sm:$0xff]
    %v1124 = vld [vmem:[#allocation6 + $0x128] sm:$0xff]
    %v1125 = vld [vmem:[#allocation6 + $0x130] sm:$0xff]
    %v1126 = vld [vmem:[#allocation6 + $0x138] sm:$0xff]
    %v1127 = vld [vmem:[#allocation6 + $0x140] sm:$0xff]
    %v1128 = vld [vmem:[#allocation6 + $0x148] sm:$0xff]
    %v1129 = vld [vmem:[#allocation6 + $0x150] sm:$0xff]
    %v1130 = vld [vmem:[#allocation6 + $0x158] sm:$0xff]
    %v1131 = vld [vmem:[#allocation6 + $0x160] sm:$0xff]
    %v1132 = vld [vmem:[#allocation6 + $0x168] sm:$0xff]
    %v1133 = vld [vmem:[#allocation6 + $0x170] sm:$0xff]
    %v1134 = vld [vmem:[#allocation6 + $0x178] sm:$0xff]
    %v1135 = vld [vmem:[#allocation6 + $0x180] sm:$0xff]
    %v1136 = vld [vmem:[#allocation6 + $0x188] sm:$0xff]
    %v1137 = vld [vmem:[#allocation6 + $0x190] sm:$0xff]
    %v1138 = vld [vmem:[#allocation6 + $0x198] sm:$0xff]
    %v1139 = vld [vmem:[#allocation6 + $0x1a0] sm:$0xff]
    %v1140 = vld [vmem:[#allocation6 + $0x1a8] sm:$0xff]
    %v1141 = vld [vmem:[#allocation6 + $0x1b0] sm:$0xff]
    %v1142 = vld [vmem:[#allocation6 + $0x1b8] sm:$0xff]
    %v1143 = vld [vmem:[#allocation6 + $0x1c0] sm:$0xff]
    %v1144 = vld [vmem:[#allocation6 + $0x1c8] sm:$0xff]
    %v1145 = vld [vmem:[#allocation6 + $0x1d0] sm:$0xff]
    %v1146 = vld [vmem:[#allocation6 + $0x1d8] sm:$0xff]
    %v1147 = vld [vmem:[#allocation6 + $0x1e0] sm:$0xff]
    %v1148 = vld [vmem:[#allocation6 + $0x1e8] sm:$0xff]
    %v1149 = vld [vmem:[#allocation6 + $0x1f0] sm:$0xff]
    %v1150 = vld [vmem:[#allocation6 + $0x1f8] sm:$0xff]
    %v1151 = vld [vmem:[#allocation6 + $0x200] sm:$0xff]
    %v1152 = vld [vmem:[#allocation6 + $0x208] sm:$0xff]
    %v1153 = vld [vmem:[#allocation6 + $0x210] sm:$0xff]
    %v1154 = vld [vmem:[#allocation6 + $0x218] sm:$0xff]
    %v1155 = vld [vmem:[#allocation6 + $0x220] sm:$0xff]
    %v1156 = vld [vmem:[#allocation6 + $0x228] sm:$0xff]
    %v1157 = vld [vmem:[#allocation6 + $0x230] sm:$0xff]
    %v1158 = vld [vmem:[#allocation6 + $0x238] sm:$0xff]
    %v1159 = vld [vmem:[#allocation6 + $0x240] sm:$0xff]
    %v1160 = vld [vmem:[#allocation6 + $0x248] sm:$0xff]
    %v1161 = vld [vmem:[#allocation6 + $0x250] sm:$0xff]
    %v1162 = vld [vmem:[#allocation6 + $0x258] sm:$0xff]
    %v1163 = vld [vmem:[#allocation6 + $0x260] sm:$0xff]
    %v1164 = vld [vmem:[#allocation6 + $0x268] sm:$0xff]
    %v1165 = vld [vmem:[#allocation6 + $0x270] sm:$0xff]
    %v1166 = vld [vmem:[#allocation6 + $0x278] sm:$0xff]
    %v1167 = vld [vmem:[#allocation6 + $0x280] sm:$0xff]
    %v1168 = vld [vmem:[#allocation6 + $0x288] sm:$0xff]
    %v1169 = vld [vmem:[#allocation6 + $0x290] sm:$0xff]
    %v1170 = vld [vmem:[#allocation6 + $0x298] sm:$0xff]
    %v1171 = vld [vmem:[#allocation6 + $0x2a0] sm:$0xff]
    %v1172 = vld [vmem:[#allocation6 + $0x2a8] sm:$0xff]
    %v1173 = vld [vmem:[#allocation6 + $0x2b0] sm:$0xff]
    %v1174 = vld [vmem:[#allocation6 + $0x2b8] sm:$0xff]
    %v1175 = vld [vmem:[#allocation6 + $0x2c0] sm:$0xff]
    %v1176 = vld [vmem:[#allocation6 + $0x2c8] sm:$0xff]
    %v1177 = vld [vmem:[#allocation6 + $0x2d0] sm:$0xff]
    %v1178 = vld [vmem:[#allocation6 + $0x2d8] sm:$0xff]
    %v1179 = vld [vmem:[#allocation6 + $0x2e0] sm:$0xff]
    %v1180 = vld [vmem:[#allocation6 + $0x2e8] sm:$0xff]
    %v1181 = vld [vmem:[#allocation6 + $0x2f0] sm:$0xff]
    %v1182 = vld [vmem:[#allocation6 + $0x2f8] sm:$0xff]
    %v1183 = vld [vmem:[#allocation6 + $0x300] sm:$0xff]
    %v1184 = vld [vmem:[#allocation6 + $0x308] sm:$0xff]
    %v1185 = vld [vmem:[#allocation6 + $0x310] sm:$0xff]
    %v1186 = vld [vmem:[#allocation6 + $0x318] sm:$0xff]
    %v1187 = vld [vmem:[#allocation6 + $0x320] sm:$0xff]
    %v1188 = vld [vmem:[#allocation6 + $0x328] sm:$0xff]
    %v1189 = vld [vmem:[#allocation6 + $0x330] sm:$0xff]
    %v1190 = vld [vmem:[#allocation6 + $0x338] sm:$0xff]
    %v1191 = vld [vmem:[#allocation6 + $0x340] sm:$0xff]
    %v1192 = vld [vmem:[#allocation6 + $0x348] sm:$0xff]
    %v1193 = vld [vmem:[#allocation6 + $0x350] sm:$0xff]
    %v1194 = vld [vmem:[#allocation6 + $0x358] sm:$0xff]
    %v1195 = vld [vmem:[#allocation6 + $0x360] sm:$0xff]
    %v1196 = vld [vmem:[#allocation6 + $0x368] sm:$0xff]
    %v1197 = vld [vmem:[#allocation6 + $0x370] sm:$0xff]
    %v1198 = vld [vmem:[#allocation6 + $0x378] sm:$0xff]
    %v1199 = vld [vmem:[#allocation6 + $0x380] sm:$0xff]
    %v1200 = vld [vmem:[#allocation6 + $0x388] sm:$0xff]
    %v1201 = vld [vmem:[#allocation6 + $0x390] sm:$0xff]
    %v1202 = vld [vmem:[#allocation6 + $0x398] sm:$0xff]
    %v1203 = vld [vmem:[#allocation6 + $0x3a0] sm:$0xff]
    %v1204 = vld [vmem:[#allocation6 + $0x3a8] sm:$0xff]
    %v1205 = vld [vmem:[#allocation6 + $0x3b0] sm:$0xff]
    %v1206 = vld [vmem:[#allocation6 + $0x3b8] sm:$0xff]
    %v1207 = vld [vmem:[#allocation6 + $0x3c0] sm:$0xff]
    %v1208 = vld [vmem:[#allocation6 + $0x3c8] sm:$0xff]
    %v1209 = vld [vmem:[#allocation6 + $0x3d0] sm:$0xff]
    %v1210 = vld [vmem:[#allocation6 + $0x3d8] sm:$0xff]
    %v1211 = vld [vmem:[#allocation6 + $0x3e0] sm:$0xff]
    %v1212 = vld [vmem:[#allocation6 + $0x3e8] sm:$0xff]
    %v1213 = vld [vmem:[#allocation6 + $0x3f0] sm:$0xff]
    %v1214 = vld [vmem:[#allocation6 + $0x3f8] sm:$0xff]
    %v1215 = vld [vmem:[#allocation6 + $0x400] sm:$0xff]
    %v1216 = vld [vmem:[#allocation6 + $0x408] sm:$0xff]
    %v1217 = vld [vmem:[#allocation6 + $0x410] sm:$0xff]
    %v1218 = vld [vmem:[#allocation6 + $0x418] sm:$0xff]
    %v1219 = vld [vmem:[#allocation6 + $0x420] sm:$0xff]
    %v1220 = vld [vmem:[#allocation6 + $0x428] sm:$0xff]
    %v1221 = vld [vmem:[#allocation6 + $0x430] sm:$0xff]
    %v1222 = vld [vmem:[#allocation6 + $0x438] sm:$0xff]
    %v1223 = vld [vmem:[#allocation6 + $0x440] sm:$0xff]
    %v1224 = vld [vmem:[#allocation6 + $0x448] sm:$0xff]
    %v1225 = vld [vmem:[#allocation6 + $0x450] sm:$0xff]
    %v1226 = vld [vmem:[#allocation6 + $0x458] sm:$0xff]
    %v1227 = vld [vmem:[#allocation6 + $0x460] sm:$0xff]
    %v1228 = vld [vmem:[#allocation6 + $0x468] sm:$0xff]
    %v1229 = vld [vmem:[#allocation6 + $0x470] sm:$0xff]
    %v1230 = vld [vmem:[#allocation6 + $0x478] sm:$0xff]
    %v1231 = vld [vmem:[#allocation6 + $0x480] sm:$0xff]
    %v1232 = vld [vmem:[#allocation6 + $0x488] sm:$0xff]
    %v1233 = vld [vmem:[#allocation6 + $0x490] sm:$0xff]
    %v1234 = vld [vmem:[#allocation6 + $0x498] sm:$0xff]
    %v1235 = vld [vmem:[#allocation6 + $0x4a0] sm:$0xff]
    %v1236 = vld [vmem:[#allocation6 + $0x4a8] sm:$0xff]
    %v1237 = vld [vmem:[#allocation6 + $0x4b0] sm:$0xff]
    %v1238 = vld [vmem:[#allocation6 + $0x4b8] sm:$0xff]
    %v1239 = vld [vmem:[#allocation6 + $0x4c0] sm:$0xff]
    %v1240 = vld [vmem:[#allocation6 + $0x4c8] sm:$0xff]
    %v1241 = vld [vmem:[#allocation6 + $0x4d0] sm:$0xff]
    %v1242 = vld [vmem:[#allocation6 + $0x4d8] sm:$0xff]
    %v1243 = vld [vmem:[#allocation6 + $0x4e0] sm:$0xff]
    %v1244 = vld [vmem:[#allocation6 + $0x4e8] sm:$0xff]
    %v1245 = vld [vmem:[#allocation6 + $0x4f0] sm:$0xff]
    %v1246 = vld [vmem:[#allocation6 + $0x4f8] sm:$0xff]
    %v1247 = vld [vmem:[#allocation6 + $0x500] sm:$0xff]
    %v1248 = vld [vmem:[#allocation6 + $0x508] sm:$0xff]
    %v1249 = vld [vmem:[#allocation6 + $0x510] sm:$0xff]
    %v1250 = vld [vmem:[#allocation6 + $0x518] sm:$0xff]
    %v1251 = vld [vmem:[#allocation6 + $0x520] sm:$0xff]
    %v1252 = vld [vmem:[#allocation6 + $0x528] sm:$0xff]
    %v1253 = vld [vmem:[#allocation6 + $0x530] sm:$0xff]
    %v1254 = vld [vmem:[#allocation6 + $0x538] sm:$0xff]
    %v1255 = vld [vmem:[#allocation6 + $0x540] sm:$0xff]
    %v1256 = vld [vmem:[#allocation6 + $0x548] sm:$0xff]
    %v1257 = vld [vmem:[#allocation6 + $0x550] sm:$0xff]
    %v1258 = vld [vmem:[#allocation6 + $0x558] sm:$0xff]
    %v1259 = vld [vmem:[#allocation6 + $0x560] sm:$0xff]
    %v1260 = vld [vmem:[#allocation6 + $0x568] sm:$0xff]
    %v1261 = vld [vmem:[#allocation6 + $0x570] sm:$0xff]
    %v1262 = vld [vmem:[#allocation6 + $0x578] sm:$0xff]
    %v1263 = vld [vmem:[#allocation6 + $0x580] sm:$0xff]
    %v1264 = vld [vmem:[#allocation6 + $0x588] sm:$0xff]
    %v1265 = vld [vmem:[#allocation6 + $0x590] sm:$0xff]
    %v1266 = vld [vmem:[#allocation6 + $0x598] sm:$0xff]
    %v1267 = vld [vmem:[#allocation6 + $0x5a0] sm:$0xff]
    %v1268 = vld [vmem:[#allocation6 + $0x5a8] sm:$0xff]
    %v1269 = vld [vmem:[#allocation6 + $0x5b0] sm:$0xff]
    %v1270 = vld [vmem:[#allocation6 + $0x5b8] sm:$0xff]
    %v1271 = vld [vmem:[#allocation6 + $0x5c0] sm:$0xff]
    %v1272 = vld [vmem:[#allocation6 + $0x5c8] sm:$0xff]
    %v1273 = vld [vmem:[#allocation6 + $0x5d0] sm:$0xff]
    %v1274 = vld [vmem:[#allocation6 + $0x5d8] sm:$0xff]
    %v1275 = vld [vmem:[#allocation6 + $0x5e0] sm:$0xff]
    %v1276 = vld [vmem:[#allocation6 + $0x5e8] sm:$0xff]
    %v1277 = vld [vmem:[#allocation6 + $0x5f0] sm:$0xff]
    %v1278 = vld [vmem:[#allocation6 + $0x5f8] sm:$0xff]
    %v1279 = vld [vmem:[#allocation6 + $0x600] sm:$0xff]
    %v1280 = vld [vmem:[#allocation6 + $0x608] sm:$0xff]
    %v1281 = vld [vmem:[#allocation6 + $0x610] sm:$0xff]
    %v1282 = vld [vmem:[#allocation6 + $0x618] sm:$0xff]
    %v1283 = vld [vmem:[#allocation6 + $0x620] sm:$0xff]
    %v1284 = vld [vmem:[#allocation6 + $0x628] sm:$0xff]
    %v1285 = vld [vmem:[#allocation6 + $0x630] sm:$0xff]
    %v1286 = vld [vmem:[#allocation6 + $0x638] sm:$0xff]
    %v1287 = vld [vmem:[#allocation6 + $0x640] sm:$0xff]
    %v1288 = vld [vmem:[#allocation6 + $0x648] sm:$0xff]
    %v1289 = vld [vmem:[#allocation6 + $0x650] sm:$0xff]
    %v1290 = vld [vmem:[#allocation6 + $0x658] sm:$0xff]
    %v1291 = vld [vmem:[#allocation6 + $0x660] sm:$0xff]
    %v1292 = vld [vmem:[#allocation6 + $0x668] sm:$0xff]
    %v1293 = vld [vmem:[#allocation6 + $0x670] sm:$0xff]
    %v1294 = vld [vmem:[#allocation6 + $0x678] sm:$0xff]
    %v1295 = vld [vmem:[#allocation6 + $0x680] sm:$0xff]
    %v1296 = vld [vmem:[#allocation6 + $0x688] sm:$0xff]
    %v1297 = vld [vmem:[#allocation6 + $0x690] sm:$0xff]
    %v1298 = vld [vmem:[#allocation6 + $0x698] sm:$0xff]
    %v1299 = vld [vmem:[#allocation6 + $0x6a0] sm:$0xff]
    %v1300 = vld [vmem:[#allocation6 + $0x6a8] sm:$0xff]
    %v1301 = vld [vmem:[#allocation6 + $0x6b0] sm:$0xff]
    %v1302 = vld [vmem:[#allocation6 + $0x6b8] sm:$0xff]
    %v1303 = vld [vmem:[#allocation6 + $0x6c0] sm:$0xff]
    %v1304 = vld [vmem:[#allocation6 + $0x6c8] sm:$0xff]
    %v1305 = vld [vmem:[#allocation6 + $0x6d0] sm:$0xff]
    %v1306 = vld [vmem:[#allocation6 + $0x6d8] sm:$0xff]
    %v1307 = vld [vmem:[#allocation6 + $0x6e0] sm:$0xff]
    %v1308 = vld [vmem:[#allocation6 + $0x6e8] sm:$0xff]
    %v1309 = vld [vmem:[#allocation6 + $0x6f0] sm:$0xff]
    %v1310 = vld [vmem:[#allocation6 + $0x6f8] sm:$0xff]
    %v1311 = vld [vmem:[#allocation6 + $0x700] sm:$0xff]
    %v1312 = vld [vmem:[#allocation6 + $0x708] sm:$0xff]
    %v1313 = vld [vmem:[#allocation6 + $0x710] sm:$0xff]
    %v1314 = vld [vmem:[#allocation6 + $0x718] sm:$0xff]
    %v1315 = vld [vmem:[#allocation6 + $0x720] sm:$0xff]
    %v1316 = vld [vmem:[#allocation6 + $0x728] sm:$0xff]
    %v1317 = vld [vmem:[#allocation6 + $0x730] sm:$0xff]
    %v1318 = vld [vmem:[#allocation6 + $0x738] sm:$0xff]
    %v1319 = vld [vmem:[#allocation6 + $0x740] sm:$0xff]
    %v1320 = vld [vmem:[#allocation6 + $0x748] sm:$0xff]
    %v1321 = vld [vmem:[#allocation6 + $0x750] sm:$0xff]
    %v1322 = vld [vmem:[#allocation6 + $0x758] sm:$0xff]
    %v1323 = vld [vmem:[#allocation6 + $0x760] sm:$0xff]
    %v1324 = vld [vmem:[#allocation6 + $0x768] sm:$0xff]
    %v1325 = vld [vmem:[#allocation6 + $0x770] sm:$0xff]
    %v1326 = vld [vmem:[#allocation6 + $0x778] sm:$0xff]
    %v1327 = vld [vmem:[#allocation6 + $0x780] sm:$0xff]
    %v1328 = vld [vmem:[#allocation6 + $0x788] sm:$0xff]
    %v1329 = vld [vmem:[#allocation6 + $0x790] sm:$0xff]
    %v1330 = vld [vmem:[#allocation6 + $0x798] sm:$0xff]
    %v1331 = vld [vmem:[#allocation6 + $0x7a0] sm:$0xff]
    %v1332 = vld [vmem:[#allocation6 + $0x7a8] sm:$0xff]
    %v1333 = vld [vmem:[#allocation6 + $0x7b0] sm:$0xff]
    %v1334 = vld [vmem:[#allocation6 + $0x7b8] sm:$0xff]
    %v1335 = vld [vmem:[#allocation6 + $0x7c0] sm:$0xff]
    %v1336 = vld [vmem:[#allocation6 + $0x7c8] sm:$0xff]
    %v1337 = vld [vmem:[#allocation6 + $0x7d0] sm:$0xff]
    %v1338 = vld [vmem:[#allocation6 + $0x7d8] sm:$0xff]
    %v1339 = vld [vmem:[#allocation6 + $0x7e0] sm:$0xff]
    %v1340 = vld [vmem:[#allocation6 + $0x7e8] sm:$0xff]
    %v1341 = vld [vmem:[#allocation6 + $0x7f0] sm:$0xff]
    %v1342 = vld [vmem:[#allocation6 + $0x7f8] sm:$0xff]
    %v1343 = vld [vmem:[#allocation6 + $0x800] sm:$0xff]
    %v1344 = vld [vmem:[#allocation6 + $0x808] sm:$0xff]
    %v1345 = vld [vmem:[#allocation6 + $0x810] sm:$0xff]
    %v1346 = vld [vmem:[#allocation6 + $0x818] sm:$0xff]
    %v1347 = vld [vmem:[#allocation6 + $0x820] sm:$0xff]
    %v1348 = vld [vmem:[#allocation6 + $0x828] sm:$0xff]
    %v1349 = vld [vmem:[#allocation6 + $0x830] sm:$0xff]
    %v1350 = vld [vmem:[#allocation6 + $0x838] sm:$0xff]
    %v1351 = vld [vmem:[#allocation6 + $0x840] sm:$0xff]
    %v1352 = vld [vmem:[#allocation6 + $0x848] sm:$0xff]
    %v1353 = vld [vmem:[#allocation6 + $0x850] sm:$0xff]
    %v1354 = vld [vmem:[#allocation6 + $0x858] sm:$0xff]
    %v1355 = vld [vmem:[#allocation6 + $0x860] sm:$0xff]
    %v1356 = vld [vmem:[#allocation6 + $0x868] sm:$0xff]
    %v1357 = vld [vmem:[#allocation6 + $0x870] sm:$0xff]
    %v1358 = vld [vmem:[#allocation6 + $0x878] sm:$0xff]
    %v1359 = vld [vmem:[#allocation6 + $0x880] sm:$0xff]
    %v1360 = vld [vmem:[#allocation6 + $0x888] sm:$0xff]
    %v1361 = vld [vmem:[#allocation6 + $0x890] sm:$0xff]
    %v1362 = vld [vmem:[#allocation6 + $0x898] sm:$0xff]
    %v1363 = vld [vmem:[#allocation6 + $0x8a0] sm:$0xff]
    %v1364 = vld [vmem:[#allocation6 + $0x8a8] sm:$0xff]
    %v1365 = vld [vmem:[#allocation6 + $0x8b0] sm:$0xff]
    %v1366 = vld [vmem:[#allocation6 + $0x8b8] sm:$0xff]
    %v1367 = vld [vmem:[#allocation6 + $0x8c0] sm:$0xff]
    %v1368 = vld [vmem:[#allocation6 + $0x8c8] sm:$0xff]
    %v1369 = vld [vmem:[#allocation6 + $0x8d0] sm:$0xff]
    %v1370 = vld [vmem:[#allocation6 + $0x8d8] sm:$0xff]
    %v1371 = vld [vmem:[#allocation6 + $0x8e0] sm:$0xff]
    %v1372 = vld [vmem:[#allocation6 + $0x8e8] sm:$0xff]
    %v1373 = vld [vmem:[#allocation6 + $0x8f0] sm:$0xff]
    %v1374 = vld [vmem:[#allocation6 + $0x8f8] sm:$0xff]
    %v1375 = vld [vmem:[#allocation6 + $0x900] sm:$0xff]
    %v1376 = vld [vmem:[#allocation6 + $0x908] sm:$0xff]
    %v1377 = vld [vmem:[#allocation6 + $0x910] sm:$0xff]
    %v1378 = vld [vmem:[#allocation6 + $0x918] sm:$0xff]
    %v1379 = vld [vmem:[#allocation6 + $0x920] sm:$0xff]
    %v1380 = vld [vmem:[#allocation6 + $0x928] sm:$0xff]
    %v1381 = vld [vmem:[#allocation6 + $0x930] sm:$0xff]
    %v1382 = vld [vmem:[#allocation6 + $0x938] sm:$0xff]
    %v1383 = vld [vmem:[#allocation6 + $0x940] sm:$0xff]
    %v1384 = vld [vmem:[#allocation6 + $0x948] sm:$0xff]
    %v1385 = vld [vmem:[#allocation6 + $0x950] sm:$0xff]
    %v1386 = vld [vmem:[#allocation6 + $0x958] sm:$0xff]
    %v1387 = vld [vmem:[#allocation6 + $0x960] sm:$0xff]
    %v1388 = vld [vmem:[#allocation6 + $0x968] sm:$0xff]
    %v1389 = vld [vmem:[#allocation6 + $0x970] sm:$0xff]
    %v1390 = vld [vmem:[#allocation6 + $0x978] sm:$0xff]
    %v1391 = vld [vmem:[#allocation6 + $0x980] sm:$0xff]
    %v1392 = vld [vmem:[#allocation6 + $0x988] sm:$0xff]
    %v1393 = vld [vmem:[#allocation6 + $0x990] sm:$0xff]
    %v1394 = vld [vmem:[#allocation6 + $0x998] sm:$0xff]
    %v1395 = vld [vmem:[#allocation6 + $0x9a0] sm:$0xff]
    %v1396 = vld [vmem:[#allocation6 + $0x9a8] sm:$0xff]
    %v1397 = vld [vmem:[#allocation6 + $0x9b0] sm:$0xff]
    %v1398 = vld [vmem:[#allocation6 + $0x9b8] sm:$0xff]
    %v1399 = vld [vmem:[#allocation6 + $0x9c0] sm:$0xff]
    %v1400 = vld [vmem:[#allocation6 + $0x9c8] sm:$0xff]
    %v1401 = vld [vmem:[#allocation6 + $0x9d0] sm:$0xff]
    %v1402 = vld [vmem:[#allocation6 + $0x9d8] sm:$0xff]
    %v1403 = vld [vmem:[#allocation6 + $0x9e0] sm:$0xff]
    %v1404 = vld [vmem:[#allocation6 + $0x9e8] sm:$0xff]
    %v1405 = vld [vmem:[#allocation6 + $0x9f0] sm:$0xff]
    %v1406 = vld [vmem:[#allocation6 + $0x9f8] sm:$0xff]
    %v1407 = vld [vmem:[#allocation6 + $0xa00] sm:$0xff]
    %v1408 = vld [vmem:[#allocation6 + $0xa08] sm:$0xff]
    %v1409 = vld [vmem:[#allocation6 + $0xa10] sm:$0xff]
    %v1410 = vld [vmem:[#allocation6 + $0xa18] sm:$0xff]
    %v1411 = vld [vmem:[#allocation6 + $0xa20] sm:$0xff]
    %v1412 = vld [vmem:[#allocation6 + $0xa28] sm:$0xff]
    %v1413 = vld [vmem:[#allocation6 + $0xa30] sm:$0xff]
    %v1414 = vld [vmem:[#allocation6 + $0xa38] sm:$0xff]
    %v1415 = vld [vmem:[#allocation6 + $0xa40] sm:$0xff]
    %v1416 = vld [vmem:[#allocation6 + $0xa48] sm:$0xff]
    %v1417 = vld [vmem:[#allocation6 + $0xa50] sm:$0xff]
    %v1418 = vld [vmem:[#allocation6 + $0xa58] sm:$0xff]
    %v1419 = vld [vmem:[#allocation6 + $0xa60] sm:$0xff]
    %v1420 = vld [vmem:[#allocation6 + $0xa68] sm:$0xff]
    %v1421 = vld [vmem:[#allocation6 + $0xa70] sm:$0xff]
    %v1422 = vld [vmem:[#allocation6 + $0xa78] sm:$0xff]
    %v1423 = vld [vmem:[#allocation6 + $0xa80] sm:$0xff]
    %v1424 = vld [vmem:[#allocation6 + $0xa88] sm:$0xff]
    %v1425 = vld [vmem:[#allocation6 + $0xa90] sm:$0xff]
    %v1426 = vld [vmem:[#allocation6 + $0xa98] sm:$0xff]
    %v1427 = vld [vmem:[#allocation6 + $0xaa0] sm:$0xff]
    %v1428 = vld [vmem:[#allocation6 + $0xaa8] sm:$0xff]
    %v1429 = vld [vmem:[#allocation6 + $0xab0] sm:$0xff]
    %v1430 = vld [vmem:[#allocation6 + $0xab8] sm:$0xff]
    %v1431 = vld [vmem:[#allocation6 + $0xac0] sm:$0xff]
    %v1432 = vld [vmem:[#allocation6 + $0xac8] sm:$0xff]
    %v1433 = vld [vmem:[#allocation6 + $0xad0] sm:$0xff]
    %v1434 = vld [vmem:[#allocation6 + $0xad8] sm:$0xff]
    %v1435 = vld [vmem:[#allocation6 + $0xae0] sm:$0xff]
    %v1436 = vld [vmem:[#allocation6 + $0xae8] sm:$0xff]
    %v1437 = vld [vmem:[#allocation6 + $0xaf0] sm:$0xff]
    %v1438 = vld [vmem:[#allocation6 + $0xaf8] sm:$0xff]
    %v1439 = vld [vmem:[#allocation6 + $0xb00] sm:$0xff]
    %v1440 = vld [vmem:[#allocation6 + $0xb08] sm:$0xff]
    %v1441 = vld [vmem:[#allocation6 + $0xb10] sm:$0xff]
    %v1442 = vld [vmem:[#allocation6 + $0xb18] sm:$0xff]
    %v1443 = vld [vmem:[#allocation6 + $0xb20] sm:$0xff]
    %v1444 = vld [vmem:[#allocation6 + $0xb28] sm:$0xff]
    %v1445 = vld [vmem:[#allocation6 + $0xb30] sm:$0xff]
    %v1446 = vld [vmem:[#allocation6 + $0xb38] sm:$0xff]
    %v1447 = vld [vmem:[#allocation6 + $0xb40] sm:$0xff]
    %v1448 = vld [vmem:[#allocation6 + $0xb48] sm:$0xff]
    %v1449 = vld [vmem:[#allocation6 + $0xb50] sm:$0xff]
    %v1450 = vld [vmem:[#allocation6 + $0xb58] sm:$0xff]
    %v1451 = vld [vmem:[#allocation6 + $0xb60] sm:$0xff]
    %v1452 = vld [vmem:[#allocation6 + $0xb68] sm:$0xff]
    %v1453 = vld [vmem:[#allocation6 + $0xb70] sm:$0xff]
    %v1454 = vld [vmem:[#allocation6 + $0xb78] sm:$0xff]
    %v1455 = vld [vmem:[#allocation6 + $0xb80] sm:$0xff]
    %v1456 = vld [vmem:[#allocation6 + $0xb88] sm:$0xff]
    %v1457 = vld [vmem:[#allocation6 + $0xb90] sm:$0xff]
    %v1458 = vld [vmem:[#allocation6 + $0xb98] sm:$0xff]
    %v1459 = vld [vmem:[#allocation6 + $0xba0] sm:$0xff]
    %v1460 = vld [vmem:[#allocation6 + $0xba8] sm:$0xff]
    %v1461 = vld [vmem:[#allocation6 + $0xbb0] sm:$0xff]
    %v1462 = vld [vmem:[#allocation6 + $0xbb8] sm:$0xff]
    %v1463 = vld [vmem:[#allocation6 + $0xbc0] sm:$0xff]
    %v1464 = vld [vmem:[#allocation6 + $0xbc8] sm:$0xff]
    %v1465 = vld [vmem:[#allocation6 + $0xbd0] sm:$0xff]
    %v1466 = vld [vmem:[#allocation6 + $0xbd8] sm:$0xff]
    %v1467 = vld [vmem:[#allocation6 + $0xbe0] sm:$0xff]
    %v1468 = vld [vmem:[#allocation6 + $0xbe8] sm:$0xff]
    %v1469 = vld [vmem:[#allocation6 + $0xbf0] sm:$0xff]
    %v1470 = vld [vmem:[#allocation6 + $0xbf8] sm:$0xff]
    %v1471 = vld [vmem:[#allocation6 + $0xc00] sm:$0xff]
    %v1472 = vld [vmem:[#allocation6 + $0xc08] sm:$0xff]
    %v1473 = vld [vmem:[#allocation6 + $0xc10] sm:$0xff]
    %v1474 = vld [vmem:[#allocation6 + $0xc18] sm:$0xff]
    %v1475 = vld [vmem:[#allocation6 + $0xc20] sm:$0xff]
    %v1476 = vld [vmem:[#allocation6 + $0xc28] sm:$0xff]
    %v1477 = vld [vmem:[#allocation6 + $0xc30] sm:$0xff]
    %v1478 = vld [vmem:[#allocation6 + $0xc38] sm:$0xff]
    %v1479 = vld [vmem:[#allocation6 + $0xc40] sm:$0xff]
    %v1480 = vld [vmem:[#allocation6 + $0xc48] sm:$0xff]
    %v1481 = vld [vmem:[#allocation6 + $0xc50] sm:$0xff]
    %v1482 = vld [vmem:[#allocation6 + $0xc58] sm:$0xff]
    %v1483 = vld [vmem:[#allocation6 + $0xc60] sm:$0xff]
    %v1484 = vld [vmem:[#allocation6 + $0xc68] sm:$0xff]
    %v1485 = vld [vmem:[#allocation6 + $0xc70] sm:$0xff]
    %v1486 = vld [vmem:[#allocation6 + $0xc78] sm:$0xff]
    %v1487 = vld [vmem:[#allocation6 + $0xc80] sm:$0xff]
    %v1488 = vld [vmem:[#allocation6 + $0xc88] sm:$0xff]
    %v1489 = vld [vmem:[#allocation6 + $0xc90] sm:$0xff]
    %v1490 = vld [vmem:[#allocation6 + $0xc98] sm:$0xff]
    %v1491 = vld [vmem:[#allocation6 + $0xca0] sm:$0xff]
    %v1492 = vld [vmem:[#allocation6 + $0xca8] sm:$0xff]
    %v1493 = vld [vmem:[#allocation6 + $0xcb0] sm:$0xff]
    %v1494 = vld [vmem:[#allocation6 + $0xcb8] sm:$0xff]
    %v1495 = vld [vmem:[#allocation6 + $0xcc0] sm:$0xff]
    %v1496 = vld [vmem:[#allocation6 + $0xcc8] sm:$0xff]
    %v1497 = vld [vmem:[#allocation6 + $0xcd0] sm:$0xff]
    %v1498 = vld [vmem:[#allocation6 + $0xcd8] sm:$0xff]
    %v1499 = vld [vmem:[#allocation6 + $0xce0] sm:$0xff]
    %v1500 = vld [vmem:[#allocation6 + $0xce8] sm:$0xff]
    %v1501 = vld [vmem:[#allocation6 + $0xcf0] sm:$0xff]
    %v1502 = vld [vmem:[#allocation6 + $0xcf8] sm:$0xff]
    %v1503 = vld [vmem:[#allocation6 + $0xd00] sm:$0xff]
    %v1504 = vld [vmem:[#allocation6 + $0xd08] sm:$0xff]
    %v1505 = vld [vmem:[#allocation6 + $0xd10] sm:$0xff]
    %v1506 = vld [vmem:[#allocation6 + $0xd18] sm:$0xff]
    %v1507 = vld [vmem:[#allocation6 + $0xd20] sm:$0xff]
    %v1508 = vld [vmem:[#allocation6 + $0xd28] sm:$0xff]
    %v1509 = vld [vmem:[#allocation6 + $0xd30] sm:$0xff]
    %v1510 = vld [vmem:[#allocation6 + $0xd38] sm:$0xff]
    %v1511 = vld [vmem:[#allocation6 + $0xd40] sm:$0xff]
    %v1512 = vld [vmem:[#allocation6 + $0xd48] sm:$0xff]
    %v1513 = vld [vmem:[#allocation6 + $0xd50] sm:$0xff]
    %v1514 = vld [vmem:[#allocation6 + $0xd58] sm:$0xff]
    %v1515 = vld [vmem:[#allocation6 + $0xd60] sm:$0xff]
    %v1516 = vld [vmem:[#allocation6 + $0xd68] sm:$0xff]
    %v1517 = vld [vmem:[#allocation6 + $0xd70] sm:$0xff]
    %v1518 = vld [vmem:[#allocation6 + $0xd78] sm:$0xff]
    %v1519 = vld [vmem:[#allocation6 + $0xd80] sm:$0xff]
    %v1520 = vld [vmem:[#allocation6 + $0xd88] sm:$0xff]
    %v1521 = vld [vmem:[#allocation6 + $0xd90] sm:$0xff]
    %v1522 = vld [vmem:[#allocation6 + $0xd98] sm:$0xff]
    %v1523 = vld [vmem:[#allocation6 + $0xda0] sm:$0xff]
    %v1524 = vld [vmem:[#allocation6 + $0xda8] sm:$0xff]
    %v1525 = vld [vmem:[#allocation6 + $0xdb0] sm:$0xff]
    %v1526 = vld [vmem:[#allocation6 + $0xdb8] sm:$0xff]
    %v1527 = vld [vmem:[#allocation6 + $0xdc0] sm:$0xff]
    %v1528 = vld [vmem:[#allocation6 + $0xdc8] sm:$0xff]
    %v1529 = vld [vmem:[#allocation6 + $0xdd0] sm:$0xff]
    %v1530 = vld [vmem:[#allocation6 + $0xdd8] sm:$0xff]
    %v1531 = vld [vmem:[#allocation6 + $0xde0] sm:$0xff]
    %v1532 = vld [vmem:[#allocation6 + $0xde8] sm:$0xff]
    %v1533 = vld [vmem:[#allocation6 + $0xdf0] sm:$0xff]
    %v1534 = vld [vmem:[#allocation6 + $0xdf8] sm:$0xff]
    %v1535 = vld [vmem:[#allocation7] sm:$0xff]
    %v1537 = vlaneseq
    %v1538 = vshrl.u32 %v1537, 7
    %v1539 = vsub.s32 0, %v1538
    %v1540 = vrot.slane %v1535, %v1539
    %v1541 = vlaneseq
    %v1542 = vshrl.u32 %v1541, 7
    %v1543 = vsub.s32 1, %v1542
    %v1544 = vrot.slane %v1535, %v1543
    %v1545 = vlaneseq
    %v1546 = vshrl.u32 %v1545, 7
    %v1547 = vsub.s32 2, %v1546
    %v1548 = vrot.slane %v1535, %v1547
    %v1549 = vlaneseq
    %v1550 = vshrl.u32 %v1549, 7
    %v1551 = vsub.s32 3, %v1550
    %v1552 = vrot.slane %v1535, %v1551
    %v1553 = vlaneseq
    %v1554 = vshrl.u32 %v1553, 7
    %v1555 = vsub.s32 4, %v1554
    %v1556 = vrot.slane %v1535, %v1555
    %v1557 = vlaneseq
    %v1558 = vshrl.u32 %v1557, 7
    %v1559 = vsub.s32 5, %v1558
    %v1560 = vrot.slane %v1535, %v1559
    %v1561 = vlaneseq
    %v1562 = vshrl.u32 %v1561, 7
    %v1563 = vsub.s32 6, %v1562
    %v1564 = vrot.slane %v1535, %v1563
    %v1565 = vlaneseq
    %v1566 = vshrl.u32 %v1565, 7
    %v1567 = vsub.s32 7, %v1566
    %v1568 = vrot.slane %v1535, %v1567
    %v2025 = vunpack.c.l.b16 %v1087
    %v2026 = vunpack.c.h.b16 %v1087
    %v2027 = vunpack.c.l.b16 %v1088
    %v2028 = vunpack.c.h.b16 %v1088
    %v2029 = vunpack.c.l.b16 %v1089
    %v2030 = vunpack.c.h.b16 %v1089
    %v2031 = vunpack.c.l.b16 %v1090
    %v2032 = vunpack.c.h.b16 %v1090
    %v2033 = vunpack.c.l.b16 %v1091
    %v2034 = vunpack.c.h.b16 %v1091
    %v2035 = vunpack.c.l.b16 %v1092
    %v2036 = vunpack.c.h.b16 %v1092
    %v2037 = vunpack.c.l.b16 %v1093
    %v2038 = vunpack.c.h.b16 %v1093
    %v2039 = vunpack.c.l.b16 %v1094
    %v2040 = vunpack.c.h.b16 %v1094
    %v2041 = vunpack.c.l.b16 %v1095
    %v2042 = vunpack.c.h.b16 %v1095
    %v2043 = vunpack.c.l.b16 %v1096
    %v2044 = vunpack.c.h.b16 %v1096
    %v2045 = vunpack.c.l.b16 %v1097
    %v2046 = vunpack.c.h.b16 %v1097
    %v2047 = vunpack.c.l.b16 %v1098
    %v2048 = vunpack.c.h.b16 %v1098
    %v2049 = vunpack.c.l.b16 %v1099
    %v2050 = vunpack.c.h.b16 %v1099
    %v2051 = vunpack.c.l.b16 %v1100
    %v2052 = vunpack.c.h.b16 %v1100
    %v2053 = vunpack.c.l.b16 %v1101
    %v2054 = vunpack.c.h.b16 %v1101
    %v2055 = vunpack.c.l.b16 %v1102
    %v2056 = vunpack.c.h.b16 %v1102
    %v2057 = vunpack.c.l.b16 %v1103
    %v2058 = vunpack.c.h.b16 %v1103
    %v2059 = vunpack.c.l.b16 %v1104
    %v2060 = vunpack.c.h.b16 %v1104
    %v2061 = vunpack.c.l.b16 %v1105
    %v2062 = vunpack.c.h.b16 %v1105
    %v2063 = vunpack.c.l.b16 %v1106
    %v2064 = vunpack.c.h.b16 %v1106
    %v2065 = vunpack.c.l.b16 %v1107
    %v2066 = vunpack.c.h.b16 %v1107
    %v2067 = vunpack.c.l.b16 %v1108
    %v2068 = vunpack.c.h.b16 %v1108
    %v2069 = vunpack.c.l.b16 %v1109
    %v2070 = vunpack.c.h.b16 %v1109
    %v2071 = vunpack.c.l.b16 %v1110
    %v2072 = vunpack.c.h.b16 %v1110
    %v2073 = vunpack.c.l.b16 %v1111
    %v2074 = vunpack.c.h.b16 %v1111
    %v2075 = vunpack.c.l.b16 %v1112
    %v2076 = vunpack.c.h.b16 %v1112
    %v2077 = vunpack.c.l.b16 %v1113
    %v2078 = vunpack.c.h.b16 %v1113
    %v2079 = vunpack.c.l.b16 %v1114
    %v2080 = vunpack.c.h.b16 %v1114
    %v2081 = vunpack.c.l.b16 %v1115
    %v2082 = vunpack.c.h.b16 %v1115
    %v2083 = vunpack.c.l.b16 %v1116
    %v2084 = vunpack.c.h.b16 %v1116
    %v2085 = vunpack.c.l.b16 %v1117
    %v2086 = vunpack.c.h.b16 %v1117
    %v2087 = vunpack.c.l.b16 %v1118
    %v2088 = vunpack.c.h.b16 %v1118
    %v2089 = vunpack.c.l.b16 %v1119
    %v2090 = vunpack.c.h.b16 %v1119
    %v2091 = vunpack.c.l.b16 %v1120
    %v2092 = vunpack.c.h.b16 %v1120
    %v2093 = vunpack.c.l.b16 %v1121
    %v2094 = vunpack.c.h.b16 %v1121
    %v2095 = vunpack.c.l.b16 %v1122
    %v2096 = vunpack.c.h.b16 %v1122
    %v2097 = vunpack.c.l.b16 %v1123
    %v2098 = vunpack.c.h.b16 %v1123
    %v2099 = vunpack.c.l.b16 %v1124
    %v2100 = vunpack.c.h.b16 %v1124
    %v2101 = vunpack.c.l.b16 %v1125
    %v2102 = vunpack.c.h.b16 %v1125
    %v2103 = vunpack.c.l.b16 %v1126
    %v2104 = vunpack.c.h.b16 %v1126
    %v2105 = vunpack.c.l.b16 %v1127
    %v2106 = vunpack.c.h.b16 %v1127
    %v2107 = vunpack.c.l.b16 %v1128
    %v2108 = vunpack.c.h.b16 %v1128
    %v2109 = vunpack.c.l.b16 %v1129
    %v2110 = vunpack.c.h.b16 %v1129
    %v2111 = vunpack.c.l.b16 %v1130
    %v2112 = vunpack.c.h.b16 %v1130
    %v2113 = vunpack.c.l.b16 %v1131
    %v2114 = vunpack.c.h.b16 %v1131
    %v2115 = vunpack.c.l.b16 %v1132
    %v2116 = vunpack.c.h.b16 %v1132
    %v2117 = vunpack.c.l.b16 %v1133
    %v2118 = vunpack.c.h.b16 %v1133
    %v2119 = vunpack.c.l.b16 %v1134
    %v2120 = vunpack.c.h.b16 %v1134
    %v2121 = vunpack.c.l.b16 %v1135
    %v2122 = vunpack.c.h.b16 %v1135
    %v2123 = vunpack.c.l.b16 %v1136
    %v2124 = vunpack.c.h.b16 %v1136
    %v2125 = vunpack.c.l.b16 %v1137
    %v2126 = vunpack.c.h.b16 %v1137
    %v2127 = vunpack.c.l.b16 %v1138
    %v2128 = vunpack.c.h.b16 %v1138
    %v2129 = vunpack.c.l.b16 %v1139
    %v2130 = vunpack.c.h.b16 %v1139
    %v2131 = vunpack.c.l.b16 %v1140
    %v2132 = vunpack.c.h.b16 %v1140
    %v2133 = vunpack.c.l.b16 %v1141
    %v2134 = vunpack.c.h.b16 %v1141
    %v2135 = vunpack.c.l.b16 %v1142
    %v2136 = vunpack.c.h.b16 %v1142
    %v2137 = vunpack.c.l.b16 %v1143
    %v2138 = vunpack.c.h.b16 %v1143
    %v2139 = vunpack.c.l.b16 %v1144
    %v2140 = vunpack.c.h.b16 %v1144
    %v2141 = vunpack.c.l.b16 %v1145
    %v2142 = vunpack.c.h.b16 %v1145
    %v2143 = vunpack.c.l.b16 %v1146
    %v2144 = vunpack.c.h.b16 %v1146
    %v2145 = vunpack.c.l.b16 %v1147
    %v2146 = vunpack.c.h.b16 %v1147
    %v2147 = vunpack.c.l.b16 %v1148
    %v2148 = vunpack.c.h.b16 %v1148
    %v2149 = vunpack.c.l.b16 %v1149
    %v2150 = vunpack.c.h.b16 %v1149
    %v2151 = vunpack.c.l.b16 %v1150
    %v2152 = vunpack.c.h.b16 %v1150
    %v2153 = vunpack.c.l.b16 %v1151
    %v2154 = vunpack.c.h.b16 %v1151
    %v2155 = vunpack.c.l.b16 %v1152
    %v2156 = vunpack.c.h.b16 %v1152
    %v2157 = vunpack.c.l.b16 %v1153
    %v2158 = vunpack.c.h.b16 %v1153
    %v2159 = vunpack.c.l.b16 %v1154
    %v2160 = vunpack.c.h.b16 %v1154
    %v2161 = vunpack.c.l.b16 %v1155
    %v2162 = vunpack.c.h.b16 %v1155
    %v2163 = vunpack.c.l.b16 %v1156
    %v2164 = vunpack.c.h.b16 %v1156
    %v2165 = vunpack.c.l.b16 %v1157
    %v2166 = vunpack.c.h.b16 %v1157
    %v2167 = vunpack.c.l.b16 %v1158
    %v2168 = vunpack.c.h.b16 %v1158
    %v2169 = vunpack.c.l.b16 %v1159
    %v2170 = vunpack.c.h.b16 %v1159
    %v2171 = vunpack.c.l.b16 %v1160
    %v2172 = vunpack.c.h.b16 %v1160
    %v2173 = vunpack.c.l.b16 %v1161
    %v2174 = vunpack.c.h.b16 %v1161
    %v2175 = vunpack.c.l.b16 %v1162
    %v2176 = vunpack.c.h.b16 %v1162
    %v2177 = vunpack.c.l.b16 %v1163
    %v2178 = vunpack.c.h.b16 %v1163
    %v2179 = vunpack.c.l.b16 %v1164
    %v2180 = vunpack.c.h.b16 %v1164
    %v2181 = vunpack.c.l.b16 %v1165
    %v2182 = vunpack.c.h.b16 %v1165
    %v2183 = vunpack.c.l.b16 %v1166
    %v2184 = vunpack.c.h.b16 %v1166
    %v2185 = vunpack.c.l.b16 %v1167
    %v2186 = vunpack.c.h.b16 %v1167
    %v2187 = vunpack.c.l.b16 %v1168
    %v2188 = vunpack.c.h.b16 %v1168
    %v2189 = vunpack.c.l.b16 %v1169
    %v2190 = vunpack.c.h.b16 %v1169
    %v2191 = vunpack.c.l.b16 %v1170
    %v2192 = vunpack.c.h.b16 %v1170
    %v2193 = vunpack.c.l.b16 %v1171
    %v2194 = vunpack.c.h.b16 %v1171
    %v2195 = vunpack.c.l.b16 %v1172
    %v2196 = vunpack.c.h.b16 %v1172
    %v2197 = vunpack.c.l.b16 %v1173
    %v2198 = vunpack.c.h.b16 %v1173
    %v2199 = vunpack.c.l.b16 %v1174
    %v2200 = vunpack.c.h.b16 %v1174
    %v2201 = vunpack.c.l.b16 %v1175
    %v2202 = vunpack.c.h.b16 %v1175
    %v2203 = vunpack.c.l.b16 %v1176
    %v2204 = vunpack.c.h.b16 %v1176
    %v2205 = vunpack.c.l.b16 %v1177
    %v2206 = vunpack.c.h.b16 %v1177
    %v2207 = vunpack.c.l.b16 %v1178
    %v2208 = vunpack.c.h.b16 %v1178
    %v2209 = vunpack.c.l.b16 %v1179
    %v2210 = vunpack.c.h.b16 %v1179
    %v2211 = vunpack.c.l.b16 %v1180
    %v2212 = vunpack.c.h.b16 %v1180
    %v2213 = vunpack.c.l.b16 %v1181
    %v2214 = vunpack.c.h.b16 %v1181
    %v2215 = vunpack.c.l.b16 %v1182
    %v2216 = vunpack.c.h.b16 %v1182
    %v2217 = vunpack.c.l.b16 %v1183
    %v2218 = vunpack.c.h.b16 %v1183
    %v2219 = vunpack.c.l.b16 %v1184
    %v2220 = vunpack.c.h.b16 %v1184
    %v2221 = vunpack.c.l.b16 %v1185
    %v2222 = vunpack.c.h.b16 %v1185
    %v2223 = vunpack.c.l.b16 %v1186
    %v2224 = vunpack.c.h.b16 %v1186
    %v2225 = vunpack.c.l.b16 %v1187
    %v2226 = vunpack.c.h.b16 %v1187
    %v2227 = vunpack.c.l.b16 %v1188
    %v2228 = vunpack.c.h.b16 %v1188
    %v2229 = vunpack.c.l.b16 %v1189
    %v2230 = vunpack.c.h.b16 %v1189
    %v2231 = vunpack.c.l.b16 %v1190
    %v2232 = vunpack.c.h.b16 %v1190
    %v2233 = vunpack.c.l.b16 %v1191
    %v2234 = vunpack.c.h.b16 %v1191
    %v2235 = vunpack.c.l.b16 %v1192
    %v2236 = vunpack.c.h.b16 %v1192
    %v2237 = vunpack.c.l.b16 %v1193
    %v2238 = vunpack.c.h.b16 %v1193
    %v2239 = vunpack.c.l.b16 %v1194
    %v2240 = vunpack.c.h.b16 %v1194
    %v2241 = vunpack.c.l.b16 %v1195
    %v2242 = vunpack.c.h.b16 %v1195
    %v2243 = vunpack.c.l.b16 %v1196
    %v2244 = vunpack.c.h.b16 %v1196
    %v2245 = vunpack.c.l.b16 %v1197
    %v2246 = vunpack.c.h.b16 %v1197
    %v2247 = vunpack.c.l.b16 %v1198
    %v2248 = vunpack.c.h.b16 %v1198
    %v2249 = vunpack.c.l.b16 %v1199
    %v2250 = vunpack.c.h.b16 %v1199
    %v2251 = vunpack.c.l.b16 %v1200
    %v2252 = vunpack.c.h.b16 %v1200
    %v2253 = vunpack.c.l.b16 %v1201
    %v2254 = vunpack.c.h.b16 %v1201
    %v2255 = vunpack.c.l.b16 %v1202
    %v2256 = vunpack.c.h.b16 %v1202
    %v2257 = vunpack.c.l.b16 %v1203
    %v2258 = vunpack.c.h.b16 %v1203
    %v2259 = vunpack.c.l.b16 %v1204
    %v2260 = vunpack.c.h.b16 %v1204
    %v2261 = vunpack.c.l.b16 %v1205
    %v2262 = vunpack.c.h.b16 %v1205
    %v2263 = vunpack.c.l.b16 %v1206
    %v2264 = vunpack.c.h.b16 %v1206
    %v2265 = vunpack.c.l.b16 %v1207
    %v2266 = vunpack.c.h.b16 %v1207
    %v2267 = vunpack.c.l.b16 %v1208
    %v2268 = vunpack.c.h.b16 %v1208
    %v2269 = vunpack.c.l.b16 %v1209
    %v2270 = vunpack.c.h.b16 %v1209
    %v2271 = vunpack.c.l.b16 %v1210
    %v2272 = vunpack.c.h.b16 %v1210
    %v2273 = vunpack.c.l.b16 %v1211
    %v2274 = vunpack.c.h.b16 %v1211
    %v2275 = vunpack.c.l.b16 %v1212
    %v2276 = vunpack.c.h.b16 %v1212
    %v2277 = vunpack.c.l.b16 %v1213
    %v2278 = vunpack.c.h.b16 %v1213
    %v2279 = vunpack.c.l.b16 %v1214
    %v2280 = vunpack.c.h.b16 %v1214
    %v2281 = vunpack.c.l.b16 %v1215
    %v2282 = vunpack.c.h.b16 %v1215
    %v2283 = vunpack.c.l.b16 %v1216
    %v2284 = vunpack.c.h.b16 %v1216
    %v2285 = vunpack.c.l.b16 %v1217
    %v2286 = vunpack.c.h.b16 %v1217
    %v2287 = vunpack.c.l.b16 %v1218
    %v2288 = vunpack.c.h.b16 %v1218
    %v2289 = vunpack.c.l.b16 %v1219
    %v2290 = vunpack.c.h.b16 %v1219
    %v2291 = vunpack.c.l.b16 %v1220
    %v2292 = vunpack.c.h.b16 %v1220
    %v2293 = vunpack.c.l.b16 %v1221
    %v2294 = vunpack.c.h.b16 %v1221
    %v2295 = vunpack.c.l.b16 %v1222
    %v2296 = vunpack.c.h.b16 %v1222
    %v2297 = vunpack.c.l.b16 %v1223
    %v2298 = vunpack.c.h.b16 %v1223
    %v2299 = vunpack.c.l.b16 %v1224
    %v2300 = vunpack.c.h.b16 %v1224
    %v2301 = vunpack.c.l.b16 %v1225
    %v2302 = vunpack.c.h.b16 %v1225
    %v2303 = vunpack.c.l.b16 %v1226
    %v2304 = vunpack.c.h.b16 %v1226
    %v2305 = vunpack.c.l.b16 %v1227
    %v2306 = vunpack.c.h.b16 %v1227
    %v2307 = vunpack.c.l.b16 %v1228
    %v2308 = vunpack.c.h.b16 %v1228
    %v2309 = vunpack.c.l.b16 %v1229
    %v2310 = vunpack.c.h.b16 %v1229
    %v2311 = vunpack.c.l.b16 %v1230
    %v2312 = vunpack.c.h.b16 %v1230
    %v2313 = vunpack.c.l.b16 %v1231
    %v2314 = vunpack.c.h.b16 %v1231
    %v2315 = vunpack.c.l.b16 %v1232
    %v2316 = vunpack.c.h.b16 %v1232
    %v2317 = vunpack.c.l.b16 %v1233
    %v2318 = vunpack.c.h.b16 %v1233
    %v2319 = vunpack.c.l.b16 %v1234
    %v2320 = vunpack.c.h.b16 %v1234
    %v2321 = vunpack.c.l.b16 %v1235
    %v2322 = vunpack.c.h.b16 %v1235
    %v2323 = vunpack.c.l.b16 %v1236
    %v2324 = vunpack.c.h.b16 %v1236
    %v2325 = vunpack.c.l.b16 %v1237
    %v2326 = vunpack.c.h.b16 %v1237
    %v2327 = vunpack.c.l.b16 %v1238
    %v2328 = vunpack.c.h.b16 %v1238
    %v2329 = vunpack.c.l.b16 %v1239
    %v2330 = vunpack.c.h.b16 %v1239
    %v2331 = vunpack.c.l.b16 %v1240
    %v2332 = vunpack.c.h.b16 %v1240
    %v2333 = vunpack.c.l.b16 %v1241
    %v2334 = vunpack.c.h.b16 %v1241
    %v2335 = vunpack.c.l.b16 %v1242
    %v2336 = vunpack.c.h.b16 %v1242
    %v2337 = vunpack.c.l.b16 %v1243
    %v2338 = vunpack.c.h.b16 %v1243
    %v2339 = vunpack.c.l.b16 %v1244
    %v2340 = vunpack.c.h.b16 %v1244
    %v2341 = vunpack.c.l.b16 %v1245
    %v2342 = vunpack.c.h.b16 %v1245
    %v2343 = vunpack.c.l.b16 %v1246
    %v2344 = vunpack.c.h.b16 %v1246
    %v2345 = vunpack.c.l.b16 %v1247
    %v2346 = vunpack.c.h.b16 %v1247
    %v2347 = vunpack.c.l.b16 %v1248
    %v2348 = vunpack.c.h.b16 %v1248
    %v2349 = vunpack.c.l.b16 %v1249
    %v2350 = vunpack.c.h.b16 %v1249
    %v2351 = vunpack.c.l.b16 %v1250
    %v2352 = vunpack.c.h.b16 %v1250
    %v2353 = vunpack.c.l.b16 %v1251
    %v2354 = vunpack.c.h.b16 %v1251
    %v2355 = vunpack.c.l.b16 %v1252
    %v2356 = vunpack.c.h.b16 %v1252
    %v2357 = vunpack.c.l.b16 %v1253
    %v2358 = vunpack.c.h.b16 %v1253
    %v2359 = vunpack.c.l.b16 %v1254
    %v2360 = vunpack.c.h.b16 %v1254
    %v2361 = vunpack.c.l.b16 %v1255
    %v2362 = vunpack.c.h.b16 %v1255
    %v2363 = vunpack.c.l.b16 %v1256
    %v2364 = vunpack.c.h.b16 %v1256
    %v2365 = vunpack.c.l.b16 %v1257
    %v2366 = vunpack.c.h.b16 %v1257
    %v2367 = vunpack.c.l.b16 %v1258
    %v2368 = vunpack.c.h.b16 %v1258
    %v2369 = vunpack.c.l.b16 %v1259
    %v2370 = vunpack.c.h.b16 %v1259
    %v2371 = vunpack.c.l.b16 %v1260
    %v2372 = vunpack.c.h.b16 %v1260
    %v2373 = vunpack.c.l.b16 %v1261
    %v2374 = vunpack.c.h.b16 %v1261
    %v2375 = vunpack.c.l.b16 %v1262
    %v2376 = vunpack.c.h.b16 %v1262
    %v2377 = vunpack.c.l.b16 %v1263
    %v2378 = vunpack.c.h.b16 %v1263
    %v2379 = vunpack.c.l.b16 %v1264
    %v2380 = vunpack.c.h.b16 %v1264
    %v2381 = vunpack.c.l.b16 %v1265
    %v2382 = vunpack.c.h.b16 %v1265
    %v2383 = vunpack.c.l.b16 %v1266
    %v2384 = vunpack.c.h.b16 %v1266
    %v2385 = vunpack.c.l.b16 %v1267
    %v2386 = vunpack.c.h.b16 %v1267
    %v2387 = vunpack.c.l.b16 %v1268
    %v2388 = vunpack.c.h.b16 %v1268
    %v2389 = vunpack.c.l.b16 %v1269
    %v2390 = vunpack.c.h.b16 %v1269
    %v2391 = vunpack.c.l.b16 %v1270
    %v2392 = vunpack.c.h.b16 %v1270
    %v2393 = vunpack.c.l.b16 %v1271
    %v2394 = vunpack.c.h.b16 %v1271
    %v2395 = vunpack.c.l.b16 %v1272
    %v2396 = vunpack.c.h.b16 %v1272
    %v2397 = vunpack.c.l.b16 %v1273
    %v2398 = vunpack.c.h.b16 %v1273
    %v2399 = vunpack.c.l.b16 %v1274
    %v2400 = vunpack.c.h.b16 %v1274
    %v2401 = vunpack.c.l.b16 %v1275
    %v2402 = vunpack.c.h.b16 %v1275
    %v2403 = vunpack.c.l.b16 %v1276
    %v2404 = vunpack.c.h.b16 %v1276
    %v2405 = vunpack.c.l.b16 %v1277
    %v2406 = vunpack.c.h.b16 %v1277
    %v2407 = vunpack.c.l.b16 %v1278
    %v2408 = vunpack.c.h.b16 %v1278
    %v2409 = vunpack.c.l.b16 %v1279
    %v2410 = vunpack.c.h.b16 %v1279
    %v2411 = vunpack.c.l.b16 %v1280
    %v2412 = vunpack.c.h.b16 %v1280
    %v2413 = vunpack.c.l.b16 %v1281
    %v2414 = vunpack.c.h.b16 %v1281
    %v2415 = vunpack.c.l.b16 %v1282
    %v2416 = vunpack.c.h.b16 %v1282
    %v2417 = vunpack.c.l.b16 %v1283
    %v2418 = vunpack.c.h.b16 %v1283
    %v2419 = vunpack.c.l.b16 %v1284
    %v2420 = vunpack.c.h.b16 %v1284
    %v2421 = vunpack.c.l.b16 %v1285
    %v2422 = vunpack.c.h.b16 %v1285
    %v2423 = vunpack.c.l.b16 %v1286
    %v2424 = vunpack.c.h.b16 %v1286
    %v2425 = vunpack.c.l.b16 %v1287
    %v2426 = vunpack.c.h.b16 %v1287
    %v2427 = vunpack.c.l.b16 %v1288
    %v2428 = vunpack.c.h.b16 %v1288
    %v2429 = vunpack.c.l.b16 %v1289
    %v2430 = vunpack.c.h.b16 %v1289
    %v2431 = vunpack.c.l.b16 %v1290
    %v2432 = vunpack.c.h.b16 %v1290
    %v2433 = vunpack.c.l.b16 %v1291
    %v2434 = vunpack.c.h.b16 %v1291
    %v2435 = vunpack.c.l.b16 %v1292
    %v2436 = vunpack.c.h.b16 %v1292
    %v2437 = vunpack.c.l.b16 %v1293
    %v2438 = vunpack.c.h.b16 %v1293
    %v2439 = vunpack.c.l.b16 %v1294
    %v2440 = vunpack.c.h.b16 %v1294
    %v2441 = vunpack.c.l.b16 %v1295
    %v2442 = vunpack.c.h.b16 %v1295
    %v2443 = vunpack.c.l.b16 %v1296
    %v2444 = vunpack.c.h.b16 %v1296
    %v2445 = vunpack.c.l.b16 %v1297
    %v2446 = vunpack.c.h.b16 %v1297
    %v2447 = vunpack.c.l.b16 %v1298
    %v2448 = vunpack.c.h.b16 %v1298
    %v2449 = vunpack.c.l.b16 %v1299
    %v2450 = vunpack.c.h.b16 %v1299
    %v2451 = vunpack.c.l.b16 %v1300
    %v2452 = vunpack.c.h.b16 %v1300
    %v2453 = vunpack.c.l.b16 %v1301
    %v2454 = vunpack.c.h.b16 %v1301
    %v2455 = vunpack.c.l.b16 %v1302
    %v2456 = vunpack.c.h.b16 %v1302
    %v2457 = vunpack.c.l.b16 %v1303
    %v2458 = vunpack.c.h.b16 %v1303
    %v2459 = vunpack.c.l.b16 %v1304
    %v2460 = vunpack.c.h.b16 %v1304
    %v2461 = vunpack.c.l.b16 %v1305
    %v2462 = vunpack.c.h.b16 %v1305
    %v2463 = vunpack.c.l.b16 %v1306
    %v2464 = vunpack.c.h.b16 %v1306
    %v2465 = vunpack.c.l.b16 %v1307
    %v2466 = vunpack.c.h.b16 %v1307
    %v2467 = vunpack.c.l.b16 %v1308
    %v2468 = vunpack.c.h.b16 %v1308
    %v2469 = vunpack.c.l.b16 %v1309
    %v2470 = vunpack.c.h.b16 %v1309
    %v2471 = vunpack.c.l.b16 %v1310
    %v2472 = vunpack.c.h.b16 %v1310
    %v2473 = vunpack.c.l.b16 %v1311
    %v2474 = vunpack.c.h.b16 %v1311
    %v2475 = vunpack.c.l.b16 %v1312
    %v2476 = vunpack.c.h.b16 %v1312
    %v2477 = vunpack.c.l.b16 %v1313
    %v2478 = vunpack.c.h.b16 %v1313
    %v2479 = vunpack.c.l.b16 %v1314
    %v2480 = vunpack.c.h.b16 %v1314
    %v2481 = vunpack.c.l.b16 %v1315
    %v2482 = vunpack.c.h.b16 %v1315
    %v2483 = vunpack.c.l.b16 %v1316
    %v2484 = vunpack.c.h.b16 %v1316
    %v2485 = vunpack.c.l.b16 %v1317
    %v2486 = vunpack.c.h.b16 %v1317
    %v2487 = vunpack.c.l.b16 %v1318
    %v2488 = vunpack.c.h.b16 %v1318
    %v2489 = vunpack.c.l.b16 %v1319
    %v2490 = vunpack.c.h.b16 %v1319
    %v2491 = vunpack.c.l.b16 %v1320
    %v2492 = vunpack.c.h.b16 %v1320
    %v2493 = vunpack.c.l.b16 %v1321
    %v2494 = vunpack.c.h.b16 %v1321
    %v2495 = vunpack.c.l.b16 %v1322
    %v2496 = vunpack.c.h.b16 %v1322
    %v2497 = vunpack.c.l.b16 %v1323
    %v2498 = vunpack.c.h.b16 %v1323
    %v2499 = vunpack.c.l.b16 %v1324
    %v2500 = vunpack.c.h.b16 %v1324
    %v2501 = vunpack.c.l.b16 %v1325
    %v2502 = vunpack.c.h.b16 %v1325
    %v2503 = vunpack.c.l.b16 %v1326
    %v2504 = vunpack.c.h.b16 %v1326
    %v2505 = vunpack.c.l.b16 %v1327
    %v2506 = vunpack.c.h.b16 %v1327
    %v2507 = vunpack.c.l.b16 %v1328
    %v2508 = vunpack.c.h.b16 %v1328
    %v2509 = vunpack.c.l.b16 %v1329
    %v2510 = vunpack.c.h.b16 %v1329
    %v2511 = vunpack.c.l.b16 %v1330
    %v2512 = vunpack.c.h.b16 %v1330
    %v2513 = vunpack.c.l.b16 %v1331
    %v2514 = vunpack.c.h.b16 %v1331
    %v2515 = vunpack.c.l.b16 %v1332
    %v2516 = vunpack.c.h.b16 %v1332
    %v2517 = vunpack.c.l.b16 %v1333
    %v2518 = vunpack.c.h.b16 %v1333
    %v2519 = vunpack.c.l.b16 %v1334
    %v2520 = vunpack.c.h.b16 %v1334
    %v2521 = vunpack.c.l.b16 %v1335
    %v2522 = vunpack.c.h.b16 %v1335
    %v2523 = vunpack.c.l.b16 %v1336
    %v2524 = vunpack.c.h.b16 %v1336
    %v2525 = vunpack.c.l.b16 %v1337
    %v2526 = vunpack.c.h.b16 %v1337
    %v2527 = vunpack.c.l.b16 %v1338
    %v2528 = vunpack.c.h.b16 %v1338
    %v2529 = vunpack.c.l.b16 %v1339
    %v2530 = vunpack.c.h.b16 %v1339
    %v2531 = vunpack.c.l.b16 %v1340
    %v2532 = vunpack.c.h.b16 %v1340
    %v2533 = vunpack.c.l.b16 %v1341
    %v2534 = vunpack.c.h.b16 %v1341
    %v2535 = vunpack.c.l.b16 %v1342
    %v2536 = vunpack.c.h.b16 %v1342
    %v2537 = vunpack.c.l.b16 %v1343
    %v2538 = vunpack.c.h.b16 %v1343
    %v2539 = vunpack.c.l.b16 %v1344
    %v2540 = vunpack.c.h.b16 %v1344
    %v2541 = vunpack.c.l.b16 %v1345
    %v2542 = vunpack.c.h.b16 %v1345
    %v2543 = vunpack.c.l.b16 %v1346
    %v2544 = vunpack.c.h.b16 %v1346
    %v2545 = vunpack.c.l.b16 %v1347
    %v2546 = vunpack.c.h.b16 %v1347
    %v2547 = vunpack.c.l.b16 %v1348
    %v2548 = vunpack.c.h.b16 %v1348
    %v2549 = vunpack.c.l.b16 %v1349
    %v2550 = vunpack.c.h.b16 %v1349
    %v2551 = vunpack.c.l.b16 %v1350
    %v2552 = vunpack.c.h.b16 %v1350
    %v2553 = vunpack.c.l.b16 %v1351
    %v2554 = vunpack.c.h.b16 %v1351
    %v2555 = vunpack.c.l.b16 %v1352
    %v2556 = vunpack.c.h.b16 %v1352
    %v2557 = vunpack.c.l.b16 %v1353
    %v2558 = vunpack.c.h.b16 %v1353
    %v2559 = vunpack.c.l.b16 %v1354
    %v2560 = vunpack.c.h.b16 %v1354
    %v2561 = vunpack.c.l.b16 %v1355
    %v2562 = vunpack.c.h.b16 %v1355
    %v2563 = vunpack.c.l.b16 %v1356
    %v2564 = vunpack.c.h.b16 %v1356
    %v2565 = vunpack.c.l.b16 %v1357
    %v2566 = vunpack.c.h.b16 %v1357
    %v2567 = vunpack.c.l.b16 %v1358
    %v2568 = vunpack.c.h.b16 %v1358
    %v2569 = vunpack.c.l.b16 %v1359
    %v2570 = vunpack.c.h.b16 %v1359
    %v2571 = vunpack.c.l.b16 %v1360
    %v2572 = vunpack.c.h.b16 %v1360
    %v2573 = vunpack.c.l.b16 %v1361
    %v2574 = vunpack.c.h.b16 %v1361
    %v2575 = vunpack.c.l.b16 %v1362
    %v2576 = vunpack.c.h.b16 %v1362
    %v2577 = vunpack.c.l.b16 %v1363
    %v2578 = vunpack.c.h.b16 %v1363
    %v2579 = vunpack.c.l.b16 %v1364
    %v2580 = vunpack.c.h.b16 %v1364
    %v2581 = vunpack.c.l.b16 %v1365
    %v2582 = vunpack.c.h.b16 %v1365
    %v2583 = vunpack.c.l.b16 %v1366
    %v2584 = vunpack.c.h.b16 %v1366
    %v2585 = vunpack.c.l.b16 %v1367
    %v2586 = vunpack.c.h.b16 %v1367
    %v2587 = vunpack.c.l.b16 %v1368
    %v2588 = vunpack.c.h.b16 %v1368
    %v2589 = vunpack.c.l.b16 %v1369
    %v2590 = vunpack.c.h.b16 %v1369
    %v2591 = vunpack.c.l.b16 %v1370
    %v2592 = vunpack.c.h.b16 %v1370
    %v2593 = vunpack.c.l.b16 %v1371
    %v2594 = vunpack.c.h.b16 %v1371
    %v2595 = vunpack.c.l.b16 %v1372
    %v2596 = vunpack.c.h.b16 %v1372
    %v2597 = vunpack.c.l.b16 %v1373
    %v2598 = vunpack.c.h.b16 %v1373
    %v2599 = vunpack.c.l.b16 %v1374
    %v2600 = vunpack.c.h.b16 %v1374
    %v2601 = vunpack.c.l.b16 %v1375
    %v2602 = vunpack.c.h.b16 %v1375
    %v2603 = vunpack.c.l.b16 %v1376
    %v2604 = vunpack.c.h.b16 %v1376
    %v2605 = vunpack.c.l.b16 %v1377
    %v2606 = vunpack.c.h.b16 %v1377
    %v2607 = vunpack.c.l.b16 %v1378
    %v2608 = vunpack.c.h.b16 %v1378
    %v2609 = vunpack.c.l.b16 %v1379
    %v2610 = vunpack.c.h.b16 %v1379
    %v2611 = vunpack.c.l.b16 %v1380
    %v2612 = vunpack.c.h.b16 %v1380
    %v2613 = vunpack.c.l.b16 %v1381
    %v2614 = vunpack.c.h.b16 %v1381
    %v2615 = vunpack.c.l.b16 %v1382
    %v2616 = vunpack.c.h.b16 %v1382
    %v2617 = vunpack.c.l.b16 %v1383
    %v2618 = vunpack.c.h.b16 %v1383
    %v2619 = vunpack.c.l.b16 %v1384
    %v2620 = vunpack.c.h.b16 %v1384
    %v2621 = vunpack.c.l.b16 %v1385
    %v2622 = vunpack.c.h.b16 %v1385
    %v2623 = vunpack.c.l.b16 %v1386
    %v2624 = vunpack.c.h.b16 %v1386
    %v2625 = vunpack.c.l.b16 %v1387
    %v2626 = vunpack.c.h.b16 %v1387
    %v2627 = vunpack.c.l.b16 %v1388
    %v2628 = vunpack.c.h.b16 %v1388
    %v2629 = vunpack.c.l.b16 %v1389
    %v2630 = vunpack.c.h.b16 %v1389
    %v2631 = vunpack.c.l.b16 %v1390
    %v2632 = vunpack.c.h.b16 %v1390
    %v2633 = vunpack.c.l.b16 %v1391
    %v2634 = vunpack.c.h.b16 %v1391
    %v2635 = vunpack.c.l.b16 %v1392
    %v2636 = vunpack.c.h.b16 %v1392
    %v2637 = vunpack.c.l.b16 %v1393
    %v2638 = vunpack.c.h.b16 %v1393
    %v2639 = vunpack.c.l.b16 %v1394
    %v2640 = vunpack.c.h.b16 %v1394
    %v2641 = vunpack.c.l.b16 %v1395
    %v2642 = vunpack.c.h.b16 %v1395
    %v2643 = vunpack.c.l.b16 %v1396
    %v2644 = vunpack.c.h.b16 %v1396
    %v2645 = vunpack.c.l.b16 %v1397
    %v2646 = vunpack.c.h.b16 %v1397
    %v2647 = vunpack.c.l.b16 %v1398
    %v2648 = vunpack.c.h.b16 %v1398
    %v2649 = vunpack.c.l.b16 %v1399
    %v2650 = vunpack.c.h.b16 %v1399
    %v2651 = vunpack.c.l.b16 %v1400
    %v2652 = vunpack.c.h.b16 %v1400
    %v2653 = vunpack.c.l.b16 %v1401
    %v2654 = vunpack.c.h.b16 %v1401
    %v2655 = vunpack.c.l.b16 %v1402
    %v2656 = vunpack.c.h.b16 %v1402
    %v2657 = vunpack.c.l.b16 %v1403
    %v2658 = vunpack.c.h.b16 %v1403
    %v2659 = vunpack.c.l.b16 %v1404
    %v2660 = vunpack.c.h.b16 %v1404
    %v2661 = vunpack.c.l.b16 %v1405
    %v2662 = vunpack.c.h.b16 %v1405
    %v2663 = vunpack.c.l.b16 %v1406
    %v2664 = vunpack.c.h.b16 %v1406
    %v2665 = vunpack.c.l.b16 %v1407
    %v2666 = vunpack.c.h.b16 %v1407
    %v2667 = vunpack.c.l.b16 %v1408
    %v2668 = vunpack.c.h.b16 %v1408
    %v2669 = vunpack.c.l.b16 %v1409
    %v2670 = vunpack.c.h.b16 %v1409
    %v2671 = vunpack.c.l.b16 %v1410
    %v2672 = vunpack.c.h.b16 %v1410
    %v2673 = vunpack.c.l.b16 %v1411
    %v2674 = vunpack.c.h.b16 %v1411
    %v2675 = vunpack.c.l.b16 %v1412
    %v2676 = vunpack.c.h.b16 %v1412
    %v2677 = vunpack.c.l.b16 %v1413
    %v2678 = vunpack.c.h.b16 %v1413
    %v2679 = vunpack.c.l.b16 %v1414
    %v2680 = vunpack.c.h.b16 %v1414
    %v2681 = vunpack.c.l.b16 %v1415
    %v2682 = vunpack.c.h.b16 %v1415
    %v2683 = vunpack.c.l.b16 %v1416
    %v2684 = vunpack.c.h.b16 %v1416
    %v2685 = vunpack.c.l.b16 %v1417
    %v2686 = vunpack.c.h.b16 %v1417
    %v2687 = vunpack.c.l.b16 %v1418
    %v2688 = vunpack.c.h.b16 %v1418
    %v2689 = vunpack.c.l.b16 %v1419
    %v2690 = vunpack.c.h.b16 %v1419
    %v2691 = vunpack.c.l.b16 %v1420
    %v2692 = vunpack.c.h.b16 %v1420
    %v2693 = vunpack.c.l.b16 %v1421
    %v2694 = vunpack.c.h.b16 %v1421
    %v2695 = vunpack.c.l.b16 %v1422
    %v2696 = vunpack.c.h.b16 %v1422
    %v2697 = vunpack.c.l.b16 %v1423
    %v2698 = vunpack.c.h.b16 %v1423
    %v2699 = vunpack.c.l.b16 %v1424
    %v2700 = vunpack.c.h.b16 %v1424
    %v2701 = vunpack.c.l.b16 %v1425
    %v2702 = vunpack.c.h.b16 %v1425
    %v2703 = vunpack.c.l.b16 %v1426
    %v2704 = vunpack.c.h.b16 %v1426
    %v2705 = vunpack.c.l.b16 %v1427
    %v2706 = vunpack.c.h.b16 %v1427
    %v2707 = vunpack.c.l.b16 %v1428
    %v2708 = vunpack.c.h.b16 %v1428
    %v2709 = vunpack.c.l.b16 %v1429
    %v2710 = vunpack.c.h.b16 %v1429
    %v2711 = vunpack.c.l.b16 %v1430
    %v2712 = vunpack.c.h.b16 %v1430
    %v2713 = vunpack.c.l.b16 %v1431
    %v2714 = vunpack.c.h.b16 %v1431
    %v2715 = vunpack.c.l.b16 %v1432
    %v2716 = vunpack.c.h.b16 %v1432
    %v2717 = vunpack.c.l.b16 %v1433
    %v2718 = vunpack.c.h.b16 %v1433
    %v2719 = vunpack.c.l.b16 %v1434
    %v2720 = vunpack.c.h.b16 %v1434
    %v2721 = vunpack.c.l.b16 %v1435
    %v2722 = vunpack.c.h.b16 %v1435
    %v2723 = vunpack.c.l.b16 %v1436
    %v2724 = vunpack.c.h.b16 %v1436
    %v2725 = vunpack.c.l.b16 %v1437
    %v2726 = vunpack.c.h.b16 %v1437
    %v2727 = vunpack.c.l.b16 %v1438
    %v2728 = vunpack.c.h.b16 %v1438
    %v2729 = vunpack.c.l.b16 %v1439
    %v2730 = vunpack.c.h.b16 %v1439
    %v2731 = vunpack.c.l.b16 %v1440
    %v2732 = vunpack.c.h.b16 %v1440
    %v2733 = vunpack.c.l.b16 %v1441
    %v2734 = vunpack.c.h.b16 %v1441
    %v2735 = vunpack.c.l.b16 %v1442
    %v2736 = vunpack.c.h.b16 %v1442
    %v2737 = vunpack.c.l.b16 %v1443
    %v2738 = vunpack.c.h.b16 %v1443
    %v2739 = vunpack.c.l.b16 %v1444
    %v2740 = vunpack.c.h.b16 %v1444
    %v2741 = vunpack.c.l.b16 %v1445
    %v2742 = vunpack.c.h.b16 %v1445
    %v2743 = vunpack.c.l.b16 %v1446
    %v2744 = vunpack.c.h.b16 %v1446
    %v2745 = vunpack.c.l.b16 %v1447
    %v2746 = vunpack.c.h.b16 %v1447
    %v2747 = vunpack.c.l.b16 %v1448
    %v2748 = vunpack.c.h.b16 %v1448
    %v2749 = vunpack.c.l.b16 %v1449
    %v2750 = vunpack.c.h.b16 %v1449
    %v2751 = vunpack.c.l.b16 %v1450
    %v2752 = vunpack.c.h.b16 %v1450
    %v2753 = vunpack.c.l.b16 %v1451
    %v2754 = vunpack.c.h.b16 %v1451
    %v2755 = vunpack.c.l.b16 %v1452
    %v2756 = vunpack.c.h.b16 %v1452
    %v2757 = vunpack.c.l.b16 %v1453
    %v2758 = vunpack.c.h.b16 %v1453
    %v2759 = vunpack.c.l.b16 %v1454
    %v2760 = vunpack.c.h.b16 %v1454
    %v2761 = vunpack.c.l.b16 %v1455
    %v2762 = vunpack.c.h.b16 %v1455
    %v2763 = vunpack.c.l.b16 %v1456
    %v2764 = vunpack.c.h.b16 %v1456
    %v2765 = vunpack.c.l.b16 %v1457
    %v2766 = vunpack.c.h.b16 %v1457
    %v2767 = vunpack.c.l.b16 %v1458
    %v2768 = vunpack.c.h.b16 %v1458
    %v2769 = vunpack.c.l.b16 %v1459
    %v2770 = vunpack.c.h.b16 %v1459
    %v2771 = vunpack.c.l.b16 %v1460
    %v2772 = vunpack.c.h.b16 %v1460
    %v2773 = vunpack.c.l.b16 %v1461
    %v2774 = vunpack.c.h.b16 %v1461
    %v2775 = vunpack.c.l.b16 %v1462
    %v2776 = vunpack.c.h.b16 %v1462
    %v2777 = vunpack.c.l.b16 %v1463
    %v2778 = vunpack.c.h.b16 %v1463
    %v2779 = vunpack.c.l.b16 %v1464
    %v2780 = vunpack.c.h.b16 %v1464
    %v2781 = vunpack.c.l.b16 %v1465
    %v2782 = vunpack.c.h.b16 %v1465
    %v2783 = vunpack.c.l.b16 %v1466
    %v2784 = vunpack.c.h.b16 %v1466
    %v2785 = vunpack.c.l.b16 %v1467
    %v2786 = vunpack.c.h.b16 %v1467
    %v2787 = vunpack.c.l.b16 %v1468
    %v2788 = vunpack.c.h.b16 %v1468
    %v2789 = vunpack.c.l.b16 %v1469
    %v2790 = vunpack.c.h.b16 %v1469
    %v2791 = vunpack.c.l.b16 %v1470
    %v2792 = vunpack.c.h.b16 %v1470
    %v2793 = vunpack.c.l.b16 %v1471
    %v2794 = vunpack.c.h.b16 %v1471
    %v2795 = vunpack.c.l.b16 %v1472
    %v2796 = vunpack.c.h.b16 %v1472
    %v2797 = vunpack.c.l.b16 %v1473
    %v2798 = vunpack.c.h.b16 %v1473
    %v2799 = vunpack.c.l.b16 %v1474
    %v2800 = vunpack.c.h.b16 %v1474
    %v2801 = vunpack.c.l.b16 %v1475
    %v2802 = vunpack.c.h.b16 %v1475
    %v2803 = vunpack.c.l.b16 %v1476
    %v2804 = vunpack.c.h.b16 %v1476
    %v2805 = vunpack.c.l.b16 %v1477
    %v2806 = vunpack.c.h.b16 %v1477
    %v2807 = vunpack.c.l.b16 %v1478
    %v2808 = vunpack.c.h.b16 %v1478
    %v2809 = vunpack.c.l.b16 %v1479
    %v2810 = vunpack.c.h.b16 %v1479
    %v2811 = vunpack.c.l.b16 %v1480
    %v2812 = vunpack.c.h.b16 %v1480
    %v2813 = vunpack.c.l.b16 %v1481
    %v2814 = vunpack.c.h.b16 %v1481
    %v2815 = vunpack.c.l.b16 %v1482
    %v2816 = vunpack.c.h.b16 %v1482
    %v2817 = vunpack.c.l.b16 %v1483
    %v2818 = vunpack.c.h.b16 %v1483
    %v2819 = vunpack.c.l.b16 %v1484
    %v2820 = vunpack.c.h.b16 %v1484
    %v2821 = vunpack.c.l.b16 %v1485
    %v2822 = vunpack.c.h.b16 %v1485
    %v2823 = vunpack.c.l.b16 %v1486
    %v2824 = vunpack.c.h.b16 %v1486
    %v2825 = vunpack.c.l.b16 %v1487
    %v2826 = vunpack.c.h.b16 %v1487
    %v2827 = vunpack.c.l.b16 %v1488
    %v2828 = vunpack.c.h.b16 %v1488
    %v2829 = vunpack.c.l.b16 %v1489
    %v2830 = vunpack.c.h.b16 %v1489
    %v2831 = vunpack.c.l.b16 %v1490
    %v2832 = vunpack.c.h.b16 %v1490
    %v2833 = vunpack.c.l.b16 %v1491
    %v2834 = vunpack.c.h.b16 %v1491
    %v2835 = vunpack.c.l.b16 %v1492
    %v2836 = vunpack.c.h.b16 %v1492
    %v2837 = vunpack.c.l.b16 %v1493
    %v2838 = vunpack.c.h.b16 %v1493
    %v2839 = vunpack.c.l.b16 %v1494
    %v2840 = vunpack.c.h.b16 %v1494
    %v2841 = vunpack.c.l.b16 %v1495
    %v2842 = vunpack.c.h.b16 %v1495
    %v2843 = vunpack.c.l.b16 %v1496
    %v2844 = vunpack.c.h.b16 %v1496
    %v2845 = vunpack.c.l.b16 %v1497
    %v2846 = vunpack.c.h.b16 %v1497
    %v2847 = vunpack.c.l.b16 %v1498
    %v2848 = vunpack.c.h.b16 %v1498
    %v2849 = vunpack.c.l.b16 %v1499
    %v2850 = vunpack.c.h.b16 %v1499
    %v2851 = vunpack.c.l.b16 %v1500
    %v2852 = vunpack.c.h.b16 %v1500
    %v2853 = vunpack.c.l.b16 %v1501
    %v2854 = vunpack.c.h.b16 %v1501
    %v2855 = vunpack.c.l.b16 %v1502
    %v2856 = vunpack.c.h.b16 %v1502
    %v2857 = vunpack.c.l.b16 %v1503
    %v2858 = vunpack.c.h.b16 %v1503
    %v2859 = vunpack.c.l.b16 %v1504
    %v2860 = vunpack.c.h.b16 %v1504
    %v2861 = vunpack.c.l.b16 %v1505
    %v2862 = vunpack.c.h.b16 %v1505
    %v2863 = vunpack.c.l.b16 %v1506
    %v2864 = vunpack.c.h.b16 %v1506
    %v2865 = vunpack.c.l.b16 %v1507
    %v2866 = vunpack.c.h.b16 %v1507
    %v2867 = vunpack.c.l.b16 %v1508
    %v2868 = vunpack.c.h.b16 %v1508
    %v2869 = vunpack.c.l.b16 %v1509
    %v2870 = vunpack.c.h.b16 %v1509
    %v2871 = vunpack.c.l.b16 %v1510
    %v2872 = vunpack.c.h.b16 %v1510
    %v2873 = vunpack.c.l.b16 %v1511
    %v2874 = vunpack.c.h.b16 %v1511
    %v2875 = vunpack.c.l.b16 %v1512
    %v2876 = vunpack.c.h.b16 %v1512
    %v2877 = vunpack.c.l.b16 %v1513
    %v2878 = vunpack.c.h.b16 %v1513
    %v2879 = vunpack.c.l.b16 %v1514
    %v2880 = vunpack.c.h.b16 %v1514
    %v2881 = vunpack.c.l.b16 %v1515
    %v2882 = vunpack.c.h.b16 %v1515
    %v2883 = vunpack.c.l.b16 %v1516
    %v2884 = vunpack.c.h.b16 %v1516
    %v2885 = vunpack.c.l.b16 %v1517
    %v2886 = vunpack.c.h.b16 %v1517
    %v2887 = vunpack.c.l.b16 %v1518
    %v2888 = vunpack.c.h.b16 %v1518
    %v2889 = vunpack.c.l.b16 %v1519
    %v2890 = vunpack.c.h.b16 %v1519
    %v2891 = vunpack.c.l.b16 %v1520
    %v2892 = vunpack.c.h.b16 %v1520
    %v2893 = vunpack.c.l.b16 %v1521
    %v2894 = vunpack.c.h.b16 %v1521
    %v2895 = vunpack.c.l.b16 %v1522
    %v2896 = vunpack.c.h.b16 %v1522
    %v2897 = vunpack.c.l.b16 %v1523
    %v2898 = vunpack.c.h.b16 %v1523
    %v2899 = vunpack.c.l.b16 %v1524
    %v2900 = vunpack.c.h.b16 %v1524
    %v2901 = vunpack.c.l.b16 %v1525
    %v2902 = vunpack.c.h.b16 %v1525
    %v2903 = vunpack.c.l.b16 %v1526
    %v2904 = vunpack.c.h.b16 %v1526
    %v2905 = vunpack.c.l.b16 %v1527
    %v2906 = vunpack.c.h.b16 %v1527
    %v2907 = vunpack.c.l.b16 %v1528
    %v2908 = vunpack.c.h.b16 %v1528
    %v2909 = vunpack.c.l.b16 %v1529
    %v2910 = vunpack.c.h.b16 %v1529
    %v2911 = vunpack.c.l.b16 %v1530
    %v2912 = vunpack.c.h.b16 %v1530
    %v2913 = vunpack.c.l.b16 %v1531
    %v2914 = vunpack.c.h.b16 %v1531
    %v2915 = vunpack.c.l.b16 %v1532
    %v2916 = vunpack.c.h.b16 %v1532
    %v2917 = vunpack.c.l.b16 %v1533
    %v2918 = vunpack.c.h.b16 %v1533
    %v2919 = vunpack.c.l.b16 %v1534
    %v2920 = vunpack.c.h.b16 %v1534
    %v2921 = vpack.c.b16 %v2033, %v2025
    %v2922 = vpack.c.b16 %v2034, %v2026
    %v2923 = vpack.c.b16 %v2035, %v2027
    %v2924 = vpack.c.b16 %v2036, %v2028
    %v2925 = vpack.c.b16 %v2037, %v2029
    %v2926 = vpack.c.b16 %v2038, %v2030
    %v2927 = vpack.c.b16 %v2039, %v2031
    %v2928 = vpack.c.b16 %v2040, %v2032
    %v2929 = vpack.c.b16 %v2049, %v2041
    %v2930 = vpack.c.b16 %v2050, %v2042
    %v2931 = vpack.c.b16 %v2051, %v2043
    %v2932 = vpack.c.b16 %v2052, %v2044
    %v2933 = vpack.c.b16 %v2053, %v2045
    %v2934 = vpack.c.b16 %v2054, %v2046
    %v2935 = vpack.c.b16 %v2055, %v2047
    %v2936 = vpack.c.b16 %v2056, %v2048
    %v2937 = vpack.c.b16 %v2065, %v2057
    %v2938 = vpack.c.b16 %v2066, %v2058
    %v2939 = vpack.c.b16 %v2067, %v2059
    %v2940 = vpack.c.b16 %v2068, %v2060
    %v2941 = vpack.c.b16 %v2069, %v2061
    %v2942 = vpack.c.b16 %v2070, %v2062
    %v2943 = vpack.c.b16 %v2071, %v2063
    %v2944 = vpack.c.b16 %v2072, %v2064
    %v2945 = vpack.c.b16 %v2081, %v2073
    %v2946 = vpack.c.b16 %v2082, %v2074
    %v2947 = vpack.c.b16 %v2083, %v2075
    %v2948 = vpack.c.b16 %v2084, %v2076
    %v2949 = vpack.c.b16 %v2085, %v2077
    %v2950 = vpack.c.b16 %v2086, %v2078
    %v2951 = vpack.c.b16 %v2087, %v2079
    %v2952 = vpack.c.b16 %v2088, %v2080
    %v2953 = vpack.c.b16 %v2097, %v2089
    %v2954 = vpack.c.b16 %v2098, %v2090
    %v2955 = vpack.c.b16 %v2099, %v2091
    %v2956 = vpack.c.b16 %v2100, %v2092
    %v2957 = vpack.c.b16 %v2101, %v2093
    %v2958 = vpack.c.b16 %v2102, %v2094
    %v2959 = vpack.c.b16 %v2103, %v2095
    %v2960 = vpack.c.b16 %v2104, %v2096
    %v2961 = vpack.c.b16 %v2113, %v2105
    %v2962 = vpack.c.b16 %v2114, %v2106
    %v2963 = vpack.c.b16 %v2115, %v2107
    %v2964 = vpack.c.b16 %v2116, %v2108
    %v2965 = vpack.c.b16 %v2117, %v2109
    %v2966 = vpack.c.b16 %v2118, %v2110
    %v2967 = vpack.c.b16 %v2119, %v2111
    %v2968 = vpack.c.b16 %v2120, %v2112
    %v2969 = vpack.c.b16 %v2129, %v2121
    %v2970 = vpack.c.b16 %v2130, %v2122
    %v2971 = vpack.c.b16 %v2131, %v2123
    %v2972 = vpack.c.b16 %v2132, %v2124
    %v2973 = vpack.c.b16 %v2133, %v2125
    %v2974 = vpack.c.b16 %v2134, %v2126
    %v2975 = vpack.c.b16 %v2135, %v2127
    %v2976 = vpack.c.b16 %v2136, %v2128
    %v2977 = vpack.c.b16 %v2145, %v2137
    %v2978 = vpack.c.b16 %v2146, %v2138
    %v2979 = vpack.c.b16 %v2147, %v2139
    %v2980 = vpack.c.b16 %v2148, %v2140
    %v2981 = vpack.c.b16 %v2149, %v2141
    %v2982 = vpack.c.b16 %v2150, %v2142
    %v2983 = vpack.c.b16 %v2151, %v2143
    %v2984 = vpack.c.b16 %v2152, %v2144
    %v2985 = vpack.c.b16 %v2161, %v2153
    %v2986 = vpack.c.b16 %v2162, %v2154
    %v2987 = vpack.c.b16 %v2163, %v2155
    %v2988 = vpack.c.b16 %v2164, %v2156
    %v2989 = vpack.c.b16 %v2165, %v2157
    %v2990 = vpack.c.b16 %v2166, %v2158
    %v2991 = vpack.c.b16 %v2167, %v2159
    %v2992 = vpack.c.b16 %v2168, %v2160
    %v2993 = vpack.c.b16 %v2177, %v2169
    %v2994 = vpack.c.b16 %v2178, %v2170
    %v2995 = vpack.c.b16 %v2179, %v2171
    %v2996 = vpack.c.b16 %v2180, %v2172
    %v2997 = vpack.c.b16 %v2181, %v2173
    %v2998 = vpack.c.b16 %v2182, %v2174
    %v2999 = vpack.c.b16 %v2183, %v2175
    %v3000 = vpack.c.b16 %v2184, %v2176
    %v3001 = vpack.c.b16 %v2193, %v2185
    %v3002 = vpack.c.b16 %v2194, %v2186
    %v3003 = vpack.c.b16 %v2195, %v2187
    %v3004 = vpack.c.b16 %v2196, %v2188
    %v3005 = vpack.c.b16 %v2197, %v2189
    %v3006 = vpack.c.b16 %v2198, %v2190
    %v3007 = vpack.c.b16 %v2199, %v2191
    %v3008 = vpack.c.b16 %v2200, %v2192
    %v3009 = vpack.c.b16 %v2209, %v2201
    %v3010 = vpack.c.b16 %v2210, %v2202
    %v3011 = vpack.c.b16 %v2211, %v2203
    %v3012 = vpack.c.b16 %v2212, %v2204
    %v3013 = vpack.c.b16 %v2213, %v2205
    %v3014 = vpack.c.b16 %v2214, %v2206
    %v3015 = vpack.c.b16 %v2215, %v2207
    %v3016 = vpack.c.b16 %v2216, %v2208
    %v3017 = vpack.c.b16 %v2225, %v2217
    %v3018 = vpack.c.b16 %v2226, %v2218
    %v3019 = vpack.c.b16 %v2227, %v2219
    %v3020 = vpack.c.b16 %v2228, %v2220
    %v3021 = vpack.c.b16 %v2229, %v2221
    %v3022 = vpack.c.b16 %v2230, %v2222
    %v3023 = vpack.c.b16 %v2231, %v2223
    %v3024 = vpack.c.b16 %v2232, %v2224
    %v3025 = vpack.c.b16 %v2241, %v2233
    %v3026 = vpack.c.b16 %v2242, %v2234
    %v3027 = vpack.c.b16 %v2243, %v2235
    %v3028 = vpack.c.b16 %v2244, %v2236
    %v3029 = vpack.c.b16 %v2245, %v2237
    %v3030 = vpack.c.b16 %v2246, %v2238
    %v3031 = vpack.c.b16 %v2247, %v2239
    %v3032 = vpack.c.b16 %v2248, %v2240
    %v3033 = vpack.c.b16 %v2257, %v2249
    %v3034 = vpack.c.b16 %v2258, %v2250
    %v3035 = vpack.c.b16 %v2259, %v2251
    %v3036 = vpack.c.b16 %v2260, %v2252
    %v3037 = vpack.c.b16 %v2261, %v2253
    %v3038 = vpack.c.b16 %v2262, %v2254
    %v3039 = vpack.c.b16 %v2263, %v2255
    %v3040 = vpack.c.b16 %v2264, %v2256
    %v3041 = vpack.c.b16 %v2273, %v2265
    %v3042 = vpack.c.b16 %v2274, %v2266
    %v3043 = vpack.c.b16 %v2275, %v2267
    %v3044 = vpack.c.b16 %v2276, %v2268
    %v3045 = vpack.c.b16 %v2277, %v2269
    %v3046 = vpack.c.b16 %v2278, %v2270
    %v3047 = vpack.c.b16 %v2279, %v2271
    %v3048 = vpack.c.b16 %v2280, %v2272
    %v3049 = vpack.c.b16 %v2289, %v2281
    %v3050 = vpack.c.b16 %v2290, %v2282
    %v3051 = vpack.c.b16 %v2291, %v2283
    %v3052 = vpack.c.b16 %v2292, %v2284
    %v3053 = vpack.c.b16 %v2293, %v2285
    %v3054 = vpack.c.b16 %v2294, %v2286
    %v3055 = vpack.c.b16 %v2295, %v2287
    %v3056 = vpack.c.b16 %v2296, %v2288
    %v3057 = vpack.c.b16 %v2305, %v2297
    %v3058 = vpack.c.b16 %v2306, %v2298
    %v3059 = vpack.c.b16 %v2307, %v2299
    %v3060 = vpack.c.b16 %v2308, %v2300
    %v3061 = vpack.c.b16 %v2309, %v2301
    %v3062 = vpack.c.b16 %v2310, %v2302
    %v3063 = vpack.c.b16 %v2311, %v2303
    %v3064 = vpack.c.b16 %v2312, %v2304
    %v3065 = vpack.c.b16 %v2321, %v2313
    %v3066 = vpack.c.b16 %v2322, %v2314
    %v3067 = vpack.c.b16 %v2323, %v2315
    %v3068 = vpack.c.b16 %v2324, %v2316
    %v3069 = vpack.c.b16 %v2325, %v2317
    %v3070 = vpack.c.b16 %v2326, %v2318
    %v3071 = vpack.c.b16 %v2327, %v2319
    %v3072 = vpack.c.b16 %v2328, %v2320
    %v3073 = vpack.c.b16 %v2337, %v2329
    %v3074 = vpack.c.b16 %v2338, %v2330
    %v3075 = vpack.c.b16 %v2339, %v2331
    %v3076 = vpack.c.b16 %v2340, %v2332
    %v3077 = vpack.c.b16 %v2341, %v2333
    %v3078 = vpack.c.b16 %v2342, %v2334
    %v3079 = vpack.c.b16 %v2343, %v2335
    %v3080 = vpack.c.b16 %v2344, %v2336
    %v3081 = vpack.c.b16 %v2353, %v2345
    %v3082 = vpack.c.b16 %v2354, %v2346
    %v3083 = vpack.c.b16 %v2355, %v2347
    %v3084 = vpack.c.b16 %v2356, %v2348
    %v3085 = vpack.c.b16 %v2357, %v2349
    %v3086 = vpack.c.b16 %v2358, %v2350
    %v3087 = vpack.c.b16 %v2359, %v2351
    %v3088 = vpack.c.b16 %v2360, %v2352
    %v3089 = vpack.c.b16 %v2369, %v2361
    %v3090 = vpack.c.b16 %v2370, %v2362
    %v3091 = vpack.c.b16 %v2371, %v2363
    %v3092 = vpack.c.b16 %v2372, %v2364
    %v3093 = vpack.c.b16 %v2373, %v2365
    %v3094 = vpack.c.b16 %v2374, %v2366
    %v3095 = vpack.c.b16 %v2375, %v2367
    %v3096 = vpack.c.b16 %v2376, %v2368
    %v3097 = vpack.c.b16 %v2385, %v2377
    %v3098 = vpack.c.b16 %v2386, %v2378
    %v3099 = vpack.c.b16 %v2387, %v2379
    %v3100 = vpack.c.b16 %v2388, %v2380
    %v3101 = vpack.c.b16 %v2389, %v2381
    %v3102 = vpack.c.b16 %v2390, %v2382
    %v3103 = vpack.c.b16 %v2391, %v2383
    %v3104 = vpack.c.b16 %v2392, %v2384
    %v3105 = vpack.c.b16 %v2401, %v2393
    %v3106 = vpack.c.b16 %v2402, %v2394
    %v3107 = vpack.c.b16 %v2403, %v2395
    %v3108 = vpack.c.b16 %v2404, %v2396
    %v3109 = vpack.c.b16 %v2405, %v2397
    %v3110 = vpack.c.b16 %v2406, %v2398
    %v3111 = vpack.c.b16 %v2407, %v2399
    %v3112 = vpack.c.b16 %v2408, %v2400
    %v3113 = vpack.c.b16 %v2417, %v2409
    %v3114 = vpack.c.b16 %v2418, %v2410
    %v3115 = vpack.c.b16 %v2419, %v2411
    %v3116 = vpack.c.b16 %v2420, %v2412
    %v3117 = vpack.c.b16 %v2421, %v2413
    %v3118 = vpack.c.b16 %v2422, %v2414
    %v3119 = vpack.c.b16 %v2423, %v2415
    %v3120 = vpack.c.b16 %v2424, %v2416
    %v3121 = vpack.c.b16 %v2433, %v2425
    %v3122 = vpack.c.b16 %v2434, %v2426
    %v3123 = vpack.c.b16 %v2435, %v2427
    %v3124 = vpack.c.b16 %v2436, %v2428
    %v3125 = vpack.c.b16 %v2437, %v2429
    %v3126 = vpack.c.b16 %v2438, %v2430
    %v3127 = vpack.c.b16 %v2439, %v2431
    %v3128 = vpack.c.b16 %v2440, %v2432
    %v3129 = vpack.c.b16 %v2449, %v2441
    %v3130 = vpack.c.b16 %v2450, %v2442
    %v3131 = vpack.c.b16 %v2451, %v2443
    %v3132 = vpack.c.b16 %v2452, %v2444
    %v3133 = vpack.c.b16 %v2453, %v2445
    %v3134 = vpack.c.b16 %v2454, %v2446
    %v3135 = vpack.c.b16 %v2455, %v2447
    %v3136 = vpack.c.b16 %v2456, %v2448
    %v3137 = vpack.c.b16 %v2465, %v2457
    %v3138 = vpack.c.b16 %v2466, %v2458
    %v3139 = vpack.c.b16 %v2467, %v2459
    %v3140 = vpack.c.b16 %v2468, %v2460
    %v3141 = vpack.c.b16 %v2469, %v2461
    %v3142 = vpack.c.b16 %v2470, %v2462
    %v3143 = vpack.c.b16 %v2471, %v2463
    %v3144 = vpack.c.b16 %v2472, %v2464
    %v3145 = vpack.c.b16 %v2481, %v2473
    %v3146 = vpack.c.b16 %v2482, %v2474
    %v3147 = vpack.c.b16 %v2483, %v2475
    %v3148 = vpack.c.b16 %v2484, %v2476
    %v3149 = vpack.c.b16 %v2485, %v2477
    %v3150 = vpack.c.b16 %v2486, %v2478
    %v3151 = vpack.c.b16 %v2487, %v2479
    %v3152 = vpack.c.b16 %v2488, %v2480
    %v3153 = vpack.c.b16 %v2497, %v2489
    %v3154 = vpack.c.b16 %v2498, %v2490
    %v3155 = vpack.c.b16 %v2499, %v2491
    %v3156 = vpack.c.b16 %v2500, %v2492
    %v3157 = vpack.c.b16 %v2501, %v2493
    %v3158 = vpack.c.b16 %v2502, %v2494
    %v3159 = vpack.c.b16 %v2503, %v2495
    %v3160 = vpack.c.b16 %v2504, %v2496
    %v3161 = vpack.c.b16 %v2513, %v2505
    %v3162 = vpack.c.b16 %v2514, %v2506
    %v3163 = vpack.c.b16 %v2515, %v2507
    %v3164 = vpack.c.b16 %v2516, %v2508
    %v3165 = vpack.c.b16 %v2517, %v2509
    %v3166 = vpack.c.b16 %v2518, %v2510
    %v3167 = vpack.c.b16 %v2519, %v2511
    %v3168 = vpack.c.b16 %v2520, %v2512
    %v3169 = vpack.c.b16 %v2529, %v2521
    %v3170 = vpack.c.b16 %v2530, %v2522
    %v3171 = vpack.c.b16 %v2531, %v2523
    %v3172 = vpack.c.b16 %v2532, %v2524
    %v3173 = vpack.c.b16 %v2533, %v2525
    %v3174 = vpack.c.b16 %v2534, %v2526
    %v3175 = vpack.c.b16 %v2535, %v2527
    %v3176 = vpack.c.b16 %v2536, %v2528
    %v3177 = vpack.c.b16 %v2545, %v2537
    %v3178 = vpack.c.b16 %v2546, %v2538
    %v3179 = vpack.c.b16 %v2547, %v2539
    %v3180 = vpack.c.b16 %v2548, %v2540
    %v3181 = vpack.c.b16 %v2549, %v2541
    %v3182 = vpack.c.b16 %v2550, %v2542
    %v3183 = vpack.c.b16 %v2551, %v2543
    %v3184 = vpack.c.b16 %v2552, %v2544
    %v3185 = vpack.c.b16 %v2561, %v2553
    %v3186 = vpack.c.b16 %v2562, %v2554
    %v3187 = vpack.c.b16 %v2563, %v2555
    %v3188 = vpack.c.b16 %v2564, %v2556
    %v3189 = vpack.c.b16 %v2565, %v2557
    %v3190 = vpack.c.b16 %v2566, %v2558
    %v3191 = vpack.c.b16 %v2567, %v2559
    %v3192 = vpack.c.b16 %v2568, %v2560
    %v3193 = vpack.c.b16 %v2577, %v2569
    %v3194 = vpack.c.b16 %v2578, %v2570
    %v3195 = vpack.c.b16 %v2579, %v2571
    %v3196 = vpack.c.b16 %v2580, %v2572
    %v3197 = vpack.c.b16 %v2581, %v2573
    %v3198 = vpack.c.b16 %v2582, %v2574
    %v3199 = vpack.c.b16 %v2583, %v2575
    %v3200 = vpack.c.b16 %v2584, %v2576
    %v3201 = vpack.c.b16 %v2593, %v2585
    %v3202 = vpack.c.b16 %v2594, %v2586
    %v3203 = vpack.c.b16 %v2595, %v2587
    %v3204 = vpack.c.b16 %v2596, %v2588
    %v3205 = vpack.c.b16 %v2597, %v2589
    %v3206 = vpack.c.b16 %v2598, %v2590
    %v3207 = vpack.c.b16 %v2599, %v2591
    %v3208 = vpack.c.b16 %v2600, %v2592
    %v3209 = vpack.c.b16 %v2609, %v2601
    %v3210 = vpack.c.b16 %v2610, %v2602
    %v3211 = vpack.c.b16 %v2611, %v2603
    %v3212 = vpack.c.b16 %v2612, %v2604
    %v3213 = vpack.c.b16 %v2613, %v2605
    %v3214 = vpack.c.b16 %v2614, %v2606
    %v3215 = vpack.c.b16 %v2615, %v2607
    %v3216 = vpack.c.b16 %v2616, %v2608
    %v3217 = vpack.c.b16 %v2625, %v2617
    %v3218 = vpack.c.b16 %v2626, %v2618
    %v3219 = vpack.c.b16 %v2627, %v2619
    %v3220 = vpack.c.b16 %v2628, %v2620
    %v3221 = vpack.c.b16 %v2629, %v2621
    %v3222 = vpack.c.b16 %v2630, %v2622
    %v3223 = vpack.c.b16 %v2631, %v2623
    %v3224 = vpack.c.b16 %v2632, %v2624
    %v3225 = vpack.c.b16 %v2641, %v2633
    %v3226 = vpack.c.b16 %v2642, %v2634
    %v3227 = vpack.c.b16 %v2643, %v2635
    %v3228 = vpack.c.b16 %v2644, %v2636
    %v3229 = vpack.c.b16 %v2645, %v2637
    %v3230 = vpack.c.b16 %v2646, %v2638
    %v3231 = vpack.c.b16 %v2647, %v2639
    %v3232 = vpack.c.b16 %v2648, %v2640
    %v3233 = vpack.c.b16 %v2657, %v2649
    %v3234 = vpack.c.b16 %v2658, %v2650
    %v3235 = vpack.c.b16 %v2659, %v2651
    %v3236 = vpack.c.b16 %v2660, %v2652
    %v3237 = vpack.c.b16 %v2661, %v2653
    %v3238 = vpack.c.b16 %v2662, %v2654
    %v3239 = vpack.c.b16 %v2663, %v2655
    %v3240 = vpack.c.b16 %v2664, %v2656
    %v3241 = vpack.c.b16 %v2673, %v2665
    %v3242 = vpack.c.b16 %v2674, %v2666
    %v3243 = vpack.c.b16 %v2675, %v2667
    %v3244 = vpack.c.b16 %v2676, %v2668
    %v3245 = vpack.c.b16 %v2677, %v2669
    %v3246 = vpack.c.b16 %v2678, %v2670
    %v3247 = vpack.c.b16 %v2679, %v2671
    %v3248 = vpack.c.b16 %v2680, %v2672
    %v3249 = vpack.c.b16 %v2689, %v2681
    %v3250 = vpack.c.b16 %v2690, %v2682
    %v3251 = vpack.c.b16 %v2691, %v2683
    %v3252 = vpack.c.b16 %v2692, %v2684
    %v3253 = vpack.c.b16 %v2693, %v2685
    %v3254 = vpack.c.b16 %v2694, %v2686
    %v3255 = vpack.c.b16 %v2695, %v2687
    %v3256 = vpack.c.b16 %v2696, %v2688
    %v3257 = vpack.c.b16 %v2705, %v2697
    %v3258 = vpack.c.b16 %v2706, %v2698
    %v3259 = vpack.c.b16 %v2707, %v2699
    %v3260 = vpack.c.b16 %v2708, %v2700
    %v3261 = vpack.c.b16 %v2709, %v2701
    %v3262 = vpack.c.b16 %v2710, %v2702
    %v3263 = vpack.c.b16 %v2711, %v2703
    %v3264 = vpack.c.b16 %v2712, %v2704
    %v3265 = vpack.c.b16 %v2721, %v2713
    %v3266 = vpack.c.b16 %v2722, %v2714
    %v3267 = vpack.c.b16 %v2723, %v2715
    %v3268 = vpack.c.b16 %v2724, %v2716
    %v3269 = vpack.c.b16 %v2725, %v2717
    %v3270 = vpack.c.b16 %v2726, %v2718
    %v3271 = vpack.c.b16 %v2727, %v2719
    %v3272 = vpack.c.b16 %v2728, %v2720
    %v3273 = vpack.c.b16 %v2737, %v2729
    %v3274 = vpack.c.b16 %v2738, %v2730
    %v3275 = vpack.c.b16 %v2739, %v2731
    %v3276 = vpack.c.b16 %v2740, %v2732
    %v3277 = vpack.c.b16 %v2741, %v2733
    %v3278 = vpack.c.b16 %v2742, %v2734
    %v3279 = vpack.c.b16 %v2743, %v2735
    %v3280 = vpack.c.b16 %v2744, %v2736
    %v3281 = vpack.c.b16 %v2753, %v2745
    %v3282 = vpack.c.b16 %v2754, %v2746
    %v3283 = vpack.c.b16 %v2755, %v2747
    %v3284 = vpack.c.b16 %v2756, %v2748
    %v3285 = vpack.c.b16 %v2757, %v2749
    %v3286 = vpack.c.b16 %v2758, %v2750
    %v3287 = vpack.c.b16 %v2759, %v2751
    %v3288 = vpack.c.b16 %v2760, %v2752
    %v3289 = vpack.c.b16 %v2769, %v2761
    %v3290 = vpack.c.b16 %v2770, %v2762
    %v3291 = vpack.c.b16 %v2771, %v2763
    %v3292 = vpack.c.b16 %v2772, %v2764
    %v3293 = vpack.c.b16 %v2773, %v2765
    %v3294 = vpack.c.b16 %v2774, %v2766
    %v3295 = vpack.c.b16 %v2775, %v2767
    %v3296 = vpack.c.b16 %v2776, %v2768
    %v3297 = vpack.c.b16 %v2785, %v2777
    %v3298 = vpack.c.b16 %v2786, %v2778
    %v3299 = vpack.c.b16 %v2787, %v2779
    %v3300 = vpack.c.b16 %v2788, %v2780
    %v3301 = vpack.c.b16 %v2789, %v2781
    %v3302 = vpack.c.b16 %v2790, %v2782
    %v3303 = vpack.c.b16 %v2791, %v2783
    %v3304 = vpack.c.b16 %v2792, %v2784
    %v3305 = vpack.c.b16 %v2801, %v2793
    %v3306 = vpack.c.b16 %v2802, %v2794
    %v3307 = vpack.c.b16 %v2803, %v2795
    %v3308 = vpack.c.b16 %v2804, %v2796
    %v3309 = vpack.c.b16 %v2805, %v2797
    %v3310 = vpack.c.b16 %v2806, %v2798
    %v3311 = vpack.c.b16 %v2807, %v2799
    %v3312 = vpack.c.b16 %v2808, %v2800
    %v3313 = vpack.c.b16 %v2817, %v2809
    %v3314 = vpack.c.b16 %v2818, %v2810
    %v3315 = vpack.c.b16 %v2819, %v2811
    %v3316 = vpack.c.b16 %v2820, %v2812
    %v3317 = vpack.c.b16 %v2821, %v2813
    %v3318 = vpack.c.b16 %v2822, %v2814
    %v3319 = vpack.c.b16 %v2823, %v2815
    %v3320 = vpack.c.b16 %v2824, %v2816
    %v3321 = vpack.c.b16 %v2833, %v2825
    %v3322 = vpack.c.b16 %v2834, %v2826
    %v3323 = vpack.c.b16 %v2835, %v2827
    %v3324 = vpack.c.b16 %v2836, %v2828
    %v3325 = vpack.c.b16 %v2837, %v2829
    %v3326 = vpack.c.b16 %v2838, %v2830
    %v3327 = vpack.c.b16 %v2839, %v2831
    %v3328 = vpack.c.b16 %v2840, %v2832
    %v3329 = vpack.c.b16 %v2849, %v2841
    %v3330 = vpack.c.b16 %v2850, %v2842
    %v3331 = vpack.c.b16 %v2851, %v2843
    %v3332 = vpack.c.b16 %v2852, %v2844
    %v3333 = vpack.c.b16 %v2853, %v2845
    %v3334 = vpack.c.b16 %v2854, %v2846
    %v3335 = vpack.c.b16 %v2855, %v2847
    %v3336 = vpack.c.b16 %v2856, %v2848
    %v3337 = vpack.c.b16 %v2865, %v2857
    %v3338 = vpack.c.b16 %v2866, %v2858
    %v3339 = vpack.c.b16 %v2867, %v2859
    %v3340 = vpack.c.b16 %v2868, %v2860
    %v3341 = vpack.c.b16 %v2869, %v2861
    %v3342 = vpack.c.b16 %v2870, %v2862
    %v3343 = vpack.c.b16 %v2871, %v2863
    %v3344 = vpack.c.b16 %v2872, %v2864
    %v3345 = vpack.c.b16 %v2881, %v2873
    %v3346 = vpack.c.b16 %v2882, %v2874
    %v3347 = vpack.c.b16 %v2883, %v2875
    %v3348 = vpack.c.b16 %v2884, %v2876
    %v3349 = vpack.c.b16 %v2885, %v2877
    %v3350 = vpack.c.b16 %v2886, %v2878
    %v3351 = vpack.c.b16 %v2887, %v2879
    %v3352 = vpack.c.b16 %v2888, %v2880
    %v3353 = vpack.c.b16 %v2897, %v2889
    %v3354 = vpack.c.b16 %v2898, %v2890
    %v3355 = vpack.c.b16 %v2899, %v2891
    %v3356 = vpack.c.b16 %v2900, %v2892
    %v3357 = vpack.c.b16 %v2901, %v2893
    %v3358 = vpack.c.b16 %v2902, %v2894
    %v3359 = vpack.c.b16 %v2903, %v2895
    %v3360 = vpack.c.b16 %v2904, %v2896
    %v3361 = vpack.c.b16 %v2913, %v2905
    %v3362 = vpack.c.b16 %v2914, %v2906
    %v3363 = vpack.c.b16 %v2915, %v2907
    %v3364 = vpack.c.b16 %v2916, %v2908
    %v3365 = vpack.c.b16 %v2917, %v2909
    %v3366 = vpack.c.b16 %v2918, %v2910
    %v3367 = vpack.c.b16 %v2919, %v2911
    %v3368 = vpack.c.b16 %v2920, %v2912
    %3817 = vmatprep.subr.bf16.mxu0 %v2922
    %3818 = vmatpush1.bf16.msra.mxu0 %v2921
    %3819 = vmatprep.subr.bf16.mxu0 %v2930
    %3820 = vmatpush1.bf16.msra.mxu0 %v2929
    %3821 = vmatprep.subr.bf16.mxu0 %v2938
    %3822 = vmatpush1.bf16.msra.mxu0 %v2937
    %3823 = vmatprep.subr.bf16.mxu0 %v2946
    %3824 = vmatpush1.bf16.msra.mxu0 %v2945
    %3825 = vmatprep.subr.bf16.mxu0 %v2954
    %3826 = vmatpush1.bf16.msra.mxu0 %v2953
    %3827 = vmatprep.subr.bf16.mxu0 %v2962
    %3828 = vmatpush1.bf16.msra.mxu0 %v2961
    %3829 = vmatprep.subr.bf16.mxu0 %v2970
    %3830 = vmatpush1.bf16.msra.mxu0 %v2969
    %3831 = vmatprep.subr.bf16.mxu0 %v2978
    %3832 = vmatpush1.bf16.msra.mxu0 %v2977
    %3833 = vmatprep.subr.bf16.mxu0 %v2986
    %3834 = vmatpush1.bf16.msra.mxu0 %v2985
    %3835 = vmatprep.subr.bf16.mxu0 %v2994
    %3836 = vmatpush1.bf16.msra.mxu0 %v2993
    %3837 = vmatprep.subr.bf16.mxu0 %v3002
    %3838 = vmatpush1.bf16.msra.mxu0 %v3001
    %3839 = vmatprep.subr.bf16.mxu0 %v3010
    %3840 = vmatpush1.bf16.msra.mxu0 %v3009
    %3841 = vmatprep.subr.bf16.mxu0 %v3018
    %3842 = vmatpush1.bf16.msra.mxu0 %v3017
    %3843 = vmatprep.subr.bf16.mxu0 %v3026
    %3844 = vmatpush1.bf16.msra.mxu0 %v3025
    %3845 = vmatprep.subr.bf16.mxu0 %v3034
    %3846 = vmatpush1.bf16.msra.mxu0 %v3033
    %3847 = vmatprep.subr.bf16.mxu0 %v3042
    %3848 = vmatpush1.bf16.msra.mxu0 %v3041
    %3849 = vmatprep.mubr.bf16.mxu0 %v1081
    %3850 = vmatmul.mubr.bf16.gmra.mrb[0].mxu0 %v1080
    %v3851 = vpop.f32.mrb[0].mxu0
    %v3852 = vadd.f32 %v1540, %v3851
    %v3853 = vpop.f32.mrb[0].mxu0
    %v3854 = vadd.f32 %v1544, %v3853
    %v3855 = vpop.f32.mrb[0].mxu0
    %v3856 = vpop.f32.mrb[0].mxu0
    %3857 = vdwg.mxu0
    %3858 = vmatprep.subr.bf16.mxu0 %v3050
    %3859 = vmatpush1.bf16.msra.mxu0 %v3049
    %3860 = vmatprep.subr.bf16.mxu0 %v3058
    %3861 = vmatpush1.bf16.msra.mxu0 %v3057
    %3862 = vmatprep.subr.bf16.mxu0 %v3066
    %3863 = vmatpush1.bf16.msra.mxu0 %v3065
    %3864 = vmatprep.subr.bf16.mxu0 %v3074
    %3865 = vmatpush1.bf16.msra.mxu0 %v3073
    %3866 = vmatprep.subr.bf16.mxu0 %v3082
    %3867 = vmatpush1.bf16.msra.mxu0 %v3081
    %3868 = vmatprep.subr.bf16.mxu0 %v3090
    %3869 = vmatpush1.bf16.msra.mxu0 %v3089
    %3870 = vmatprep.subr.bf16.mxu0 %v3098
    %3871 = vmatpush1.bf16.msra.mxu0 %v3097
    %3872 = vmatprep.subr.bf16.mxu0 %v3106
    %3873 = vmatpush1.bf16.msra.mxu0 %v3105
    %3874 = vmatprep.subr.bf16.mxu0 %v3114
    %3875 = vmatpush1.bf16.msra.mxu0 %v3113
    %3876 = vmatprep.subr.bf16.mxu0 %v3122
    %3877 = vmatpush1.bf16.msra.mxu0 %v3121
    %3878 = vmatprep.subr.bf16.mxu0 %v3130
    %3879 = vmatpush1.bf16.msra.mxu0 %v3129
    %3880 = vmatprep.subr.bf16.mxu0 %v3138
    %3881 = vmatpush1.bf16.msra.mxu0 %v3137
    %3882 = vmatprep.subr.bf16.mxu0 %v3146
    %3883 = vmatpush1.bf16.msra.mxu0 %v3145
    %3884 = vmatprep.subr.bf16.mxu0 %v3154
    %3885 = vmatpush1.bf16.msra.mxu0 %v3153
    %3886 = vmatprep.subr.bf16.mxu0 %v3162
    %3887 = vmatpush1.bf16.msra.mxu0 %v3161
    %3888 = vmatprep.subr.bf16.mxu0 %v3170
    %3889 = vmatpush1.bf16.msra.mxu0 %v3169
    %3890 = vmatprep.mubr.bf16.mxu0 %v1083
    %3891 = vmatmul.mubr.bf16.gmra.mrb[0].mxu0 %v1082
    %v3892 = vpop.f32.mrb[0].mxu0
    %v3893 = vadd.f32 %v3852, %v3892
    %v3894 = vpop.f32.mrb[0].mxu0
    %v3895 = vadd.f32 %v3854, %v3894
    %v3896 = vpop.f32.mrb[0].mxu0
    %v3897 = vpop.f32.mrb[0].mxu0
    %3898 = vdwg.mxu0
    %3899 = vmatprep.subr.bf16.mxu0 %v3178
    %3900 = vmatpush1.bf16.msra.mxu0 %v3177
    %3901 = vmatprep.subr.bf16.mxu0 %v3186
    %3902 = vmatpush1.bf16.msra.mxu0 %v3185
    %3903 = vmatprep.subr.bf16.mxu0 %v3194
    %3904 = vmatpush1.bf16.msra.mxu0 %v3193
    %3905 = vmatprep.subr.bf16.mxu0 %v3202
    %3906 = vmatpush1.bf16.msra.mxu0 %v3201
    %3907 = vmatprep.subr.bf16.mxu0 %v3210
    %3908 = vmatpush1.bf16.msra.mxu0 %v3209
    %3909 = vmatprep.subr.bf16.mxu0 %v3218
    %3910 = vmatpush1.bf16.msra.mxu0 %v3217
    %3911 = vmatprep.subr.bf16.mxu0 %v3226
    %3912 = vmatpush1.bf16.msra.mxu0 %v3225
    %3913 = vmatprep.subr.bf16.mxu0 %v3234
    %3914 = vmatpush1.bf16.msra.mxu0 %v3233
    %3915 = vmatprep.subr.bf16.mxu0 %v3242
    %3916 = vmatpush1.bf16.msra.mxu0 %v3241
    %3917 = vmatprep.subr.bf16.mxu0 %v3250
    %3918 = vmatpush1.bf16.msra.mxu0 %v3249
    %3919 = vmatprep.subr.bf16.mxu0 %v3258
    %3920 = vmatpush1.bf16.msra.mxu0 %v3257
    %3921 = vmatprep.subr.bf16.mxu0 %v3266
    %3922 = vmatpush1.bf16.msra.mxu0 %v3265
    %3923 = vmatprep.subr.bf16.mxu0 %v3274
    %3924 = vmatpush1.bf16.msra.mxu0 %v3273
    %3925 = vmatprep.subr.bf16.mxu0 %v3282
    %3926 = vmatpush1.bf16.msra.mxu0 %v3281
    %3927 = vmatprep.subr.bf16.mxu0 %v3290
    %3928 = vmatpush1.bf16.msra.mxu0 %v3289
    %3929 = vmatprep.subr.bf16.mxu0 %v3298
    %3930 = vmatpush1.bf16.msra.mxu0 %v3297
    %3931 = vmatprep.mubr.bf16.mxu0 %v1085
    %3932 = vmatmul.mubr.bf16.gmra.mrb[0].mxu0 %v1084
    %v3933 = vpop.f32.mrb[0].mxu0
    %v3934 = vadd.f32 %v3893, %v3933
    %v3935 = vpop.f32.mrb[0].mxu0
    %v3936 = vadd.f32 %v3895, %v3935
    %v3937 = vpop.f32.mrb[0].mxu0
    %v3938 = vpop.f32.mrb[0].mxu0
    %3939 = vdwg.mxu0
    %3940 = vmatprep.subr.bf16.mxu0 %v3306
    %3941 = vmatpush1.bf16.msra.mxu0 %v3305
    %3942 = vmatprep.subr.bf16.mxu0 %v3314
    %3943 = vmatpush1.bf16.msra.mxu0 %v3313
    %3944 = vmatprep.subr.bf16.mxu0 %v3322
    %3945 = vmatpush1.bf16.msra.mxu0 %v3321
    %3946 = vmatprep.subr.bf16.mxu0 %v3330
    %3947 = vmatpush1.bf16.msra.mxu0 %v3329
    %3948 = vmatprep.subr.bf16.mxu0 %v3338
    %3949 = vmatpush1.bf16.msra.mxu0 %v3337
    %3950 = vmatprep.subr.bf16.mxu0 %v3346
    %3951 = vmatpush1.bf16.msra.mxu0 %v3345
    %3952 = vmatprep.subr.bf16.mxu0 %v3354
    %3953 = vmatpush1.bf16.msra.mxu0 %v3353
    %3954 = vmatprep.subr.bf16.mxu0 %v3362
    %3955 = vmatpush1.bf16.msra.mxu0 %v3361
    %3956 = vmatprep.subr.bf16.mxu0 0
    %3957 = vmatpush1.bf16.msra.mxu0 0
    %3958 = vmatprep.subr.bf16.mxu0 0
    %3959 = vmatpush1.bf16.msra.mxu0 0
    %3960 = vmatprep.subr.bf16.mxu0 0
    %3961 = vmatpush1.bf16.msra.mxu0 0
    %3962 = vmatprep.subr.bf16.mxu0 0
    %3963 = vmatpush1.bf16.msra.mxu0 0
    %3964 = vmatprep.subr.bf16.mxu0 0
    %3965 = vmatpush1.bf16.msra.mxu0 0
    %3966 = vmatprep.subr.bf16.mxu0 0
    %3967 = vmatpush1.bf16.msra.mxu0 0
    %3968 = vmatprep.subr.bf16.mxu0 0
    %3969 = vmatpush1.bf16.msra.mxu0 0
    %3970 = vmatprep.subr.bf16.mxu0 0
    %3971 = vmatpush1.bf16.msra.mxu0 0
    %3972 = vmatprep.mubr.bf16.mxu0 0
    %3973 = vmatmul.mubr.bf16.gmra.mrb[0].mxu0 %v1086
    %v3974 = vpop.f32.mrb[0].mxu0
    %v3975 = vadd.f32 %v3934, %v3974
    %v3976 = vpop.f32.mrb[0].mxu0
    %v3977 = vadd.f32 %v3936, %v3976
    %v3978 = vpop.f32.mrb[0].mxu0
    %v3979 = vpop.f32.mrb[0].mxu0
    %3980 = vdwg.mxu0
    %3981 = vmatprep.subr.bf16.mxu0 %v2924
    %3982 = vmatpush1.bf16.msra.mxu0 %v2923
    %3983 = vmatprep.subr.bf16.mxu0 %v2932
    %3984 = vmatpush1.bf16.msra.mxu0 %v2931
    %3985 = vmatprep.subr.bf16.mxu0 %v2940
    %3986 = vmatpush1.bf16.msra.mxu0 %v2939
    %3987 = vmatprep.subr.bf16.mxu0 %v2948
    %3988 = vmatpush1.bf16.msra.mxu0 %v2947
    %3989 = vmatprep.subr.bf16.mxu0 %v2956
    %3990 = vmatpush1.bf16.msra.mxu0 %v2955
    %3991 = vmatprep.subr.bf16.mxu0 %v2964
    %3992 = vmatpush1.bf16.msra.mxu0 %v2963
    %3993 = vmatprep.subr.bf16.mxu0 %v2972
    %3994 = vmatpush1.bf16.msra.mxu0 %v2971
    %3995 = vmatprep.subr.bf16.mxu0 %v2980
    %3996 = vmatpush1.bf16.msra.mxu0 %v2979
    %3997 = vmatprep.subr.bf16.mxu0 %v2988
    %3998 = vmatpush1.bf16.msra.mxu0 %v2987
    %3999 = vmatprep.subr.bf16.mxu0 %v2996
    %4000 = vmatpush1.bf16.msra.mxu0 %v2995
    %4001 = vmatprep.subr.bf16.mxu0 %v3004
    %4002 = vmatpush1.bf16.msra.mxu0 %v3003
    %4003 = vmatprep.subr.bf16.mxu0 %v3012
    %4004 = vmatpush1.bf16.msra.mxu0 %v3011
    %4005 = vmatprep.subr.bf16.mxu0 %v3020
    %4006 = vmatpush1.bf16.msra.mxu0 %v3019
    %4007 = vmatprep.subr.bf16.mxu0 %v3028
    %4008 = vmatpush1.bf16.msra.mxu0 %v3027
    %4009 = vmatprep.subr.bf16.mxu0 %v3036
    %4010 = vmatpush1.bf16.msra.mxu0 %v3035
    %4011 = vmatprep.subr.bf16.mxu0 %v3044
    %4012 = vmatpush1.bf16.msra.mxu0 %v3043
    %4013 = vmatprep.mubr.bf16.mxu0 %v1081
    %4014 = vmatmul.mubr.bf16.gmra.mrb[0].mxu0 %v1080
    %v4015 = vpop.f32.mrb[0].mxu0
    %v4016 = vadd.f32 %v1548, %v4015
    %v4017 = vpop.f32.mrb[0].mxu0
    %v4018 = vadd.f32 %v1552, %v4017
    %v4019 = vpop.f32.mrb[0].mxu0
    %v4020 = vpop.f32.mrb[0].mxu0
    %4021 = vdwg.mxu0
    %4022 = vmatprep.subr.bf16.mxu0 %v3052
    %4023 = vmatpush1.bf16.msra.mxu0 %v3051
    %4024 = vmatprep.subr.bf16.mxu0 %v3060
    %4025 = vmatpush1.bf16.msra.mxu0 %v3059
    %4026 = vmatprep.subr.bf16.mxu0 %v3068
    %4027 = vmatpush1.bf16.msra.mxu0 %v3067
    %4028 = vmatprep.subr.bf16.mxu0 %v3076
    %4029 = vmatpush1.bf16.msra.mxu0 %v3075
    %4030 = vmatprep.subr.bf16.mxu0 %v3084
    %4031 = vmatpush1.bf16.msra.mxu0 %v3083
    %4032 = vmatprep.subr.bf16.mxu0 %v3092
    %4033 = vmatpush1.bf16.msra.mxu0 %v3091
    %4034 = vmatprep.subr.bf16.mxu0 %v3100
    %4035 = vmatpush1.bf16.msra.mxu0 %v3099
    %4036 = vmatprep.subr.bf16.mxu0 %v3108
    %4037 = vmatpush1.bf16.msra.mxu0 %v3107
    %4038 = vmatprep.subr.bf16.mxu0 %v3116
    %4039 = vmatpush1.bf16.msra.mxu0 %v3115
    %4040 = vmatprep.subr.bf16.mxu0 %v3124
    %4041 = vmatpush1.bf16.msra.mxu0 %v3123
    %4042 = vmatprep.subr.bf16.mxu0 %v3132
    %4043 = vmatpush1.bf16.msra.mxu0 %v3131
    %4044 = vmatprep.subr.bf16.mxu0 %v3140
    %4045 = vmatpush1.bf16.msra.mxu0 %v3139
    %4046 = vmatprep.subr.bf16.mxu0 %v3148
    %4047 = vmatpush1.bf16.msra.mxu0 %v3147
    %4048 = vmatprep.subr.bf16.mxu0 %v3156
    %4049 = vmatpush1.bf16.msra.mxu0 %v3155
    %4050 = vmatprep.subr.bf16.mxu0 %v3164
    %4051 = vmatpush1.bf16.msra.mxu0 %v3163
    %4052 = vmatprep.subr.bf16.mxu0 %v3172
    %4053 = vmatpush1.bf16.msra.mxu0 %v3171
    %4054 = vmatprep.mubr.bf16.mxu0 %v1083
    %4055 = vmatmul.mubr.bf16.gmra.mrb[0].mxu0 %v1082
    %v4056 = vpop.f32.mrb[0].mxu0
    %v4057 = vadd.f32 %v4016, %v4056
    %v4058 = vpop.f32.mrb[0].mxu0
    %v4059 = vadd.f32 %v4018, %v4058
    %v4060 = vpop.f32.mrb[0].mxu0
    %v4061 = vpop.f32.mrb[0].mxu0
    %4062 = vdwg.mxu0
    %4063 = vmatprep.subr.bf16.mxu0 %v3180
    %4064 = vmatpush1.bf16.msra.mxu0 %v3179
    %4065 = vmatprep.subr.bf16.mxu0 %v3188
    %4066 = vmatpush1.bf16.msra.mxu0 %v3187
    %4067 = vmatprep.subr.bf16.mxu0 %v3196
    %4068 = vmatpush1.bf16.msra.mxu0 %v3195
    %4069 = vmatprep.subr.bf16.mxu0 %v3204
    %4070 = vmatpush1.bf16.msra.mxu0 %v3203
    %4071 = vmatprep.subr.bf16.mxu0 %v3212
    %4072 = vmatpush1.bf16.msra.mxu0 %v3211
    %4073 = vmatprep.subr.bf16.mxu0 %v3220
    %4074 = vmatpush1.bf16.msra.mxu0 %v3219
    %4075 = vmatprep.subr.bf16.mxu0 %v3228
    %4076 = vmatpush1.bf16.msra.mxu0 %v3227
    %4077 = vmatprep.subr.bf16.mxu0 %v3236
    %4078 = vmatpush1.bf16.msra.mxu0 %v3235
    %4079 = vmatprep.subr.bf16.mxu0 %v3244
    %4080 = vmatpush1.bf16.msra.mxu0 %v3243
    %4081 = vmatprep.subr.bf16.mxu0 %v3252
    %4082 = vmatpush1.bf16.msra.mxu0 %v3251
    %4083 = vmatprep.subr.bf16.mxu0 %v3260
    %4084 = vmatpush1.bf16.msra.mxu0 %v3259
    %4085 = vmatprep.subr.bf16.mxu0 %v3268
    %4086 = vmatpush1.bf16.msra.mxu0 %v3267
    %4087 = vmatprep.subr.bf16.mxu0 %v3276
    %4088 = vmatpush1.bf16.msra.mxu0 %v3275
    %4089 = vmatprep.subr.bf16.mxu0 %v3284
    %4090 = vmatpush1.bf16.msra.mxu0 %v3283
    %4091 = vmatprep.subr.bf16.mxu0 %v3292
    %4092 = vmatpush1.bf16.msra.mxu0 %v3291
    %4093 = vmatprep.subr.bf16.mxu0 %v3300
    %4094 = vmatpush1.bf16.msra.mxu0 %v3299
    %4095 = vmatprep.mubr.bf16.mxu0 %v1085
    %4096 = vmatmul.mubr.bf16.gmra.mrb[0].mxu0 %v1084
    %v4097 = vpop.f32.mrb[0].mxu0
    %v4098 = vadd.f32 %v4057, %v4097
    %v4099 = vpop.f32.mrb[0].mxu0
    %v4100 = vadd.f32 %v4059, %v4099
    %v4101 = vpop.f32.mrb[0].mxu0
    %v4102 = vpop.f32.mrb[0].mxu0
    %4103 = vdwg.mxu0
    %4104 = vmatprep.subr.bf16.mxu0 %v3308
    %4105 = vmatpush1.bf16.msra.mxu0 %v3307
    %4106 = vmatprep.subr.bf16.mxu0 %v3316
    %4107 = vmatpush1.bf16.msra.mxu0 %v3315
    %4108 = vmatprep.subr.bf16.mxu0 %v3324
    %4109 = vmatpush1.bf16.msra.mxu0 %v3323
    %4110 = vmatprep.subr.bf16.mxu0 %v3332
    %4111 = vmatpush1.bf16.msra.mxu0 %v3331
    %4112 = vmatprep.subr.bf16.mxu0 %v3340
    %4113 = vmatpush1.bf16.msra.mxu0 %v3339
    %4114 = vmatprep.subr.bf16.mxu0 %v3348
    %4115 = vmatpush1.bf16.msra.mxu0 %v3347
    %4116 = vmatprep.subr.bf16.mxu0 %v3356
    %4117 = vmatpush1.bf16.msra.mxu0 %v3355
    %4118 = vmatprep.subr.bf16.mxu0 %v3364
    %4119 = vmatpush1.bf16.msra.mxu0 %v3363
    %4120 = vmatprep.subr.bf16.mxu0 0
    %4121 = vmatpush1.bf16.msra.mxu0 0
    %4122 = vmatprep.subr.bf16.mxu0 0
    %4123 = vmatpush1.bf16.msra.mxu0 0
    %4124 = vmatprep.subr.bf16.mxu0 0
    %4125 = vmatpush1.bf16.msra.mxu0 0
    %4126 = vmatprep.subr.bf16.mxu0 0
    %4127 = vmatpush1.bf16.msra.mxu0 0
    %4128 = vmatprep.subr.bf16.mxu0 0
    %4129 = vmatpush1.bf16.msra.mxu0 0
    %4130 = vmatprep.subr.bf16.mxu0 0
    %4131 = vmatpush1.bf16.msra.mxu0 0
    %4132 = vmatprep.subr.bf16.mxu0 0
    %4133 = vmatpush1.bf16.msra.mxu0 0
    %4134 = vmatprep.subr.bf16.mxu0 0
    %4135 = vmatpush1.bf16.msra.mxu0 0
    %4136 = vmatprep.mubr.bf16.mxu0 0
    %4137 = vmatmul.mubr.bf16.gmra.mrb[0].mxu0 %v1086
    %v4138 = vpop.f32.mrb[0].mxu0
    %v4139 = vadd.f32 %v4098, %v4138
    %v4140 = vpop.f32.mrb[0].mxu0
    %v4141 = vadd.f32 %v4100, %v4140
    %v4142 = vpop.f32.mrb[0].mxu0
    %v4143 = vpop.f32.mrb[0].mxu0
    %4144 = vdwg.mxu0
    %4145 = vmatprep.subr.bf16.mxu0 %v2926
    %4146 = vmatpush1.bf16.msra.mxu0 %v2925
    %4147 = vmatprep.subr.bf16.mxu0 %v2934
    %4148 = vmatpush1.bf16.msra.mxu0 %v2933
    %4149 = vmatprep.subr.bf16.mxu0 %v2942
    %4150 = vmatpush1.bf16.msra.mxu0 %v2941
    %4151 = vmatprep.subr.bf16.mxu0 %v2950
    %4152 = vmatpush1.bf16.msra.mxu0 %v2949
    %4153 = vmatprep.subr.bf16.mxu0 %v2958
    %4154 = vmatpush1.bf16.msra.mxu0 %v2957
    %4155 = vmatprep.subr.bf16.mxu0 %v2966
    %4156 = vmatpush1.bf16.msra.mxu0 %v2965
    %4157 = vmatprep.subr.bf16.mxu0 %v2974
    %4158 = vmatpush1.bf16.msra.mxu0 %v2973
    %4159 = vmatprep.subr.bf16.mxu0 %v2982
    %4160 = vmatpush1.bf16.msra.mxu0 %v2981
    %4161 = vmatprep.subr.bf16.mxu0 %v2990
    %4162 = vmatpush1.bf16.msra.mxu0 %v2989
    %4163 = vmatprep.subr.bf16.mxu0 %v2998
    %4164 = vmatpush1.bf16.msra.mxu0 %v2997
    %4165 = vmatprep.subr.bf16.mxu0 %v3006
    %4166 = vmatpush1.bf16.msra.mxu0 %v3005
    %4167 = vmatprep.subr.bf16.mxu0 %v3014
    %4168 = vmatpush1.bf16.msra.mxu0 %v3013
    %4169 = vmatprep.subr.bf16.mxu0 %v3022
    %4170 = vmatpush1.bf16.msra.mxu0 %v3021
    %4171 = vmatprep.subr.bf16.mxu0 %v3030
    %4172 = vmatpush1.bf16.msra.mxu0 %v3029
    %4173 = vmatprep.subr.bf16.mxu0 %v3038
    %4174 = vmatpush1.bf16.msra.mxu0 %v3037
    %4175 = vmatprep.subr.bf16.mxu0 %v3046
    %4176 = vmatpush1.bf16.msra.mxu0 %v3045
    %4177 = vmatprep.mubr.bf16.mxu0 %v1081
    %4178 = vmatmul.mubr.bf16.gmra.mrb[0].mxu0 %v1080
    %v4179 = vpop.f32.mrb[0].mxu0
    %v4180 = vadd.f32 %v1556, %v4179
    %v4181 = vpop.f32.mrb[0].mxu0
    %v4182 = vadd.f32 %v1560, %v4181
    %v4183 = vpop.f32.mrb[0].mxu0
    %v4184 = vpop.f32.mrb[0].mxu0
    %4185 = vdwg.mxu0
    %4186 = vmatprep.subr.bf16.mxu0 %v3054
    %4187 = vmatpush1.bf16.msra.mxu0 %v3053
    %4188 = vmatprep.subr.bf16.mxu0 %v3062
    %4189 = vmatpush1.bf16.msra.mxu0 %v3061
    %4190 = vmatprep.subr.bf16.mxu0 %v3070
    %4191 = vmatpush1.bf16.msra.mxu0 %v3069
    %4192 = vmatprep.subr.bf16.mxu0 %v3078
    %4193 = vmatpush1.bf16.msra.mxu0 %v3077
    %4194 = vmatprep.subr.bf16.mxu0 %v3086
    %4195 = vmatpush1.bf16.msra.mxu0 %v3085
    %4196 = vmatprep.subr.bf16.mxu0 %v3094
    %4197 = vmatpush1.bf16.msra.mxu0 %v3093
    %4198 = vmatprep.subr.bf16.mxu0 %v3102
    %4199 = vmatpush1.bf16.msra.mxu0 %v3101
    %4200 = vmatprep.subr.bf16.mxu0 %v3110
    %4201 = vmatpush1.bf16.msra.mxu0 %v3109
    %4202 = vmatprep.subr.bf16.mxu0 %v3118
    %4203 = vmatpush1.bf16.msra.mxu0 %v3117
    %4204 = vmatprep.subr.bf16.mxu0 %v3126
    %4205 = vmatpush1.bf16.msra.mxu0 %v3125
    %4206 = vmatprep.subr.bf16.mxu0 %v3134
    %4207 = vmatpush1.bf16.msra.mxu0 %v3133
    %4208 = vmatprep.subr.bf16.mxu0 %v3142
    %4209 = vmatpush1.bf16.msra.mxu0 %v3141
    %4210 = vmatprep.subr.bf16.mxu0 %v3150
    %4211 = vmatpush1.bf16.msra.mxu0 %v3149
    %4212 = vmatprep.subr.bf16.mxu0 %v3158
    %4213 = vmatpush1.bf16.msra.mxu0 %v3157
    %4214 = vmatprep.subr.bf16.mxu0 %v3166
    %4215 = vmatpush1.bf16.msra.mxu0 %v3165
    %4216 = vmatprep.subr.bf16.mxu0 %v3174
    %4217 = vmatpush1.bf16.msra.mxu0 %v3173
    %4218 = vmatprep.mubr.bf16.mxu0 %v1083
    %4219 = vmatmul.mubr.bf16.gmra.mrb[0].mxu0 %v1082
    %v4220 = vpop.f32.mrb[0].mxu0
    %v4221 = vadd.f32 %v4180, %v4220
    %v4222 = vpop.f32.mrb[0].mxu0
    %v4223 = vadd.f32 %v4182, %v4222
    %v4224 = vpop.f32.mrb[0].mxu0
    %v4225 = vpop.f32.mrb[0].mxu0
    %4226 = vdwg.mxu0
    %4227 = vmatprep.subr.bf16.mxu0 %v3182
    %4228 = vmatpush1.bf16.msra.mxu0 %v3181
    %4229 = vmatprep.subr.bf16.mxu0 %v3190
    %4230 = vmatpush1.bf16.msra.mxu0 %v3189
    %4231 = vmatprep.subr.bf16.mxu0 %v3198
    %4232 = vmatpush1.bf16.msra.mxu0 %v3197
    %4233 = vmatprep.subr.bf16.mxu0 %v3206
    %4234 = vmatpush1.bf16.msra.mxu0 %v3205
    %4235 = vmatprep.subr.bf16.mxu0 %v3214
    %4236 = vmatpush1.bf16.msra.mxu0 %v3213
    %4237 = vmatprep.subr.bf16.mxu0 %v3222
    %4238 = vmatpush1.bf16.msra.mxu0 %v3221
    %4239 = vmatprep.subr.bf16.mxu0 %v3230
    %4240 = vmatpush1.bf16.msra.mxu0 %v3229
    %4241 = vmatprep.subr.bf16.mxu0 %v3238
    %4242 = vmatpush1.bf16.msra.mxu0 %v3237
    %4243 = vmatprep.subr.bf16.mxu0 %v3246
    %4244 = vmatpush1.bf16.msra.mxu0 %v3245
    %4245 = vmatprep.subr.bf16.mxu0 %v3254
    %4246 = vmatpush1.bf16.msra.mxu0 %v3253
    %4247 = vmatprep.subr.bf16.mxu0 %v3262
    %4248 = vmatpush1.bf16.msra.mxu0 %v3261
    %4249 = vmatprep.subr.bf16.mxu0 %v3270
    %4250 = vmatpush1.bf16.msra.mxu0 %v3269
    %4251 = vmatprep.subr.bf16.mxu0 %v3278
    %4252 = vmatpush1.bf16.msra.mxu0 %v3277
    %4253 = vmatprep.subr.bf16.mxu0 %v3286
    %4254 = vmatpush1.bf16.msra.mxu0 %v3285
    %4255 = vmatprep.subr.bf16.mxu0 %v3294
    %4256 = vmatpush1.bf16.msra.mxu0 %v3293
    %4257 = vmatprep.subr.bf16.mxu0 %v3302
    %4258 = vmatpush1.bf16.msra.mxu0 %v3301
    %4259 = vmatprep.mubr.bf16.mxu0 %v1085
    %4260 = vmatmul.mubr.bf16.gmra.mrb[0].mxu0 %v1084
    %v4261 = vpop.f32.mrb[0].mxu0
    %v4262 = vadd.f32 %v4221, %v4261
    %v4263 = vpop.f32.mrb[0].mxu0
    %v4264 = vadd.f32 %v4223, %v4263
    %v4265 = vpop.f32.mrb[0].mxu0
    %v4266 = vpop.f32.mrb[0].mxu0
    %4267 = vdwg.mxu0
    %4268 = vmatprep.subr.bf16.mxu0 %v3310
    %4269 = vmatpush1.bf16.msra.mxu0 %v3309
    %4270 = vmatprep.subr.bf16.mxu0 %v3318
    %4271 = vmatpush1.bf16.msra.mxu0 %v3317
    %4272 = vmatprep.subr.bf16.mxu0 %v3326
    %4273 = vmatpush1.bf16.msra.mxu0 %v3325
    %4274 = vmatprep.subr.bf16.mxu0 %v3334
    %4275 = vmatpush1.bf16.msra.mxu0 %v3333
    %4276 = vmatprep.subr.bf16.mxu0 %v3342
    %4277 = vmatpush1.bf16.msra.mxu0 %v3341
    %4278 = vmatprep.subr.bf16.mxu0 %v3350
    %4279 = vmatpush1.bf16.msra.mxu0 %v3349
    %4280 = vmatprep.subr.bf16.mxu0 %v3358
    %4281 = vmatpush1.bf16.msra.mxu0 %v3357
    %4282 = vmatprep.subr.bf16.mxu0 %v3366
    %4283 = vmatpush1.bf16.msra.mxu0 %v3365
    %4284 = vmatprep.subr.bf16.mxu0 0
    %4285 = vmatpush1.bf16.msra.mxu0 0
    %4286 = vmatprep.subr.bf16.mxu0 0
    %4287 = vmatpush1.bf16.msra.mxu0 0
    %4288 = vmatprep.subr.bf16.mxu0 0
    %4289 = vmatpush1.bf16.msra.mxu0 0
    %4290 = vmatprep.subr.bf16.mxu0 0
    %4291 = vmatpush1.bf16.msra.mxu0 0
    %4292 = vmatprep.subr.bf16.mxu0 0
    %4293 = vmatpush1.bf16.msra.mxu0 0
    %4294 = vmatprep.subr.bf16.mxu0 0
    %4295 = vmatpush1.bf16.msra.mxu0 0
    %4296 = vmatprep.subr.bf16.mxu0 0
    %4297 = vmatpush1.bf16.msra.mxu0 0
    %4298 = vmatprep.subr.bf16.mxu0 0
    %4299 = vmatpush1.bf16.msra.mxu0 0
    %4300 = vmatprep.mubr.bf16.mxu0 0
    %4301 = vmatmul.mubr.bf16.gmra.mrb[0].mxu0 %v1086
    %v4302 = vpop.f32.mrb[0].mxu0
    %v4303 = vadd.f32 %v4262, %v4302
    %v4304 = vpop.f32.mrb[0].mxu0
    %v4305 = vadd.f32 %v4264, %v4304
    %v4306 = vpop.f32.mrb[0].mxu0
    %v4307 = vpop.f32.mrb[0].mxu0
    %4308 = vdwg.mxu0
    %4309 = vmatprep.subr.bf16.mxu0 %v2928
    %4310 = vmatpush1.bf16.msra.mxu0 %v2927
    %4311 = vmatprep.subr.bf16.mxu0 %v2936
    %4312 = vmatpush1.bf16.msra.mxu0 %v2935
    %4313 = vmatprep.subr.bf16.mxu0 %v2944
    %4314 = vmatpush1.bf16.msra.mxu0 %v2943
    %4315 = vmatprep.subr.bf16.mxu0 %v2952
    %4316 = vmatpush1.bf16.msra.mxu0 %v2951
    %4317 = vmatprep.subr.bf16.mxu0 %v2960
    %4318 = vmatpush1.bf16.msra.mxu0 %v2959
    %4319 = vmatprep.subr.bf16.mxu0 %v2968
    %4320 = vmatpush1.bf16.msra.mxu0 %v2967
    %4321 = vmatprep.subr.bf16.mxu0 %v2976
    %4322 = vmatpush1.bf16.msra.mxu0 %v2975
    %4323 = vmatprep.subr.bf16.mxu0 %v2984
    %4324 = vmatpush1.bf16.msra.mxu0 %v2983
    %4325 = vmatprep.subr.bf16.mxu0 %v2992
    %4326 = vmatpush1.bf16.msra.mxu0 %v2991
    %4327 = vmatprep.subr.bf16.mxu0 %v3000
    %4328 = vmatpush1.bf16.msra.mxu0 %v2999
    %4329 = vmatprep.subr.bf16.mxu0 %v3008
    %4330 = vmatpush1.bf16.msra.mxu0 %v3007
    %4331 = vmatprep.subr.bf16.mxu0 %v3016
    %4332 = vmatpush1.bf16.msra.mxu0 %v3015
    %4333 = vmatprep.subr.bf16.mxu0 %v3024
    %4334 = vmatpush1.bf16.msra.mxu0 %v3023
    %4335 = vmatprep.subr.bf16.mxu0 %v3032
    %4336 = vmatpush1.bf16.msra.mxu0 %v3031
    %4337 = vmatprep.subr.bf16.mxu0 %v3040
    %4338 = vmatpush1.bf16.msra.mxu0 %v3039
    %4339 = vmatprep.subr.bf16.mxu0 %v3048
    %4340 = vmatpush1.bf16.msra.mxu0 %v3047
    %4341 = vmatprep.mubr.bf16.mxu0 %v1081
    %4342 = vmatmul.mubr.bf16.gmra.mrb[0].mxu0 %v1080
    %v4343 = vpop.f32.mrb[0].mxu0
    %v4344 = vadd.f32 %v1564, %v4343
    %v4345 = vpop.f32.mrb[0].mxu0
    %v4346 = vadd.f32 %v1568, %v4345
    %v4347 = vpop.f32.mrb[0].mxu0
    %v4348 = vpop.f32.mrb[0].mxu0
    %4349 = vdwg.mxu0
    %4350 = vmatprep.subr.bf16.mxu0 %v3056
    %4351 = vmatpush1.bf16.msra.mxu0 %v3055
    %4352 = vmatprep.subr.bf16.mxu0 %v3064
    %4353 = vmatpush1.bf16.msra.mxu0 %v3063
    %4354 = vmatprep.subr.bf16.mxu0 %v3072
    %4355 = vmatpush1.bf16.msra.mxu0 %v3071
    %4356 = vmatprep.subr.bf16.mxu0 %v3080
    %4357 = vmatpush1.bf16.msra.mxu0 %v3079
    %4358 = vmatprep.subr.bf16.mxu0 %v3088
    %4359 = vmatpush1.bf16.msra.mxu0 %v3087
    %4360 = vmatprep.subr.bf16.mxu0 %v3096
    %4361 = vmatpush1.bf16.msra.mxu0 %v3095
    %4362 = vmatprep.subr.bf16.mxu0 %v3104
    %4363 = vmatpush1.bf16.msra.mxu0 %v3103
    %4364 = vmatprep.subr.bf16.mxu0 %v3112
    %4365 = vmatpush1.bf16.msra.mxu0 %v3111
    %4366 = vmatprep.subr.bf16.mxu0 %v3120
    %4367 = vmatpush1.bf16.msra.mxu0 %v3119
    %4368 = vmatprep.subr.bf16.mxu0 %v3128
    %4369 = vmatpush1.bf16.msra.mxu0 %v3127
    %4370 = vmatprep.subr.bf16.mxu0 %v3136
    %4371 = vmatpush1.bf16.msra.mxu0 %v3135
    %4372 = vmatprep.subr.bf16.mxu0 %v3144
    %4373 = vmatpush1.bf16.msra.mxu0 %v3143
    %4374 = vmatprep.subr.bf16.mxu0 %v3152
    %4375 = vmatpush1.bf16.msra.mxu0 %v3151
    %4376 = vmatprep.subr.bf16.mxu0 %v3160
    %4377 = vmatpush1.bf16.msra.mxu0 %v3159
    %4378 = vmatprep.subr.bf16.mxu0 %v3168
    %4379 = vmatpush1.bf16.msra.mxu0 %v3167
    %4380 = vmatprep.subr.bf16.mxu0 %v3176
    %4381 = vmatpush1.bf16.msra.mxu0 %v3175
    %4382 = vmatprep.mubr.bf16.mxu0 %v1083
    %4383 = vmatmul.mubr.bf16.gmra.mrb[0].mxu0 %v1082
    %v4384 = vpop.f32.mrb[0].mxu0
    %v4385 = vadd.f32 %v4344, %v4384
    %v4386 = vpop.f32.mrb[0].mxu0
    %v4387 = vadd.f32 %v4346, %v4386
    %v4388 = vpop.f32.mrb[0].mxu0
    %v4389 = vpop.f32.mrb[0].mxu0
    %4390 = vdwg.mxu0
    %4391 = vmatprep.subr.bf16.mxu0 %v3184
    %4392 = vmatpush1.bf16.msra.mxu0 %v3183
    %4393 = vmatprep.subr.bf16.mxu0 %v3192
    %4394 = vmatpush1.bf16.msra.mxu0 %v3191
    %4395 = vmatprep.subr.bf16.mxu0 %v3200
    %4396 = vmatpush1.bf16.msra.mxu0 %v3199
    %4397 = vmatprep.subr.bf16.mxu0 %v3208
    %4398 = vmatpush1.bf16.msra.mxu0 %v3207
    %4399 = vmatprep.subr.bf16.mxu0 %v3216
    %4400 = vmatpush1.bf16.msra.mxu0 %v3215
    %4401 = vmatprep.subr.bf16.mxu0 %v3224
    %4402 = vmatpush1.bf16.msra.mxu0 %v3223
    %4403 = vmatprep.subr.bf16.mxu0 %v3232
    %4404 = vmatpush1.bf16.msra.mxu0 %v3231
    %4405 = vmatprep.subr.bf16.mxu0 %v3240
    %4406 = vmatpush1.bf16.msra.mxu0 %v3239
    %4407 = vmatprep.subr.bf16.mxu0 %v3248
    %4408 = vmatpush1.bf16.msra.mxu0 %v3247
    %4409 = vmatprep.subr.bf16.mxu0 %v3256
    %4410 = vmatpush1.bf16.msra.mxu0 %v3255
    %4411 = vmatprep.subr.bf16.mxu0 %v3264
    %4412 = vmatpush1.bf16.msra.mxu0 %v3263
    %4413 = vmatprep.subr.bf16.mxu0 %v3272
    %4414 = vmatpush1.bf16.msra.mxu0 %v3271
    %4415 = vmatprep.subr.bf16.mxu0 %v3280
    %4416 = vmatpush1.bf16.msra.mxu0 %v3279
    %4417 = vmatprep.subr.bf16.mxu0 %v3288
    %4418 = vmatpush1.bf16.msra.mxu0 %v3287
    %4419 = vmatprep.subr.bf16.mxu0 %v3296
    %4420 = vmatpush1.bf16.msra.mxu0 %v3295
    %4421 = vmatprep.subr.bf16.mxu0 %v3304
    %4422 = vmatpush1.bf16.msra.mxu0 %v3303
    %4423 = vmatprep.mubr.bf16.mxu0 %v1085
    %4424 = vmatmul.mubr.bf16.gmra.mrb[0].mxu0 %v1084
    %v4425 = vpop.f32.mrb[0].mxu0
    %v4426 = vadd.f32 %v4385, %v4425
    %v4427 = vpop.f32.mrb[0].mxu0
    %v4428 = vadd.f32 %v4387, %v4427
    %v4429 = vpop.f32.mrb[0].mxu0
    %v4430 = vpop.f32.mrb[0].mxu0
    %4431 = vdwg.mxu0
    %4432 = vmatprep.subr.bf16.mxu0 %v3312
    %4433 = vmatpush1.bf16.msra.mxu0 %v3311
    %4434 = vmatprep.subr.bf16.mxu0 %v3320
    %4435 = vmatpush1.bf16.msra.mxu0 %v3319
    %4436 = vmatprep.subr.bf16.mxu0 %v3328
    %4437 = vmatpush1.bf16.msra.mxu0 %v3327
    %4438 = vmatprep.subr.bf16.mxu0 %v3336
    %4439 = vmatpush1.bf16.msra.mxu0 %v3335
    %4440 = vmatprep.subr.bf16.mxu0 %v3344
    %4441 = vmatpush1.bf16.msra.mxu0 %v3343
    %4442 = vmatprep.subr.bf16.mxu0 %v3352
    %4443 = vmatpush1.bf16.msra.mxu0 %v3351
    %4444 = vmatprep.subr.bf16.mxu0 %v3360
    %4445 = vmatpush1.bf16.msra.mxu0 %v3359
    %4446 = vmatprep.subr.bf16.mxu0 %v3368
    %4447 = vmatpush1.bf16.msra.mxu0 %v3367
    %4448 = vmatprep.subr.bf16.mxu0 0
    %4449 = vmatpush1.bf16.msra.mxu0 0
    %4450 = vmatprep.subr.bf16.mxu0 0
    %4451 = vmatpush1.bf16.msra.mxu0 0
    %4452 = vmatprep.subr.bf16.mxu0 0
    %4453 = vmatpush1.bf16.msra.mxu0 0
    %4454 = vmatprep.subr.bf16.mxu0 0
    %4455 = vmatpush1.bf16.msra.mxu0 0
    %4456 = vmatprep.subr.bf16.mxu0 0
    %4457 = vmatpush1.bf16.msra.mxu0 0
    %4458 = vmatprep.subr.bf16.mxu0 0
    %4459 = vmatpush1.bf16.msra.mxu0 0
    %4460 = vmatprep.subr.bf16.mxu0 0
    %4461 = vmatpush1.bf16.msra.mxu0 0
    %4462 = vmatprep.subr.bf16.mxu0 0
    %4463 = vmatpush1.bf16.msra.mxu0 0
    %4464 = vmatprep.mubr.bf16.mxu0 0
    %4465 = vmatmul.mubr.bf16.gmra.mrb[0].mxu0 %v1086
    %v4466 = vpop.f32.mrb[0].mxu0
    %v4467 = vadd.f32 %v4426, %v4466
    %v4468 = vpop.f32.mrb[0].mxu0
    %v4469 = vadd.f32 %v4428, %v4468
    %v4470 = vpop.f32.mrb[0].mxu0
    %v4471 = vpop.f32.mrb[0].mxu0
    %4472 = vdwg.mxu0
    %v4473 = vmax.f32 %v3975, 0.0
    %v4474 = vmax.f32 %v3977, 0.0
    %v4475 = vmax.f32 %v4139, 0.0
    %v4476 = vmax.f32 %v4141, 0.0
    %v4477 = vmax.f32 %v4303, 0.0
    %v4478 = vmax.f32 %v4305, 0.0
    %v4479 = vmax.f32 %v4467, 0.0
    %v4480 = vmax.f32 %v4469, 0.0
    %v4481 = vpack.c.bf16 %v4473, %v4473
    %v4482 = vpack.c.bf16 %v4474, %v4474
    %v4483 = vpack.c.bf16 %v4475, %v4475
    %v4484 = vpack.c.bf16 %v4476, %v4476
    %v4485 = vpack.c.bf16 %v4477, %v4477
    %v4486 = vpack.c.bf16 %v4478, %v4478
    %v4487 = vpack.c.bf16 %v4479, %v4479
    %v4488 = vpack.c.bf16 %v4480, %v4480
    %v4489 = vld [vmem:[#allocation9] sm:$0xff]
    %v4490 = vld [vmem:[#allocation9 + $0x8] sm:$0xff]
    %v4491 = vld [vmem:[#allocation9 + $0x10] sm:$0xff]
    %v4492 = vld [vmem:[#allocation9 + $0x18] sm:$0xff]
    %v4493 = vld [vmem:[#allocation9 + $0x20] sm:$0xff]
    %v4494 = vld [vmem:[#allocation9 + $0x28] sm:$0xff]
    %v4495 = vld [vmem:[#allocation9 + $0x30] sm:$0xff]
    %v4496 = vld [vmem:[#allocation9 + $0x38] sm:$0xff]
    %v4497 = vld [vmem:[#allocation9 + $0x40] sm:$0xff]
    %v4498 = vld [vmem:[#allocation9 + $0x48] sm:$0xff]
    %v4499 = vld [vmem:[#allocation9 + $0x50] sm:$0xff]
    %v4500 = vld [vmem:[#allocation9 + $0x58] sm:$0xff]
    %v4501 = vld [vmem:[#allocation9 + $0x60] sm:$0xff]
    %v4502 = vld [vmem:[#allocation9 + $0x68] sm:$0xff]
    %v4503 = vld [vmem:[#allocation9 + $0x70] sm:$0xff]
    %v4504 = vld [vmem:[#allocation9 + $0x78] sm:$0xff]
    %v4505 = vld [vmem:[#allocation9 + $0x80] sm:$0xff]
    %v4506 = vld [vmem:[#allocation9 + $0x88] sm:$0xff]
    %v4507 = vld [vmem:[#allocation9 + $0x90] sm:$0xff]
    %v4508 = vld [vmem:[#allocation9 + $0x98] sm:$0xff]
    %v4509 = vld [vmem:[#allocation9 + $0xa0] sm:$0xff]
    %v4510 = vld [vmem:[#allocation9 + $0xa8] sm:$0xff]
    %v4511 = vld [vmem:[#allocation9 + $0xb0] sm:$0xff]
    %v4512 = vld [vmem:[#allocation9 + $0xb8] sm:$0xff]
    %v4513 = vld [vmem:[#allocation9 + $0xc0] sm:$0xff]
    %v4514 = vld [vmem:[#allocation9 + $0xc8] sm:$0xff]
    %v4515 = vld [vmem:[#allocation9 + $0xd0] sm:$0xff]
    %v4516 = vld [vmem:[#allocation9 + $0xd8] sm:$0xff]
    %v4517 = vld [vmem:[#allocation9 + $0xe0] sm:$0xff]
    %v4518 = vld [vmem:[#allocation9 + $0xe8] sm:$0xff]
    %v4519 = vld [vmem:[#allocation9 + $0xf0] sm:$0xff]
    %v4520 = vld [vmem:[#allocation9 + $0xf8] sm:$0xff]
    %v4521 = vld [vmem:[#allocation9 + $0x100] sm:$0xff]
    %v4522 = vld [vmem:[#allocation9 + $0x108] sm:$0xff]
    %v4523 = vld [vmem:[#allocation9 + $0x110] sm:$0xff]
    %v4524 = vld [vmem:[#allocation9 + $0x118] sm:$0xff]
    %v4525 = vld [vmem:[#allocation9 + $0x120] sm:$0xff]
    %v4526 = vld [vmem:[#allocation9 + $0x128] sm:$0xff]
    %v4527 = vld [vmem:[#allocation9 + $0x130] sm:$0xff]
    %v4528 = vld [vmem:[#allocation9 + $0x138] sm:$0xff]
    %v4529 = vld [vmem:[#allocation9 + $0x140] sm:$0xff]
    %v4530 = vld [vmem:[#allocation9 + $0x148] sm:$0xff]
    %v4531 = vld [vmem:[#allocation9 + $0x150] sm:$0xff]
    %v4532 = vld [vmem:[#allocation9 + $0x158] sm:$0xff]
    %v4533 = vld [vmem:[#allocation9 + $0x160] sm:$0xff]
    %v4534 = vld [vmem:[#allocation9 + $0x168] sm:$0xff]
    %v4535 = vld [vmem:[#allocation9 + $0x170] sm:$0xff]
    %v4536 = vld [vmem:[#allocation9 + $0x178] sm:$0xff]
    %v4537 = vld [vmem:[#allocation9 + $0x180] sm:$0xff]
    %v4538 = vld [vmem:[#allocation9 + $0x188] sm:$0xff]
    %v4539 = vld [vmem:[#allocation9 + $0x190] sm:$0xff]
    %v4540 = vld [vmem:[#allocation9 + $0x198] sm:$0xff]
    %v4541 = vld [vmem:[#allocation9 + $0x1a0] sm:$0xff]
    %v4542 = vld [vmem:[#allocation9 + $0x1a8] sm:$0xff]
    %v4543 = vld [vmem:[#allocation9 + $0x1b0] sm:$0xff]
    %v4544 = vld [vmem:[#allocation9 + $0x1b8] sm:$0xff]
    %v4545 = vld [vmem:[#allocation9 + $0x1c0] sm:$0xff]
    %v4546 = vld [vmem:[#allocation9 + $0x1c8] sm:$0xff]
    %v4547 = vld [vmem:[#allocation9 + $0x1d0] sm:$0xff]
    %v4548 = vld [vmem:[#allocation9 + $0x1d8] sm:$0xff]
    %v4549 = vld [vmem:[#allocation9 + $0x1e0] sm:$0xff]
    %v4550 = vld [vmem:[#allocation9 + $0x1e8] sm:$0xff]
    %v4551 = vld [vmem:[#allocation9 + $0x1f0] sm:$0xff]
    %v4552 = vld [vmem:[#allocation9 + $0x1f8] sm:$0xff]
    %v4553 = vld [vmem:[#allocation9 + $0x200] sm:$0xff]
    %v4554 = vld [vmem:[#allocation9 + $0x208] sm:$0xff]
    %v4555 = vld [vmem:[#allocation9 + $0x210] sm:$0xff]
    %v4556 = vld [vmem:[#allocation9 + $0x218] sm:$0xff]
    %v4557 = vld [vmem:[#allocation9 + $0x220] sm:$0xff]
    %v4558 = vld [vmem:[#allocation9 + $0x228] sm:$0xff]
    %v4559 = vld [vmem:[#allocation9 + $0x230] sm:$0xff]
    %v4560 = vld [vmem:[#allocation9 + $0x238] sm:$0xff]
    %v4561 = vld [vmem:[#allocation9 + $0x240] sm:$0xff]
    %v4562 = vld [vmem:[#allocation9 + $0x248] sm:$0xff]
    %v4563 = vld [vmem:[#allocation9 + $0x250] sm:$0xff]
    %v4564 = vld [vmem:[#allocation9 + $0x258] sm:$0xff]
    %v4565 = vld [vmem:[#allocation9 + $0x260] sm:$0xff]
    %v4566 = vld [vmem:[#allocation9 + $0x268] sm:$0xff]
    %v4567 = vld [vmem:[#allocation9 + $0x270] sm:$0xff]
    %v4568 = vld [vmem:[#allocation9 + $0x278] sm:$0xff]
    %v4569 = vld [vmem:[#allocation9 + $0x280] sm:$0xff]
    %v4570 = vld [vmem:[#allocation9 + $0x288] sm:$0xff]
    %v4571 = vld [vmem:[#allocation9 + $0x290] sm:$0xff]
    %v4572 = vld [vmem:[#allocation9 + $0x298] sm:$0xff]
    %v4573 = vld [vmem:[#allocation9 + $0x2a0] sm:$0xff]
    %v4574 = vld [vmem:[#allocation9 + $0x2a8] sm:$0xff]
    %v4575 = vld [vmem:[#allocation9 + $0x2b0] sm:$0xff]
    %v4576 = vld [vmem:[#allocation9 + $0x2b8] sm:$0xff]
    %v4577 = vld [vmem:[#allocation9 + $0x2c0] sm:$0xff]
    %v4578 = vld [vmem:[#allocation9 + $0x2c8] sm:$0xff]
    %v4579 = vld [vmem:[#allocation9 + $0x2d0] sm:$0xff]
    %v4580 = vld [vmem:[#allocation9 + $0x2d8] sm:$0xff]
    %v4581 = vld [vmem:[#allocation9 + $0x2e0] sm:$0xff]
    %v4582 = vld [vmem:[#allocation9 + $0x2e8] sm:$0xff]
    %v4583 = vld [vmem:[#allocation9 + $0x2f0] sm:$0xff]
    %v4584 = vld [vmem:[#allocation9 + $0x2f8] sm:$0xff]
    %v4585 = vld [vmem:[#allocation9 + $0x300] sm:$0xff]
    %v4586 = vld [vmem:[#allocation9 + $0x308] sm:$0xff]
    %v4587 = vld [vmem:[#allocation9 + $0x310] sm:$0xff]
    %v4588 = vld [vmem:[#allocation9 + $0x318] sm:$0xff]
    %v4589 = vld [vmem:[#allocation9 + $0x320] sm:$0xff]
    %v4590 = vld [vmem:[#allocation9 + $0x328] sm:$0xff]
    %v4591 = vld [vmem:[#allocation9 + $0x330] sm:$0xff]
    %v4592 = vld [vmem:[#allocation9 + $0x338] sm:$0xff]
    %v4593 = vld [vmem:[#allocation9 + $0x340] sm:$0xff]
    %v4594 = vld [vmem:[#allocation9 + $0x348] sm:$0xff]
    %v4595 = vld [vmem:[#allocation9 + $0x350] sm:$0xff]
    %v4596 = vld [vmem:[#allocation9 + $0x358] sm:$0xff]
    %v4597 = vld [vmem:[#allocation9 + $0x360] sm:$0xff]
    %v4598 = vld [vmem:[#allocation9 + $0x368] sm:$0xff]
    %v4599 = vld [vmem:[#allocation9 + $0x370] sm:$0xff]
    %v4600 = vld [vmem:[#allocation9 + $0x378] sm:$0xff]
    %v4601 = vld [vmem:[#allocation9 + $0x380] sm:$0xff]
    %v4602 = vld [vmem:[#allocation9 + $0x388] sm:$0xff]
    %v4603 = vld [vmem:[#allocation9 + $0x390] sm:$0xff]
    %v4604 = vld [vmem:[#allocation9 + $0x398] sm:$0xff]
    %v4605 = vld [vmem:[#allocation9 + $0x3a0] sm:$0xff]
    %v4606 = vld [vmem:[#allocation9 + $0x3a8] sm:$0xff]
    %v4607 = vld [vmem:[#allocation9 + $0x3b0] sm:$0xff]
    %v4608 = vld [vmem:[#allocation9 + $0x3b8] sm:$0xff]
    %v4609 = vld [vmem:[#allocation9 + $0x3c0] sm:$0xff]
    %v4610 = vld [vmem:[#allocation9 + $0x3c8] sm:$0xff]
    %v4611 = vld [vmem:[#allocation9 + $0x3d0] sm:$0xff]
    %v4612 = vld [vmem:[#allocation9 + $0x3d8] sm:$0xff]
    %v4613 = vld [vmem:[#allocation9 + $0x3e0] sm:$0xff]
    %v4614 = vld [vmem:[#allocation9 + $0x3e8] sm:$0xff]
    %v4615 = vld [vmem:[#allocation9 + $0x3f0] sm:$0xff]
    %v4616 = vld [vmem:[#allocation9 + $0x3f8] sm:$0xff]
    %v4617 = vld [vmem:[#allocation9 + $0x400] sm:$0xff]
    %v4618 = vld [vmem:[#allocation9 + $0x408] sm:$0xff]
    %v4619 = vld [vmem:[#allocation9 + $0x410] sm:$0xff]
    %v4620 = vld [vmem:[#allocation9 + $0x418] sm:$0xff]
    %v4621 = vld [vmem:[#allocation9 + $0x420] sm:$0xff]
    %v4622 = vld [vmem:[#allocation9 + $0x428] sm:$0xff]
    %v4623 = vld [vmem:[#allocation9 + $0x430] sm:$0xff]
    %v4624 = vld [vmem:[#allocation9 + $0x438] sm:$0xff]
    %v4625 = vld [vmem:[#allocation9 + $0x440] sm:$0xff]
    %v4626 = vld [vmem:[#allocation9 + $0x448] sm:$0xff]
    %v4627 = vld [vmem:[#allocation9 + $0x450] sm:$0xff]
    %v4628 = vld [vmem:[#allocation9 + $0x458] sm:$0xff]
    %v4629 = vld [vmem:[#allocation9 + $0x460] sm:$0xff]
    %v4630 = vld [vmem:[#allocation9 + $0x468] sm:$0xff]
    %v4631 = vld [vmem:[#allocation9 + $0x470] sm:$0xff]
    %v4632 = vld [vmem:[#allocation9 + $0x478] sm:$0xff]
    %v4633 = vld [vmem:[#allocation9 + $0x480] sm:$0xff]
    %v4634 = vld [vmem:[#allocation9 + $0x488] sm:$0xff]
    %v4635 = vld [vmem:[#allocation9 + $0x490] sm:$0xff]
    %v4636 = vld [vmem:[#allocation9 + $0x498] sm:$0xff]
    %v4637 = vld [vmem:[#allocation9 + $0x4a0] sm:$0xff]
    %v4638 = vld [vmem:[#allocation9 + $0x4a8] sm:$0xff]
    %v4639 = vld [vmem:[#allocation9 + $0x4b0] sm:$0xff]
    %v4640 = vld [vmem:[#allocation9 + $0x4b8] sm:$0xff]
    %v4641 = vld [vmem:[#allocation9 + $0x4c0] sm:$0xff]
    %v4642 = vld [vmem:[#allocation9 + $0x4c8] sm:$0xff]
    %v4643 = vld [vmem:[#allocation9 + $0x4d0] sm:$0xff]
    %v4644 = vld [vmem:[#allocation9 + $0x4d8] sm:$0xff]
    %v4645 = vld [vmem:[#allocation9 + $0x4e0] sm:$0xff]
    %v4646 = vld [vmem:[#allocation9 + $0x4e8] sm:$0xff]
    %v4647 = vld [vmem:[#allocation9 + $0x4f0] sm:$0xff]
    %v4648 = vld [vmem:[#allocation9 + $0x4f8] sm:$0xff]
    %v4649 = vld [vmem:[#allocation9 + $0x500] sm:$0xff]
    %v4650 = vld [vmem:[#allocation9 + $0x508] sm:$0xff]
    %v4651 = vld [vmem:[#allocation9 + $0x510] sm:$0xff]
    %v4652 = vld [vmem:[#allocation9 + $0x518] sm:$0xff]
    %v4653 = vld [vmem:[#allocation9 + $0x520] sm:$0xff]
    %v4654 = vld [vmem:[#allocation9 + $0x528] sm:$0xff]
    %v4655 = vld [vmem:[#allocation9 + $0x530] sm:$0xff]
    %v4656 = vld [vmem:[#allocation9 + $0x538] sm:$0xff]
    %v4657 = vld [vmem:[#allocation9 + $0x540] sm:$0xff]
    %v4658 = vld [vmem:[#allocation9 + $0x548] sm:$0xff]
    %v4659 = vld [vmem:[#allocation9 + $0x550] sm:$0xff]
    %v4660 = vld [vmem:[#allocation9 + $0x558] sm:$0xff]
    %v4661 = vld [vmem:[#allocation9 + $0x560] sm:$0xff]
    %v4662 = vld [vmem:[#allocation9 + $0x568] sm:$0xff]
    %v4663 = vld [vmem:[#allocation9 + $0x570] sm:$0xff]
    %v4664 = vld [vmem:[#allocation9 + $0x578] sm:$0xff]
    %v4665 = vld [vmem:[#allocation9 + $0x580] sm:$0xff]
    %v4666 = vld [vmem:[#allocation9 + $0x588] sm:$0xff]
    %v4667 = vld [vmem:[#allocation9 + $0x590] sm:$0xff]
    %v4668 = vld [vmem:[#allocation9 + $0x598] sm:$0xff]
    %v4669 = vld [vmem:[#allocation9 + $0x5a0] sm:$0xff]
    %v4670 = vld [vmem:[#allocation9 + $0x5a8] sm:$0xff]
    %v4671 = vld [vmem:[#allocation9 + $0x5b0] sm:$0xff]
    %v4672 = vld [vmem:[#allocation9 + $0x5b8] sm:$0xff]
    %v4673 = vld [vmem:[#allocation9 + $0x5c0] sm:$0xff]
    %v4674 = vld [vmem:[#allocation9 + $0x5c8] sm:$0xff]
    %v4675 = vld [vmem:[#allocation9 + $0x5d0] sm:$0xff]
    %v4676 = vld [vmem:[#allocation9 + $0x5d8] sm:$0xff]
    %v4677 = vld [vmem:[#allocation9 + $0x5e0] sm:$0xff]
    %v4678 = vld [vmem:[#allocation9 + $0x5e8] sm:$0xff]
    %v4679 = vld [vmem:[#allocation9 + $0x5f0] sm:$0xff]
    %v4680 = vld [vmem:[#allocation9 + $0x5f8] sm:$0xff]
    %v4681 = vld [vmem:[#allocation9 + $0x600] sm:$0xff]
    %v4682 = vld [vmem:[#allocation9 + $0x608] sm:$0xff]
    %v4683 = vld [vmem:[#allocation9 + $0x610] sm:$0xff]
    %v4684 = vld [vmem:[#allocation9 + $0x618] sm:$0xff]
    %v4685 = vld [vmem:[#allocation9 + $0x620] sm:$0xff]
    %v4686 = vld [vmem:[#allocation9 + $0x628] sm:$0xff]
    %v4687 = vld [vmem:[#allocation9 + $0x630] sm:$0xff]
    %v4688 = vld [vmem:[#allocation9 + $0x638] sm:$0xff]
    %v4689 = vld [vmem:[#allocation9 + $0x640] sm:$0xff]
    %v4690 = vld [vmem:[#allocation9 + $0x648] sm:$0xff]
    %v4691 = vld [vmem:[#allocation9 + $0x650] sm:$0xff]
    %v4692 = vld [vmem:[#allocation9 + $0x658] sm:$0xff]
    %v4693 = vld [vmem:[#allocation9 + $0x660] sm:$0xff]
    %v4694 = vld [vmem:[#allocation9 + $0x668] sm:$0xff]
    %v4695 = vld [vmem:[#allocation9 + $0x670] sm:$0xff]
    %v4696 = vld [vmem:[#allocation9 + $0x678] sm:$0xff]
    %v4697 = vld [vmem:[#allocation9 + $0x680] sm:$0xff]
    %v4698 = vld [vmem:[#allocation9 + $0x688] sm:$0xff]
    %v4699 = vld [vmem:[#allocation9 + $0x690] sm:$0xff]
    %v4700 = vld [vmem:[#allocation9 + $0x698] sm:$0xff]
    %v4701 = vld [vmem:[#allocation9 + $0x6a0] sm:$0xff]
    %v4702 = vld [vmem:[#allocation9 + $0x6a8] sm:$0xff]
    %v4703 = vld [vmem:[#allocation9 + $0x6b0] sm:$0xff]
    %v4704 = vld [vmem:[#allocation9 + $0x6b8] sm:$0xff]
    %v4705 = vld [vmem:[#allocation9 + $0x6c0] sm:$0xff]
    %v4706 = vld [vmem:[#allocation9 + $0x6c8] sm:$0xff]
    %v4707 = vld [vmem:[#allocation9 + $0x6d0] sm:$0xff]
    %v4708 = vld [vmem:[#allocation9 + $0x6d8] sm:$0xff]
    %v4709 = vld [vmem:[#allocation9 + $0x6e0] sm:$0xff]
    %v4710 = vld [vmem:[#allocation9 + $0x6e8] sm:$0xff]
    %v4711 = vld [vmem:[#allocation9 + $0x6f0] sm:$0xff]
    %v4712 = vld [vmem:[#allocation9 + $0x6f8] sm:$0xff]
    %v4713 = vld [vmem:[#allocation9 + $0x700] sm:$0xff]
    %v4714 = vld [vmem:[#allocation9 + $0x708] sm:$0xff]
    %v4715 = vld [vmem:[#allocation9 + $0x710] sm:$0xff]
    %v4716 = vld [vmem:[#allocation9 + $0x718] sm:$0xff]
    %v4717 = vld [vmem:[#allocation9 + $0x720] sm:$0xff]
    %v4718 = vld [vmem:[#allocation9 + $0x728] sm:$0xff]
    %v4719 = vld [vmem:[#allocation9 + $0x730] sm:$0xff]
    %v4720 = vld [vmem:[#allocation9 + $0x738] sm:$0xff]
    %v4721 = vld [vmem:[#allocation9 + $0x740] sm:$0xff]
    %v4722 = vld [vmem:[#allocation9 + $0x748] sm:$0xff]
    %v4723 = vld [vmem:[#allocation9 + $0x750] sm:$0xff]
    %v4724 = vld [vmem:[#allocation9 + $0x758] sm:$0xff]
    %v4725 = vld [vmem:[#allocation9 + $0x760] sm:$0xff]
    %v4726 = vld [vmem:[#allocation9 + $0x768] sm:$0xff]
    %v4727 = vld [vmem:[#allocation9 + $0x770] sm:$0xff]
    %v4728 = vld [vmem:[#allocation9 + $0x778] sm:$0xff]
    %v4729 = vld [vmem:[#allocation9 + $0x780] sm:$0xff]
    %v4730 = vld [vmem:[#allocation9 + $0x788] sm:$0xff]
    %v4731 = vld [vmem:[#allocation9 + $0x790] sm:$0xff]
    %v4732 = vld [vmem:[#allocation9 + $0x798] sm:$0xff]
    %v4733 = vld [vmem:[#allocation9 + $0x7a0] sm:$0xff]
    %v4734 = vld [vmem:[#allocation9 + $0x7a8] sm:$0xff]
    %v4735 = vld [vmem:[#allocation9 + $0x7b0] sm:$0xff]
    %v4736 = vld [vmem:[#allocation9 + $0x7b8] sm:$0xff]
    %v4737 = vld [vmem:[#allocation9 + $0x7c0] sm:$0xff]
    %v4738 = vld [vmem:[#allocation9 + $0x7c8] sm:$0xff]
    %v4739 = vld [vmem:[#allocation9 + $0x7d0] sm:$0xff]
    %v4740 = vld [vmem:[#allocation9 + $0x7d8] sm:$0xff]
    %v4741 = vld [vmem:[#allocation9 + $0x7e0] sm:$0xff]
    %v4742 = vld [vmem:[#allocation9 + $0x7e8] sm:$0xff]
    %v4743 = vld [vmem:[#allocation9 + $0x7f0] sm:$0xff]
    %v4744 = vld [vmem:[#allocation9 + $0x7f8] sm:$0xff]
    %v4745 = vld [vmem:[#allocation10] sm:$0xf]
    %v4747 = vlaneseq
    %v4748 = vshrl.u32 %v4747, 7
    %v4749 = vsub.s32 0, %v4748
    %v4750 = vrot.slane %v4745, %v4749
    %v4751 = vlaneseq
    %v4752 = vshrl.u32 %v4751, 7
    %v4753 = vsub.s32 1, %v4752
    %v4754 = vrot.slane %v4745, %v4753
    %v4755 = vlaneseq
    %v4756 = vshrl.u32 %v4755, 7
    %v4757 = vsub.s32 2, %v4756
    %v4758 = vrot.slane %v4745, %v4757
    %v4759 = vlaneseq
    %v4760 = vshrl.u32 %v4759, 7
    %v4761 = vsub.s32 3, %v4760
    %v4762 = vrot.slane %v4745, %v4761
    %v5023 = vunpack.c.l.b16 %v4489
    %v5024 = vunpack.c.h.b16 %v4489
    %v5025 = vunpack.c.l.b16 %v4490
    %v5026 = vunpack.c.h.b16 %v4490
    %v5027 = vunpack.c.l.b16 %v4491
    %v5028 = vunpack.c.h.b16 %v4491
    %v5029 = vunpack.c.l.b16 %v4492
    %v5030 = vunpack.c.h.b16 %v4492
    %v5031 = vunpack.c.l.b16 %v4493
    %v5032 = vunpack.c.h.b16 %v4493
    %v5033 = vunpack.c.l.b16 %v4494
    %v5034 = vunpack.c.h.b16 %v4494
    %v5035 = vunpack.c.l.b16 %v4495
    %v5036 = vunpack.c.h.b16 %v4495
    %v5037 = vunpack.c.l.b16 %v4496
    %v5038 = vunpack.c.h.b16 %v4496
    %v5039 = vunpack.c.l.b16 %v4497
    %v5040 = vunpack.c.h.b16 %v4497
    %v5041 = vunpack.c.l.b16 %v4498
    %v5042 = vunpack.c.h.b16 %v4498
    %v5043 = vunpack.c.l.b16 %v4499
    %v5044 = vunpack.c.h.b16 %v4499
    %v5045 = vunpack.c.l.b16 %v4500
    %v5046 = vunpack.c.h.b16 %v4500
    %v5047 = vunpack.c.l.b16 %v4501
    %v5048 = vunpack.c.h.b16 %v4501
    %v5049 = vunpack.c.l.b16 %v4502
    %v5050 = vunpack.c.h.b16 %v4502
    %v5051 = vunpack.c.l.b16 %v4503
    %v5052 = vunpack.c.h.b16 %v4503
    %v5053 = vunpack.c.l.b16 %v4504
    %v5054 = vunpack.c.h.b16 %v4504
    %v5055 = vunpack.c.l.b16 %v4505
    %v5056 = vunpack.c.h.b16 %v4505
    %v5057 = vunpack.c.l.b16 %v4506
    %v5058 = vunpack.c.h.b16 %v4506
    %v5059 = vunpack.c.l.b16 %v4507
    %v5060 = vunpack.c.h.b16 %v4507
    %v5061 = vunpack.c.l.b16 %v4508
    %v5062 = vunpack.c.h.b16 %v4508
    %v5063 = vunpack.c.l.b16 %v4509
    %v5064 = vunpack.c.h.b16 %v4509
    %v5065 = vunpack.c.l.b16 %v4510
    %v5066 = vunpack.c.h.b16 %v4510
    %v5067 = vunpack.c.l.b16 %v4511
    %v5068 = vunpack.c.h.b16 %v4511
    %v5069 = vunpack.c.l.b16 %v4512
    %v5070 = vunpack.c.h.b16 %v4512
    %v5071 = vunpack.c.l.b16 %v4513
    %v5072 = vunpack.c.h.b16 %v4513
    %v5073 = vunpack.c.l.b16 %v4514
    %v5074 = vunpack.c.h.b16 %v4514
    %v5075 = vunpack.c.l.b16 %v4515
    %v5076 = vunpack.c.h.b16 %v4515
    %v5077 = vunpack.c.l.b16 %v4516
    %v5078 = vunpack.c.h.b16 %v4516
    %v5079 = vunpack.c.l.b16 %v4517
    %v5080 = vunpack.c.h.b16 %v4517
    %v5081 = vunpack.c.l.b16 %v4518
    %v5082 = vunpack.c.h.b16 %v4518
    %v5083 = vunpack.c.l.b16 %v4519
    %v5084 = vunpack.c.h.b16 %v4519
    %v5085 = vunpack.c.l.b16 %v4520
    %v5086 = vunpack.c.h.b16 %v4520
    %v5087 = vunpack.c.l.b16 %v4521
    %v5088 = vunpack.c.h.b16 %v4521
    %v5089 = vunpack.c.l.b16 %v4522
    %v5090 = vunpack.c.h.b16 %v4522
    %v5091 = vunpack.c.l.b16 %v4523
    %v5092 = vunpack.c.h.b16 %v4523
    %v5093 = vunpack.c.l.b16 %v4524
    %v5094 = vunpack.c.h.b16 %v4524
    %v5095 = vunpack.c.l.b16 %v4525
    %v5096 = vunpack.c.h.b16 %v4525
    %v5097 = vunpack.c.l.b16 %v4526
    %v5098 = vunpack.c.h.b16 %v4526
    %v5099 = vunpack.c.l.b16 %v4527
    %v5100 = vunpack.c.h.b16 %v4527
    %v5101 = vunpack.c.l.b16 %v4528
    %v5102 = vunpack.c.h.b16 %v4528
    %v5103 = vunpack.c.l.b16 %v4529
    %v5104 = vunpack.c.h.b16 %v4529
    %v5105 = vunpack.c.l.b16 %v4530
    %v5106 = vunpack.c.h.b16 %v4530
    %v5107 = vunpack.c.l.b16 %v4531
    %v5108 = vunpack.c.h.b16 %v4531
    %v5109 = vunpack.c.l.b16 %v4532
    %v5110 = vunpack.c.h.b16 %v4532
    %v5111 = vunpack.c.l.b16 %v4533
    %v5112 = vunpack.c.h.b16 %v4533
    %v5113 = vunpack.c.l.b16 %v4534
    %v5114 = vunpack.c.h.b16 %v4534
    %v5115 = vunpack.c.l.b16 %v4535
    %v5116 = vunpack.c.h.b16 %v4535
    %v5117 = vunpack.c.l.b16 %v4536
    %v5118 = vunpack.c.h.b16 %v4536
    %v5119 = vunpack.c.l.b16 %v4537
    %v5120 = vunpack.c.h.b16 %v4537
    %v5121 = vunpack.c.l.b16 %v4538
    %v5122 = vunpack.c.h.b16 %v4538
    %v5123 = vunpack.c.l.b16 %v4539
    %v5124 = vunpack.c.h.b16 %v4539
    %v5125 = vunpack.c.l.b16 %v4540
    %v5126 = vunpack.c.h.b16 %v4540
    %v5127 = vunpack.c.l.b16 %v4541
    %v5128 = vunpack.c.h.b16 %v4541
    %v5129 = vunpack.c.l.b16 %v4542
    %v5130 = vunpack.c.h.b16 %v4542
    %v5131 = vunpack.c.l.b16 %v4543
    %v5132 = vunpack.c.h.b16 %v4543
    %v5133 = vunpack.c.l.b16 %v4544
    %v5134 = vunpack.c.h.b16 %v4544
    %v5135 = vunpack.c.l.b16 %v4545
    %v5136 = vunpack.c.h.b16 %v4545
    %v5137 = vunpack.c.l.b16 %v4546
    %v5138 = vunpack.c.h.b16 %v4546
    %v5139 = vunpack.c.l.b16 %v4547
    %v5140 = vunpack.c.h.b16 %v4547
    %v5141 = vunpack.c.l.b16 %v4548
    %v5142 = vunpack.c.h.b16 %v4548
    %v5143 = vunpack.c.l.b16 %v4549
    %v5144 = vunpack.c.h.b16 %v4549
    %v5145 = vunpack.c.l.b16 %v4550
    %v5146 = vunpack.c.h.b16 %v4550
    %v5147 = vunpack.c.l.b16 %v4551
    %v5148 = vunpack.c.h.b16 %v4551
    %v5149 = vunpack.c.l.b16 %v4552
    %v5150 = vunpack.c.h.b16 %v4552
    %v5151 = vunpack.c.l.b16 %v4553
    %v5152 = vunpack.c.h.b16 %v4553
    %v5153 = vunpack.c.l.b16 %v4554
    %v5154 = vunpack.c.h.b16 %v4554
    %v5155 = vunpack.c.l.b16 %v4555
    %v5156 = vunpack.c.h.b16 %v4555
    %v5157 = vunpack.c.l.b16 %v4556
    %v5158 = vunpack.c.h.b16 %v4556
    %v5159 = vunpack.c.l.b16 %v4557
    %v5160 = vunpack.c.h.b16 %v4557
    %v5161 = vunpack.c.l.b16 %v4558
    %v5162 = vunpack.c.h.b16 %v4558
    %v5163 = vunpack.c.l.b16 %v4559
    %v5164 = vunpack.c.h.b16 %v4559
    %v5165 = vunpack.c.l.b16 %v4560
    %v5166 = vunpack.c.h.b16 %v4560
    %v5167 = vunpack.c.l.b16 %v4561
    %v5168 = vunpack.c.h.b16 %v4561
    %v5169 = vunpack.c.l.b16 %v4562
    %v5170 = vunpack.c.h.b16 %v4562
    %v5171 = vunpack.c.l.b16 %v4563
    %v5172 = vunpack.c.h.b16 %v4563
    %v5173 = vunpack.c.l.b16 %v4564
    %v5174 = vunpack.c.h.b16 %v4564
    %v5175 = vunpack.c.l.b16 %v4565
    %v5176 = vunpack.c.h.b16 %v4565
    %v5177 = vunpack.c.l.b16 %v4566
    %v5178 = vunpack.c.h.b16 %v4566
    %v5179 = vunpack.c.l.b16 %v4567
    %v5180 = vunpack.c.h.b16 %v4567
    %v5181 = vunpack.c.l.b16 %v4568
    %v5182 = vunpack.c.h.b16 %v4568
    %v5183 = vunpack.c.l.b16 %v4569
    %v5184 = vunpack.c.h.b16 %v4569
    %v5185 = vunpack.c.l.b16 %v4570
    %v5186 = vunpack.c.h.b16 %v4570
    %v5187 = vunpack.c.l.b16 %v4571
    %v5188 = vunpack.c.h.b16 %v4571
    %v5189 = vunpack.c.l.b16 %v4572
    %v5190 = vunpack.c.h.b16 %v4572
    %v5191 = vunpack.c.l.b16 %v4573
    %v5192 = vunpack.c.h.b16 %v4573
    %v5193 = vunpack.c.l.b16 %v4574
    %v5194 = vunpack.c.h.b16 %v4574
    %v5195 = vunpack.c.l.b16 %v4575
    %v5196 = vunpack.c.h.b16 %v4575
    %v5197 = vunpack.c.l.b16 %v4576
    %v5198 = vunpack.c.h.b16 %v4576
    %v5199 = vunpack.c.l.b16 %v4577
    %v5200 = vunpack.c.h.b16 %v4577
    %v5201 = vunpack.c.l.b16 %v4578
    %v5202 = vunpack.c.h.b16 %v4578
    %v5203 = vunpack.c.l.b16 %v4579
    %v5204 = vunpack.c.h.b16 %v4579
    %v5205 = vunpack.c.l.b16 %v4580
    %v5206 = vunpack.c.h.b16 %v4580
    %v5207 = vunpack.c.l.b16 %v4581
    %v5208 = vunpack.c.h.b16 %v4581
    %v5209 = vunpack.c.l.b16 %v4582
    %v5210 = vunpack.c.h.b16 %v4582
    %v5211 = vunpack.c.l.b16 %v4583
    %v5212 = vunpack.c.h.b16 %v4583
    %v5213 = vunpack.c.l.b16 %v4584
    %v5214 = vunpack.c.h.b16 %v4584
    %v5215 = vunpack.c.l.b16 %v4585
    %v5216 = vunpack.c.h.b16 %v4585
    %v5217 = vunpack.c.l.b16 %v4586
    %v5218 = vunpack.c.h.b16 %v4586
    %v5219 = vunpack.c.l.b16 %v4587
    %v5220 = vunpack.c.h.b16 %v4587
    %v5221 = vunpack.c.l.b16 %v4588
    %v5222 = vunpack.c.h.b16 %v4588
    %v5223 = vunpack.c.l.b16 %v4589
    %v5224 = vunpack.c.h.b16 %v4589
    %v5225 = vunpack.c.l.b16 %v4590
    %v5226 = vunpack.c.h.b16 %v4590
    %v5227 = vunpack.c.l.b16 %v4591
    %v5228 = vunpack.c.h.b16 %v4591
    %v5229 = vunpack.c.l.b16 %v4592
    %v5230 = vunpack.c.h.b16 %v4592
    %v5231 = vunpack.c.l.b16 %v4593
    %v5232 = vunpack.c.h.b16 %v4593
    %v5233 = vunpack.c.l.b16 %v4594
    %v5234 = vunpack.c.h.b16 %v4594
    %v5235 = vunpack.c.l.b16 %v4595
    %v5236 = vunpack.c.h.b16 %v4595
    %v5237 = vunpack.c.l.b16 %v4596
    %v5238 = vunpack.c.h.b16 %v4596
    %v5239 = vunpack.c.l.b16 %v4597
    %v5240 = vunpack.c.h.b16 %v4597
    %v5241 = vunpack.c.l.b16 %v4598
    %v5242 = vunpack.c.h.b16 %v4598
    %v5243 = vunpack.c.l.b16 %v4599
    %v5244 = vunpack.c.h.b16 %v4599
    %v5245 = vunpack.c.l.b16 %v4600
    %v5246 = vunpack.c.h.b16 %v4600
    %v5247 = vunpack.c.l.b16 %v4601
    %v5248 = vunpack.c.h.b16 %v4601
    %v5249 = vunpack.c.l.b16 %v4602
    %v5250 = vunpack.c.h.b16 %v4602
    %v5251 = vunpack.c.l.b16 %v4603
    %v5252 = vunpack.c.h.b16 %v4603
    %v5253 = vunpack.c.l.b16 %v4604
    %v5254 = vunpack.c.h.b16 %v4604
    %v5255 = vunpack.c.l.b16 %v4605
    %v5256 = vunpack.c.h.b16 %v4605
    %v5257 = vunpack.c.l.b16 %v4606
    %v5258 = vunpack.c.h.b16 %v4606
    %v5259 = vunpack.c.l.b16 %v4607
    %v5260 = vunpack.c.h.b16 %v4607
    %v5261 = vunpack.c.l.b16 %v4608
    %v5262 = vunpack.c.h.b16 %v4608
    %v5263 = vunpack.c.l.b16 %v4609
    %v5264 = vunpack.c.h.b16 %v4609
    %v5265 = vunpack.c.l.b16 %v4610
    %v5266 = vunpack.c.h.b16 %v4610
    %v5267 = vunpack.c.l.b16 %v4611
    %v5268 = vunpack.c.h.b16 %v4611
    %v5269 = vunpack.c.l.b16 %v4612
    %v5270 = vunpack.c.h.b16 %v4612
    %v5271 = vunpack.c.l.b16 %v4613
    %v5272 = vunpack.c.h.b16 %v4613
    %v5273 = vunpack.c.l.b16 %v4614
    %v5274 = vunpack.c.h.b16 %v4614
    %v5275 = vunpack.c.l.b16 %v4615
    %v5276 = vunpack.c.h.b16 %v4615
    %v5277 = vunpack.c.l.b16 %v4616
    %v5278 = vunpack.c.h.b16 %v4616
    %v5279 = vunpack.c.l.b16 %v4617
    %v5280 = vunpack.c.h.b16 %v4617
    %v5281 = vunpack.c.l.b16 %v4618
    %v5282 = vunpack.c.h.b16 %v4618
    %v5283 = vunpack.c.l.b16 %v4619
    %v5284 = vunpack.c.h.b16 %v4619
    %v5285 = vunpack.c.l.b16 %v4620
    %v5286 = vunpack.c.h.b16 %v4620
    %v5287 = vunpack.c.l.b16 %v4621
    %v5288 = vunpack.c.h.b16 %v4621
    %v5289 = vunpack.c.l.b16 %v4622
    %v5290 = vunpack.c.h.b16 %v4622
    %v5291 = vunpack.c.l.b16 %v4623
    %v5292 = vunpack.c.h.b16 %v4623
    %v5293 = vunpack.c.l.b16 %v4624
    %v5294 = vunpack.c.h.b16 %v4624
    %v5295 = vunpack.c.l.b16 %v4625
    %v5296 = vunpack.c.h.b16 %v4625
    %v5297 = vunpack.c.l.b16 %v4626
    %v5298 = vunpack.c.h.b16 %v4626
    %v5299 = vunpack.c.l.b16 %v4627
    %v5300 = vunpack.c.h.b16 %v4627
    %v5301 = vunpack.c.l.b16 %v4628
    %v5302 = vunpack.c.h.b16 %v4628
    %v5303 = vunpack.c.l.b16 %v4629
    %v5304 = vunpack.c.h.b16 %v4629
    %v5305 = vunpack.c.l.b16 %v4630
    %v5306 = vunpack.c.h.b16 %v4630
    %v5307 = vunpack.c.l.b16 %v4631
    %v5308 = vunpack.c.h.b16 %v4631
    %v5309 = vunpack.c.l.b16 %v4632
    %v5310 = vunpack.c.h.b16 %v4632
    %v5311 = vunpack.c.l.b16 %v4633
    %v5312 = vunpack.c.h.b16 %v4633
    %v5313 = vunpack.c.l.b16 %v4634
    %v5314 = vunpack.c.h.b16 %v4634
    %v5315 = vunpack.c.l.b16 %v4635
    %v5316 = vunpack.c.h.b16 %v4635
    %v5317 = vunpack.c.l.b16 %v4636
    %v5318 = vunpack.c.h.b16 %v4636
    %v5319 = vunpack.c.l.b16 %v4637
    %v5320 = vunpack.c.h.b16 %v4637
    %v5321 = vunpack.c.l.b16 %v4638
    %v5322 = vunpack.c.h.b16 %v4638
    %v5323 = vunpack.c.l.b16 %v4639
    %v5324 = vunpack.c.h.b16 %v4639
    %v5325 = vunpack.c.l.b16 %v4640
    %v5326 = vunpack.c.h.b16 %v4640
    %v5327 = vunpack.c.l.b16 %v4641
    %v5328 = vunpack.c.h.b16 %v4641
    %v5329 = vunpack.c.l.b16 %v4642
    %v5330 = vunpack.c.h.b16 %v4642
    %v5331 = vunpack.c.l.b16 %v4643
    %v5332 = vunpack.c.h.b16 %v4643
    %v5333 = vunpack.c.l.b16 %v4644
    %v5334 = vunpack.c.h.b16 %v4644
    %v5335 = vunpack.c.l.b16 %v4645
    %v5336 = vunpack.c.h.b16 %v4645
    %v5337 = vunpack.c.l.b16 %v4646
    %v5338 = vunpack.c.h.b16 %v4646
    %v5339 = vunpack.c.l.b16 %v4647
    %v5340 = vunpack.c.h.b16 %v4647
    %v5341 = vunpack.c.l.b16 %v4648
    %v5342 = vunpack.c.h.b16 %v4648
    %v5343 = vunpack.c.l.b16 %v4649
    %v5344 = vunpack.c.h.b16 %v4649
    %v5345 = vunpack.c.l.b16 %v4650
    %v5346 = vunpack.c.h.b16 %v4650
    %v5347 = vunpack.c.l.b16 %v4651
    %v5348 = vunpack.c.h.b16 %v4651
    %v5349 = vunpack.c.l.b16 %v4652
    %v5350 = vunpack.c.h.b16 %v4652
    %v5351 = vunpack.c.l.b16 %v4653
    %v5352 = vunpack.c.h.b16 %v4653
    %v5353 = vunpack.c.l.b16 %v4654
    %v5354 = vunpack.c.h.b16 %v4654
    %v5355 = vunpack.c.l.b16 %v4655
    %v5356 = vunpack.c.h.b16 %v4655
    %v5357 = vunpack.c.l.b16 %v4656
    %v5358 = vunpack.c.h.b16 %v4656
    %v5359 = vunpack.c.l.b16 %v4657
    %v5360 = vunpack.c.h.b16 %v4657
    %v5361 = vunpack.c.l.b16 %v4658
    %v5362 = vunpack.c.h.b16 %v4658
    %v5363 = vunpack.c.l.b16 %v4659
    %v5364 = vunpack.c.h.b16 %v4659
    %v5365 = vunpack.c.l.b16 %v4660
    %v5366 = vunpack.c.h.b16 %v4660
    %v5367 = vunpack.c.l.b16 %v4661
    %v5368 = vunpack.c.h.b16 %v4661
    %v5369 = vunpack.c.l.b16 %v4662
    %v5370 = vunpack.c.h.b16 %v4662
    %v5371 = vunpack.c.l.b16 %v4663
    %v5372 = vunpack.c.h.b16 %v4663
    %v5373 = vunpack.c.l.b16 %v4664
    %v5374 = vunpack.c.h.b16 %v4664
    %v5375 = vunpack.c.l.b16 %v4665
    %v5376 = vunpack.c.h.b16 %v4665
    %v5377 = vunpack.c.l.b16 %v4666
    %v5378 = vunpack.c.h.b16 %v4666
    %v5379 = vunpack.c.l.b16 %v4667
    %v5380 = vunpack.c.h.b16 %v4667
    %v5381 = vunpack.c.l.b16 %v4668
    %v5382 = vunpack.c.h.b16 %v4668
    %v5383 = vunpack.c.l.b16 %v4669
    %v5384 = vunpack.c.h.b16 %v4669
    %v5385 = vunpack.c.l.b16 %v4670
    %v5386 = vunpack.c.h.b16 %v4670
    %v5387 = vunpack.c.l.b16 %v4671
    %v5388 = vunpack.c.h.b16 %v4671
    %v5389 = vunpack.c.l.b16 %v4672
    %v5390 = vunpack.c.h.b16 %v4672
    %v5391 = vunpack.c.l.b16 %v4673
    %v5392 = vunpack.c.h.b16 %v4673
    %v5393 = vunpack.c.l.b16 %v4674
    %v5394 = vunpack.c.h.b16 %v4674
    %v5395 = vunpack.c.l.b16 %v4675
    %v5396 = vunpack.c.h.b16 %v4675
    %v5397 = vunpack.c.l.b16 %v4676
    %v5398 = vunpack.c.h.b16 %v4676
    %v5399 = vunpack.c.l.b16 %v4677
    %v5400 = vunpack.c.h.b16 %v4677
    %v5401 = vunpack.c.l.b16 %v4678
    %v5402 = vunpack.c.h.b16 %v4678
    %v5403 = vunpack.c.l.b16 %v4679
    %v5404 = vunpack.c.h.b16 %v4679
    %v5405 = vunpack.c.l.b16 %v4680
    %v5406 = vunpack.c.h.b16 %v4680
    %v5407 = vunpack.c.l.b16 %v4681
    %v5408 = vunpack.c.h.b16 %v4681
    %v5409 = vunpack.c.l.b16 %v4682
    %v5410 = vunpack.c.h.b16 %v4682
    %v5411 = vunpack.c.l.b16 %v4683
    %v5412 = vunpack.c.h.b16 %v4683
    %v5413 = vunpack.c.l.b16 %v4684
    %v5414 = vunpack.c.h.b16 %v4684
    %v5415 = vunpack.c.l.b16 %v4685
    %v5416 = vunpack.c.h.b16 %v4685
    %v5417 = vunpack.c.l.b16 %v4686
    %v5418 = vunpack.c.h.b16 %v4686
    %v5419 = vunpack.c.l.b16 %v4687
    %v5420 = vunpack.c.h.b16 %v4687
    %v5421 = vunpack.c.l.b16 %v4688
    %v5422 = vunpack.c.h.b16 %v4688
    %v5423 = vunpack.c.l.b16 %v4689
    %v5424 = vunpack.c.h.b16 %v4689
    %v5425 = vunpack.c.l.b16 %v4690
    %v5426 = vunpack.c.h.b16 %v4690
    %v5427 = vunpack.c.l.b16 %v4691
    %v5428 = vunpack.c.h.b16 %v4691
    %v5429 = vunpack.c.l.b16 %v4692
    %v5430 = vunpack.c.h.b16 %v4692
    %v5431 = vunpack.c.l.b16 %v4693
    %v5432 = vunpack.c.h.b16 %v4693
    %v5433 = vunpack.c.l.b16 %v4694
    %v5434 = vunpack.c.h.b16 %v4694
    %v5435 = vunpack.c.l.b16 %v4695
    %v5436 = vunpack.c.h.b16 %v4695
    %v5437 = vunpack.c.l.b16 %v4696
    %v5438 = vunpack.c.h.b16 %v4696
    %v5439 = vunpack.c.l.b16 %v4697
    %v5440 = vunpack.c.h.b16 %v4697
    %v5441 = vunpack.c.l.b16 %v4698
    %v5442 = vunpack.c.h.b16 %v4698
    %v5443 = vunpack.c.l.b16 %v4699
    %v5444 = vunpack.c.h.b16 %v4699
    %v5445 = vunpack.c.l.b16 %v4700
    %v5446 = vunpack.c.h.b16 %v4700
    %v5447 = vunpack.c.l.b16 %v4701
    %v5448 = vunpack.c.h.b16 %v4701
    %v5449 = vunpack.c.l.b16 %v4702
    %v5450 = vunpack.c.h.b16 %v4702
    %v5451 = vunpack.c.l.b16 %v4703
    %v5452 = vunpack.c.h.b16 %v4703
    %v5453 = vunpack.c.l.b16 %v4704
    %v5454 = vunpack.c.h.b16 %v4704
    %v5455 = vunpack.c.l.b16 %v4705
    %v5456 = vunpack.c.h.b16 %v4705
    %v5457 = vunpack.c.l.b16 %v4706
    %v5458 = vunpack.c.h.b16 %v4706
    %v5459 = vunpack.c.l.b16 %v4707
    %v5460 = vunpack.c.h.b16 %v4707
    %v5461 = vunpack.c.l.b16 %v4708
    %v5462 = vunpack.c.h.b16 %v4708
    %v5463 = vunpack.c.l.b16 %v4709
    %v5464 = vunpack.c.h.b16 %v4709
    %v5465 = vunpack.c.l.b16 %v4710
    %v5466 = vunpack.c.h.b16 %v4710
    %v5467 = vunpack.c.l.b16 %v4711
    %v5468 = vunpack.c.h.b16 %v4711
    %v5469 = vunpack.c.l.b16 %v4712
    %v5470 = vunpack.c.h.b16 %v4712
    %v5471 = vunpack.c.l.b16 %v4713
    %v5472 = vunpack.c.h.b16 %v4713
    %v5473 = vunpack.c.l.b16 %v4714
    %v5474 = vunpack.c.h.b16 %v4714
    %v5475 = vunpack.c.l.b16 %v4715
    %v5476 = vunpack.c.h.b16 %v4715
    %v5477 = vunpack.c.l.b16 %v4716
    %v5478 = vunpack.c.h.b16 %v4716
    %v5479 = vunpack.c.l.b16 %v4717
    %v5480 = vunpack.c.h.b16 %v4717
    %v5481 = vunpack.c.l.b16 %v4718
    %v5482 = vunpack.c.h.b16 %v4718
    %v5483 = vunpack.c.l.b16 %v4719
    %v5484 = vunpack.c.h.b16 %v4719
    %v5485 = vunpack.c.l.b16 %v4720
    %v5486 = vunpack.c.h.b16 %v4720
    %v5487 = vunpack.c.l.b16 %v4721
    %v5488 = vunpack.c.h.b16 %v4721
    %v5489 = vunpack.c.l.b16 %v4722
    %v5490 = vunpack.c.h.b16 %v4722
    %v5491 = vunpack.c.l.b16 %v4723
    %v5492 = vunpack.c.h.b16 %v4723
    %v5493 = vunpack.c.l.b16 %v4724
    %v5494 = vunpack.c.h.b16 %v4724
    %v5495 = vunpack.c.l.b16 %v4725
    %v5496 = vunpack.c.h.b16 %v4725
    %v5497 = vunpack.c.l.b16 %v4726
    %v5498 = vunpack.c.h.b16 %v4726
    %v5499 = vunpack.c.l.b16 %v4727
    %v5500 = vunpack.c.h.b16 %v4727
    %v5501 = vunpack.c.l.b16 %v4728
    %v5502 = vunpack.c.h.b16 %v4728
    %v5503 = vunpack.c.l.b16 %v4729
    %v5504 = vunpack.c.h.b16 %v4729
    %v5505 = vunpack.c.l.b16 %v4730
    %v5506 = vunpack.c.h.b16 %v4730
    %v5507 = vunpack.c.l.b16 %v4731
    %v5508 = vunpack.c.h.b16 %v4731
    %v5509 = vunpack.c.l.b16 %v4732
    %v5510 = vunpack.c.h.b16 %v4732
    %v5511 = vunpack.c.l.b16 %v4733
    %v5512 = vunpack.c.h.b16 %v4733
    %v5513 = vunpack.c.l.b16 %v4734
    %v5514 = vunpack.c.h.b16 %v4734
    %v5515 = vunpack.c.l.b16 %v4735
    %v5516 = vunpack.c.h.b16 %v4735
    %v5517 = vunpack.c.l.b16 %v4736
    %v5518 = vunpack.c.h.b16 %v4736
    %v5519 = vunpack.c.l.b16 %v4737
    %v5520 = vunpack.c.h.b16 %v4737
    %v5521 = vunpack.c.l.b16 %v4738
    %v5522 = vunpack.c.h.b16 %v4738
    %v5523 = vunpack.c.l.b16 %v4739
    %v5524 = vunpack.c.h.b16 %v4739
    %v5525 = vunpack.c.l.b16 %v4740
    %v5526 = vunpack.c.h.b16 %v4740
    %v5527 = vunpack.c.l.b16 %v4741
    %v5528 = vunpack.c.h.b16 %v4741
    %v5529 = vunpack.c.l.b16 %v4742
    %v5530 = vunpack.c.h.b16 %v4742
    %v5531 = vunpack.c.l.b16 %v4743
    %v5532 = vunpack.c.h.b16 %v4743
    %v5533 = vunpack.c.l.b16 %v4744
    %v5534 = vunpack.c.h.b16 %v4744
    %v5535 = vpack.c.b16 %v5027, %v5023
    %v5536 = vpack.c.b16 %v5028, %v5024
    %v5537 = vpack.c.b16 %v5029, %v5025
    %v5538 = vpack.c.b16 %v5030, %v5026
    %v5539 = vpack.c.b16 %v5035, %v5031
    %v5540 = vpack.c.b16 %v5036, %v5032
    %v5541 = vpack.c.b16 %v5037, %v5033
    %v5542 = vpack.c.b16 %v5038, %v5034
    %v5543 = vpack.c.b16 %v5043, %v5039
    %v5544 = vpack.c.b16 %v5044, %v5040
    %v5545 = vpack.c.b16 %v5045, %v5041
    %v5546 = vpack.c.b16 %v5046, %v5042
    %v5547 = vpack.c.b16 %v5051, %v5047
    %v5548 = vpack.c.b16 %v5052, %v5048
    %v5549 = vpack.c.b16 %v5053, %v5049
    %v5550 = vpack.c.b16 %v5054, %v5050
    %v5551 = vpack.c.b16 %v5059, %v5055
    %v5552 = vpack.c.b16 %v5060, %v5056
    %v5553 = vpack.c.b16 %v5061, %v5057
    %v5554 = vpack.c.b16 %v5062, %v5058
    %v5555 = vpack.c.b16 %v5067, %v5063
    %v5556 = vpack.c.b16 %v5068, %v5064
    %v5557 = vpack.c.b16 %v5069, %v5065
    %v5558 = vpack.c.b16 %v5070, %v5066
    %v5559 = vpack.c.b16 %v5075, %v5071
    %v5560 = vpack.c.b16 %v5076, %v5072
    %v5561 = vpack.c.b16 %v5077, %v5073
    %v5562 = vpack.c.b16 %v5078, %v5074
    %v5563 = vpack.c.b16 %v5083, %v5079
    %v5564 = vpack.c.b16 %v5084, %v5080
    %v5565 = vpack.c.b16 %v5085, %v5081
    %v5566 = vpack.c.b16 %v5086, %v5082
    %v5567 = vpack.c.b16 %v5091, %v5087
    %v5568 = vpack.c.b16 %v5092, %v5088
    %v5569 = vpack.c.b16 %v5093, %v5089
    %v5570 = vpack.c.b16 %v5094, %v5090
    %v5571 = vpack.c.b16 %v5099, %v5095
    %v5572 = vpack.c.b16 %v5100, %v5096
    %v5573 = vpack.c.b16 %v5101, %v5097
    %v5574 = vpack.c.b16 %v5102, %v5098
    %v5575 = vpack.c.b16 %v5107, %v5103
    %v5576 = vpack.c.b16 %v5108, %v5104
    %v5577 = vpack.c.b16 %v5109, %v5105
    %v5578 = vpack.c.b16 %v5110, %v5106
    %v5579 = vpack.c.b16 %v5115, %v5111
    %v5580 = vpack.c.b16 %v5116, %v5112
    %v5581 = vpack.c.b16 %v5117, %v5113
    %v5582 = vpack.c.b16 %v5118, %v5114
    %v5583 = vpack.c.b16 %v5123, %v5119
    %v5584 = vpack.c.b16 %v5124, %v5120
    %v5585 = vpack.c.b16 %v5125, %v5121
    %v5586 = vpack.c.b16 %v5126, %v5122
    %v5587 = vpack.c.b16 %v5131, %v5127
    %v5588 = vpack.c.b16 %v5132, %v5128
    %v5589 = vpack.c.b16 %v5133, %v5129
    %v5590 = vpack.c.b16 %v5134, %v5130
    %v5591 = vpack.c.b16 %v5139, %v5135
    %v5592 = vpack.c.b16 %v5140, %v5136
    %v5593 = vpack.c.b16 %v5141, %v5137
    %v5594 = vpack.c.b16 %v5142, %v5138
    %v5595 = vpack.c.b16 %v5147, %v5143
    %v5596 = vpack.c.b16 %v5148, %v5144
    %v5597 = vpack.c.b16 %v5149, %v5145
    %v5598 = vpack.c.b16 %v5150, %v5146
    %v5599 = vpack.c.b16 %v5155, %v5151
    %v5600 = vpack.c.b16 %v5156, %v5152
    %v5601 = vpack.c.b16 %v5157, %v5153
    %v5602 = vpack.c.b16 %v5158, %v5154
    %v5603 = vpack.c.b16 %v5163, %v5159
    %v5604 = vpack.c.b16 %v5164, %v5160
    %v5605 = vpack.c.b16 %v5165, %v5161
    %v5606 = vpack.c.b16 %v5166, %v5162
    %v5607 = vpack.c.b16 %v5171, %v5167
    %v5608 = vpack.c.b16 %v5172, %v5168
    %v5609 = vpack.c.b16 %v5173, %v5169
    %v5610 = vpack.c.b16 %v5174, %v5170
    %v5611 = vpack.c.b16 %v5179, %v5175
    %v5612 = vpack.c.b16 %v5180, %v5176
    %v5613 = vpack.c.b16 %v5181, %v5177
    %v5614 = vpack.c.b16 %v5182, %v5178
    %v5615 = vpack.c.b16 %v5187, %v5183
    %v5616 = vpack.c.b16 %v5188, %v5184
    %v5617 = vpack.c.b16 %v5189, %v5185
    %v5618 = vpack.c.b16 %v5190, %v5186
    %v5619 = vpack.c.b16 %v5195, %v5191
    %v5620 = vpack.c.b16 %v5196, %v5192
    %v5621 = vpack.c.b16 %v5197, %v5193
    %v5622 = vpack.c.b16 %v5198, %v5194
    %v5623 = vpack.c.b16 %v5203, %v5199
    %v5624 = vpack.c.b16 %v5204, %v5200
    %v5625 = vpack.c.b16 %v5205, %v5201
    %v5626 = vpack.c.b16 %v5206, %v5202
    %v5627 = vpack.c.b16 %v5211, %v5207
    %v5628 = vpack.c.b16 %v5212, %v5208
    %v5629 = vpack.c.b16 %v5213, %v5209
    %v5630 = vpack.c.b16 %v5214, %v5210
    %v5631 = vpack.c.b16 %v5219, %v5215
    %v5632 = vpack.c.b16 %v5220, %v5216
    %v5633 = vpack.c.b16 %v5221, %v5217
    %v5634 = vpack.c.b16 %v5222, %v5218
    %v5635 = vpack.c.b16 %v5227, %v5223
    %v5636 = vpack.c.b16 %v5228, %v5224
    %v5637 = vpack.c.b16 %v5229, %v5225
    %v5638 = vpack.c.b16 %v5230, %v5226
    %v5639 = vpack.c.b16 %v5235, %v5231
    %v5640 = vpack.c.b16 %v5236, %v5232
    %v5641 = vpack.c.b16 %v5237, %v5233
    %v5642 = vpack.c.b16 %v5238, %v5234
    %v5643 = vpack.c.b16 %v5243, %v5239
    %v5644 = vpack.c.b16 %v5244, %v5240
    %v5645 = vpack.c.b16 %v5245, %v5241
    %v5646 = vpack.c.b16 %v5246, %v5242
    %v5647 = vpack.c.b16 %v5251, %v5247
    %v5648 = vpack.c.b16 %v5252, %v5248
    %v5649 = vpack.c.b16 %v5253, %v5249
    %v5650 = vpack.c.b16 %v5254, %v5250
    %v5651 = vpack.c.b16 %v5259, %v5255
    %v5652 = vpack.c.b16 %v5260, %v5256
    %v5653 = vpack.c.b16 %v5261, %v5257
    %v5654 = vpack.c.b16 %v5262, %v5258
    %v5655 = vpack.c.b16 %v5267, %v5263
    %v5656 = vpack.c.b16 %v5268, %v5264
    %v5657 = vpack.c.b16 %v5269, %v5265
    %v5658 = vpack.c.b16 %v5270, %v5266
    %v5659 = vpack.c.b16 %v5275, %v5271
    %v5660 = vpack.c.b16 %v5276, %v5272
    %v5661 = vpack.c.b16 %v5277, %v5273
    %v5662 = vpack.c.b16 %v5278, %v5274
    %v5663 = vpack.c.b16 %v5283, %v5279
    %v5664 = vpack.c.b16 %v5284, %v5280
    %v5665 = vpack.c.b16 %v5285, %v5281
    %v5666 = vpack.c.b16 %v5286, %v5282
    %v5667 = vpack.c.b16 %v5291, %v5287
    %v5668 = vpack.c.b16 %v5292, %v5288
    %v5669 = vpack.c.b16 %v5293, %v5289
    %v5670 = vpack.c.b16 %v5294, %v5290
    %v5671 = vpack.c.b16 %v5299, %v5295
    %v5672 = vpack.c.b16 %v5300, %v5296
    %v5673 = vpack.c.b16 %v5301, %v5297
    %v5674 = vpack.c.b16 %v5302, %v5298
    %v5675 = vpack.c.b16 %v5307, %v5303
    %v5676 = vpack.c.b16 %v5308, %v5304
    %v5677 = vpack.c.b16 %v5309, %v5305
    %v5678 = vpack.c.b16 %v5310, %v5306
    %v5679 = vpack.c.b16 %v5315, %v5311
    %v5680 = vpack.c.b16 %v5316, %v5312
    %v5681 = vpack.c.b16 %v5317, %v5313
    %v5682 = vpack.c.b16 %v5318, %v5314
    %v5683 = vpack.c.b16 %v5323, %v5319
    %v5684 = vpack.c.b16 %v5324, %v5320
    %v5685 = vpack.c.b16 %v5325, %v5321
    %v5686 = vpack.c.b16 %v5326, %v5322
    %v5687 = vpack.c.b16 %v5331, %v5327
    %v5688 = vpack.c.b16 %v5332, %v5328
    %v5689 = vpack.c.b16 %v5333, %v5329
    %v5690 = vpack.c.b16 %v5334, %v5330
    %v5691 = vpack.c.b16 %v5339, %v5335
    %v5692 = vpack.c.b16 %v5340, %v5336
    %v5693 = vpack.c.b16 %v5341, %v5337
    %v5694 = vpack.c.b16 %v5342, %v5338
    %v5695 = vpack.c.b16 %v5347, %v5343
    %v5696 = vpack.c.b16 %v5348, %v5344
    %v5697 = vpack.c.b16 %v5349, %v5345
    %v5698 = vpack.c.b16 %v5350, %v5346
    %v5699 = vpack.c.b16 %v5355, %v5351
    %v5700 = vpack.c.b16 %v5356, %v5352
    %v5701 = vpack.c.b16 %v5357, %v5353
    %v5702 = vpack.c.b16 %v5358, %v5354
    %v5703 = vpack.c.b16 %v5363, %v5359
    %v5704 = vpack.c.b16 %v5364, %v5360
    %v5705 = vpack.c.b16 %v5365, %v5361
    %v5706 = vpack.c.b16 %v5366, %v5362
    %v5707 = vpack.c.b16 %v5371, %v5367
    %v5708 = vpack.c.b16 %v5372, %v5368
    %v5709 = vpack.c.b16 %v5373, %v5369
    %v5710 = vpack.c.b16 %v5374, %v5370
    %v5711 = vpack.c.b16 %v5379, %v5375
    %v5712 = vpack.c.b16 %v5380, %v5376
    %v5713 = vpack.c.b16 %v5381, %v5377
    %v5714 = vpack.c.b16 %v5382, %v5378
    %v5715 = vpack.c.b16 %v5387, %v5383
    %v5716 = vpack.c.b16 %v5388, %v5384
    %v5717 = vpack.c.b16 %v5389, %v5385
    %v5718 = vpack.c.b16 %v5390, %v5386
    %v5719 = vpack.c.b16 %v5395, %v5391
    %v5720 = vpack.c.b16 %v5396, %v5392
    %v5721 = vpack.c.b16 %v5397, %v5393
    %v5722 = vpack.c.b16 %v5398, %v5394
    %v5723 = vpack.c.b16 %v5403, %v5399
    %v5724 = vpack.c.b16 %v5404, %v5400
    %v5725 = vpack.c.b16 %v5405, %v5401
    %v5726 = vpack.c.b16 %v5406, %v5402
    %v5727 = vpack.c.b16 %v5411, %v5407
    %v5728 = vpack.c.b16 %v5412, %v5408
    %v5729 = vpack.c.b16 %v5413, %v5409
    %v5730 = vpack.c.b16 %v5414, %v5410
    %v5731 = vpack.c.b16 %v5419, %v5415
    %v5732 = vpack.c.b16 %v5420, %v5416
    %v5733 = vpack.c.b16 %v5421, %v5417
    %v5734 = vpack.c.b16 %v5422, %v5418
    %v5735 = vpack.c.b16 %v5427, %v5423
    %v5736 = vpack.c.b16 %v5428, %v5424
    %v5737 = vpack.c.b16 %v5429, %v5425
    %v5738 = vpack.c.b16 %v5430, %v5426
    %v5739 = vpack.c.b16 %v5435, %v5431
    %v5740 = vpack.c.b16 %v5436, %v5432
    %v5741 = vpack.c.b16 %v5437, %v5433
    %v5742 = vpack.c.b16 %v5438, %v5434
    %v5743 = vpack.c.b16 %v5443, %v5439
    %v5744 = vpack.c.b16 %v5444, %v5440
    %v5745 = vpack.c.b16 %v5445, %v5441
    %v5746 = vpack.c.b16 %v5446, %v5442
    %v5747 = vpack.c.b16 %v5451, %v5447
    %v5748 = vpack.c.b16 %v5452, %v5448
    %v5749 = vpack.c.b16 %v5453, %v5449
    %v5750 = vpack.c.b16 %v5454, %v5450
    %v5751 = vpack.c.b16 %v5459, %v5455
    %v5752 = vpack.c.b16 %v5460, %v5456
    %v5753 = vpack.c.b16 %v5461, %v5457
    %v5754 = vpack.c.b16 %v5462, %v5458
    %v5755 = vpack.c.b16 %v5467, %v5463
    %v5756 = vpack.c.b16 %v5468, %v5464
    %v5757 = vpack.c.b16 %v5469, %v5465
    %v5758 = vpack.c.b16 %v5470, %v5466
    %v5759 = vpack.c.b16 %v5475, %v5471
    %v5760 = vpack.c.b16 %v5476, %v5472
    %v5761 = vpack.c.b16 %v5477, %v5473
    %v5762 = vpack.c.b16 %v5478, %v5474
    %v5763 = vpack.c.b16 %v5483, %v5479
    %v5764 = vpack.c.b16 %v5484, %v5480
    %v5765 = vpack.c.b16 %v5485, %v5481
    %v5766 = vpack.c.b16 %v5486, %v5482
    %v5767 = vpack.c.b16 %v5491, %v5487
    %v5768 = vpack.c.b16 %v5492, %v5488
    %v5769 = vpack.c.b16 %v5493, %v5489
    %v5770 = vpack.c.b16 %v5494, %v5490
    %v5771 = vpack.c.b16 %v5499, %v5495
    %v5772 = vpack.c.b16 %v5500, %v5496
    %v5773 = vpack.c.b16 %v5501, %v5497
    %v5774 = vpack.c.b16 %v5502, %v5498
    %v5775 = vpack.c.b16 %v5507, %v5503
    %v5776 = vpack.c.b16 %v5508, %v5504
    %v5777 = vpack.c.b16 %v5509, %v5505
    %v5778 = vpack.c.b16 %v5510, %v5506
    %v5779 = vpack.c.b16 %v5515, %v5511
    %v5780 = vpack.c.b16 %v5516, %v5512
    %v5781 = vpack.c.b16 %v5517, %v5513
    %v5782 = vpack.c.b16 %v5518, %v5514
    %v5783 = vpack.c.b16 %v5523, %v5519
    %v5784 = vpack.c.b16 %v5524, %v5520
    %v5785 = vpack.c.b16 %v5525, %v5521
    %v5786 = vpack.c.b16 %v5526, %v5522
    %v5787 = vpack.c.b16 %v5531, %v5527
    %v5788 = vpack.c.b16 %v5532, %v5528
    %v5789 = vpack.c.b16 %v5533, %v5529
    %v5790 = vpack.c.b16 %v5534, %v5530
    %6047 = vmatprep.subr.bf16.mxu0 %v5536
    %6048 = vmatpush1.bf16.msra.mxu0 %v5535
    %6049 = vmatprep.subr.bf16.mxu0 %v5540
    %6050 = vmatpush1.bf16.msra.mxu0 %v5539
    %6051 = vmatprep.subr.bf16.mxu0 %v5544
    %6052 = vmatpush1.bf16.msra.mxu0 %v5543
    %6053 = vmatprep.subr.bf16.mxu0 %v5548
    %6054 = vmatpush1.bf16.msra.mxu0 %v5547
    %6055 = vmatprep.subr.bf16.mxu0 %v5552
    %6056 = vmatpush1.bf16.msra.mxu0 %v5551
    %6057 = vmatprep.subr.bf16.mxu0 %v5556
    %6058 = vmatpush1.bf16.msra.mxu0 %v5555
    %6059 = vmatprep.subr.bf16.mxu0 %v5560
    %6060 = vmatpush1.bf16.msra.mxu0 %v5559
    %6061 = vmatprep.subr.bf16.mxu0 %v5564
    %6062 = vmatpush1.bf16.msra.mxu0 %v5563
    %6063 = vmatprep.subr.bf16.mxu0 %v5568
    %6064 = vmatpush1.bf16.msra.mxu0 %v5567
    %6065 = vmatprep.subr.bf16.mxu0 %v5572
    %6066 = vmatpush1.bf16.msra.mxu0 %v5571
    %6067 = vmatprep.subr.bf16.mxu0 %v5576
    %6068 = vmatpush1.bf16.msra.mxu0 %v5575
    %6069 = vmatprep.subr.bf16.mxu0 %v5580
    %6070 = vmatpush1.bf16.msra.mxu0 %v5579
    %6071 = vmatprep.subr.bf16.mxu0 %v5584
    %6072 = vmatpush1.bf16.msra.mxu0 %v5583
    %6073 = vmatprep.subr.bf16.mxu0 %v5588
    %6074 = vmatpush1.bf16.msra.mxu0 %v5587
    %6075 = vmatprep.subr.bf16.mxu0 %v5592
    %6076 = vmatpush1.bf16.msra.mxu0 %v5591
    %6077 = vmatprep.subr.bf16.mxu0 %v5596
    %6078 = vmatpush1.bf16.msra.mxu0 %v5595
    %6079 = vmatprep.mubr.bf16.mxu0 %v4482
    %6080 = vmatmul.mubr.bf16.gmra.mrb[0].mxu0 %v4481
    %v6081 = vpop.f32.mrb[0].mxu0
    %v6082 = vadd.f32 %v4750, %v6081
    %v6083 = vpop.f32.mrb[0].mxu0
    %v6084 = vadd.f32 %v4754, %v6083
    %v6085 = vpop.f32.mrb[0].mxu0
    %v6086 = vpop.f32.mrb[0].mxu0
    %6087 = vdwg.mxu0
    %6088 = vmatprep.subr.bf16.mxu0 %v5600
    %6089 = vmatpush1.bf16.msra.mxu0 %v5599
    %6090 = vmatprep.subr.bf16.mxu0 %v5604
    %6091 = vmatpush1.bf16.msra.mxu0 %v5603
    %6092 = vmatprep.subr.bf16.mxu0 %v5608
    %6093 = vmatpush1.bf16.msra.mxu0 %v5607
    %6094 = vmatprep.subr.bf16.mxu0 %v5612
    %6095 = vmatpush1.bf16.msra.mxu0 %v5611
    %6096 = vmatprep.subr.bf16.mxu0 %v5616
    %6097 = vmatpush1.bf16.msra.mxu0 %v5615
    %6098 = vmatprep.subr.bf16.mxu0 %v5620
    %6099 = vmatpush1.bf16.msra.mxu0 %v5619
    %6100 = vmatprep.subr.bf16.mxu0 %v5624
    %6101 = vmatpush1.bf16.msra.mxu0 %v5623
    %6102 = vmatprep.subr.bf16.mxu0 %v5628
    %6103 = vmatpush1.bf16.msra.mxu0 %v5627
    %6104 = vmatprep.subr.bf16.mxu0 %v5632
    %6105 = vmatpush1.bf16.msra.mxu0 %v5631
    %6106 = vmatprep.subr.bf16.mxu0 %v5636
    %6107 = vmatpush1.bf16.msra.mxu0 %v5635
    %6108 = vmatprep.subr.bf16.mxu0 %v5640
    %6109 = vmatpush1.bf16.msra.mxu0 %v5639
    %6110 = vmatprep.subr.bf16.mxu0 %v5644
    %6111 = vmatpush1.bf16.msra.mxu0 %v5643
    %6112 = vmatprep.subr.bf16.mxu0 %v5648
    %6113 = vmatpush1.bf16.msra.mxu0 %v5647
    %6114 = vmatprep.subr.bf16.mxu0 %v5652
    %6115 = vmatpush1.bf16.msra.mxu0 %v5651
    %6116 = vmatprep.subr.bf16.mxu0 %v5656
    %6117 = vmatpush1.bf16.msra.mxu0 %v5655
    %6118 = vmatprep.subr.bf16.mxu0 %v5660
    %6119 = vmatpush1.bf16.msra.mxu0 %v5659
    %6120 = vmatprep.mubr.bf16.mxu0 %v4484
    %6121 = vmatmul.mubr.bf16.gmra.mrb[0].mxu0 %v4483
    %v6122 = vpop.f32.mrb[0].mxu0
    %v6123 = vadd.f32 %v6082, %v6122
    %v6124 = vpop.f32.mrb[0].mxu0
    %v6125 = vadd.f32 %v6084, %v6124
    %v6126 = vpop.f32.mrb[0].mxu0
    %v6127 = vpop.f32.mrb[0].mxu0
    %6128 = vdwg.mxu0
    %6129 = vmatprep.subr.bf16.mxu0 %v5664
    %6130 = vmatpush1.bf16.msra.mxu0 %v5663
    %6131 = vmatprep.subr.bf16.mxu0 %v5668
    %6132 = vmatpush1.bf16.msra.mxu0 %v5667
    %6133 = vmatprep.subr.bf16.mxu0 %v5672
    %6134 = vmatpush1.bf16.msra.mxu0 %v5671
    %6135 = vmatprep.subr.bf16.mxu0 %v5676
    %6136 = vmatpush1.bf16.msra.mxu0 %v5675
    %6137 = vmatprep.subr.bf16.mxu0 %v5680
    %6138 = vmatpush1.bf16.msra.mxu0 %v5679
    %6139 = vmatprep.subr.bf16.mxu0 %v5684
    %6140 = vmatpush1.bf16.msra.mxu0 %v5683
    %6141 = vmatprep.subr.bf16.mxu0 %v5688
    %6142 = vmatpush1.bf16.msra.mxu0 %v5687
    %6143 = vmatprep.subr.bf16.mxu0 %v5692
    %6144 = vmatpush1.bf16.msra.mxu0 %v5691
    %6145 = vmatprep.subr.bf16.mxu0 %v5696
    %6146 = vmatpush1.bf16.msra.mxu0 %v5695
    %6147 = vmatprep.subr.bf16.mxu0 %v5700
    %6148 = vmatpush1.bf16.msra.mxu0 %v5699
    %6149 = vmatprep.subr.bf16.mxu0 %v5704
    %6150 = vmatpush1.bf16.msra.mxu0 %v5703
    %6151 = vmatprep.subr.bf16.mxu0 %v5708
    %6152 = vmatpush1.bf16.msra.mxu0 %v5707
    %6153 = vmatprep.subr.bf16.mxu0 %v5712
    %6154 = vmatpush1.bf16.msra.mxu0 %v5711
    %6155 = vmatprep.subr.bf16.mxu0 %v5716
    %6156 = vmatpush1.bf16.msra.mxu0 %v5715
    %6157 = vmatprep.subr.bf16.mxu0 %v5720
    %6158 = vmatpush1.bf16.msra.mxu0 %v5719
    %6159 = vmatprep.subr.bf16.mxu0 %v5724
    %6160 = vmatpush1.bf16.msra.mxu0 %v5723
    %6161 = vmatprep.mubr.bf16.mxu0 %v4486
    %6162 = vmatmul.mubr.bf16.gmra.mrb[0].mxu0 %v4485
    %v6163 = vpop.f32.mrb[0].mxu0
    %v6164 = vadd.f32 %v6123, %v6163
    %v6165 = vpop.f32.mrb[0].mxu0
    %v6166 = vadd.f32 %v6125, %v6165
    %v6167 = vpop.f32.mrb[0].mxu0
    %v6168 = vpop.f32.mrb[0].mxu0
    %6169 = vdwg.mxu0
    %6170 = vmatprep.subr.bf16.mxu0 %v5728
    %6171 = vmatpush1.bf16.msra.mxu0 %v5727
    %6172 = vmatprep.subr.bf16.mxu0 %v5732
    %6173 = vmatpush1.bf16.msra.mxu0 %v5731
    %6174 = vmatprep.subr.bf16.mxu0 %v5736
    %6175 = vmatpush1.bf16.msra.mxu0 %v5735
    %6176 = vmatprep.subr.bf16.mxu0 %v5740
    %6177 = vmatpush1.bf16.msra.mxu0 %v5739
    %6178 = vmatprep.subr.bf16.mxu0 %v5744
    %6179 = vmatpush1.bf16.msra.mxu0 %v5743
    %6180 = vmatprep.subr.bf16.mxu0 %v5748
    %6181 = vmatpush1.bf16.msra.mxu0 %v5747
    %6182 = vmatprep.subr.bf16.mxu0 %v5752
    %6183 = vmatpush1.bf16.msra.mxu0 %v5751
    %6184 = vmatprep.subr.bf16.mxu0 %v5756
    %6185 = vmatpush1.bf16.msra.mxu0 %v5755
    %6186 = vmatprep.subr.bf16.mxu0 %v5760
    %6187 = vmatpush1.bf16.msra.mxu0 %v5759
    %6188 = vmatprep.subr.bf16.mxu0 %v5764
    %6189 = vmatpush1.bf16.msra.mxu0 %v5763
    %6190 = vmatprep.subr.bf16.mxu0 %v5768
    %6191 = vmatpush1.bf16.msra.mxu0 %v5767
    %6192 = vmatprep.subr.bf16.mxu0 %v5772
    %6193 = vmatpush1.bf16.msra.mxu0 %v5771
    %6194 = vmatprep.subr.bf16.mxu0 %v5776
    %6195 = vmatpush1.bf16.msra.mxu0 %v5775
    %6196 = vmatprep.subr.bf16.mxu0 %v5780
    %6197 = vmatpush1.bf16.msra.mxu0 %v5779
    %6198 = vmatprep.subr.bf16.mxu0 %v5784
    %6199 = vmatpush1.bf16.msra.mxu0 %v5783
    %6200 = vmatprep.subr.bf16.mxu0 %v5788
    %6201 = vmatpush1.bf16.msra.mxu0 %v5787
    %6202 = vmatprep.mubr.bf16.mxu0 %v4488
    %6203 = vmatmul.mubr.bf16.gmra.mrb[0].mxu0 %v4487
    %v6204 = vpop.f32.mrb[0].mxu0
    %v6205 = vadd.f32 %v6164, %v6204
    %v6206 = vpop.f32.mrb[0].mxu0
    %v6207 = vadd.f32 %v6166, %v6206
    %v6208 = vpop.f32.mrb[0].mxu0
    %v6209 = vpop.f32.mrb[0].mxu0
    %6210 = vdwg.mxu0
    %6211 = vmatprep.subr.bf16.mxu0 %v5538
    %6212 = vmatpush1.bf16.msra.mxu0 %v5537
    %6213 = vmatprep.subr.bf16.mxu0 %v5542
    %6214 = vmatpush1.bf16.msra.mxu0 %v5541
    %6215 = vmatprep.subr.bf16.mxu0 %v5546
    %6216 = vmatpush1.bf16.msra.mxu0 %v5545
    %6217 = vmatprep.subr.bf16.mxu0 %v5550
    %6218 = vmatpush1.bf16.msra.mxu0 %v5549
    %6219 = vmatprep.subr.bf16.mxu0 %v5554
    %6220 = vmatpush1.bf16.msra.mxu0 %v5553
    %6221 = vmatprep.subr.bf16.mxu0 %v5558
    %6222 = vmatpush1.bf16.msra.mxu0 %v5557
    %6223 = vmatprep.subr.bf16.mxu0 %v5562
    %6224 = vmatpush1.bf16.msra.mxu0 %v5561
    %6225 = vmatprep.subr.bf16.mxu0 %v5566
    %6226 = vmatpush1.bf16.msra.mxu0 %v5565
    %6227 = vmatprep.subr.bf16.mxu0 %v5570
    %6228 = vmatpush1.bf16.msra.mxu0 %v5569
    %6229 = vmatprep.subr.bf16.mxu0 %v5574
    %6230 = vmatpush1.bf16.msra.mxu0 %v5573
    %6231 = vmatprep.subr.bf16.mxu0 %v5578
    %6232 = vmatpush1.bf16.msra.mxu0 %v5577
    %6233 = vmatprep.subr.bf16.mxu0 %v5582
    %6234 = vmatpush1.bf16.msra.mxu0 %v5581
    %6235 = vmatprep.subr.bf16.mxu0 %v5586
    %6236 = vmatpush1.bf16.msra.mxu0 %v5585
    %6237 = vmatprep.subr.bf16.mxu0 %v5590
    %6238 = vmatpush1.bf16.msra.mxu0 %v5589
    %6239 = vmatprep.subr.bf16.mxu0 %v5594
    %6240 = vmatpush1.bf16.msra.mxu0 %v5593
    %6241 = vmatprep.subr.bf16.mxu0 %v5598
    %6242 = vmatpush1.bf16.msra.mxu0 %v5597
    %6243 = vmatprep.mubr.bf16.mxu0 %v4482
    %6244 = vmatmul.mubr.bf16.gmra.mrb[0].mxu0 %v4481
    %v6245 = vpop.f32.mrb[0].mxu0
    %v6246 = vadd.f32 %v4758, %v6245
    %v6247 = vpop.f32.mrb[0].mxu0
    %v6248 = vadd.f32 %v4762, %v6247
    %v6249 = vpop.f32.mrb[0].mxu0
    %v6250 = vpop.f32.mrb[0].mxu0
    %6251 = vdwg.mxu0
    %6252 = vmatprep.subr.bf16.mxu0 %v5602
    %6253 = vmatpush1.bf16.msra.mxu0 %v5601
    %6254 = vmatprep.subr.bf16.mxu0 %v5606
    %6255 = vmatpush1.bf16.msra.mxu0 %v5605
    %6256 = vmatprep.subr.bf16.mxu0 %v5610
    %6257 = vmatpush1.bf16.msra.mxu0 %v5609
    %6258 = vmatprep.subr.bf16.mxu0 %v5614
    %6259 = vmatpush1.bf16.msra.mxu0 %v5613
    %6260 = vmatprep.subr.bf16.mxu0 %v5618
    %6261 = vmatpush1.bf16.msra.mxu0 %v5617
    %6262 = vmatprep.subr.bf16.mxu0 %v5622
    %6263 = vmatpush1.bf16.msra.mxu0 %v5621
    %6264 = vmatprep.subr.bf16.mxu0 %v5626
    %6265 = vmatpush1.bf16.msra.mxu0 %v5625
    %6266 = vmatprep.subr.bf16.mxu0 %v5630
    %6267 = vmatpush1.bf16.msra.mxu0 %v5629
    %6268 = vmatprep.subr.bf16.mxu0 %v5634
    %6269 = vmatpush1.bf16.msra.mxu0 %v5633
    %6270 = vmatprep.subr.bf16.mxu0 %v5638
    %6271 = vmatpush1.bf16.msra.mxu0 %v5637
    %6272 = vmatprep.subr.bf16.mxu0 %v5642
    %6273 = vmatpush1.bf16.msra.mxu0 %v5641
    %6274 = vmatprep.subr.bf16.mxu0 %v5646
    %6275 = vmatpush1.bf16.msra.mxu0 %v5645
    %6276 = vmatprep.subr.bf16.mxu0 %v5650
    %6277 = vmatpush1.bf16.msra.mxu0 %v5649
    %6278 = vmatprep.subr.bf16.mxu0 %v5654
    %6279 = vmatpush1.bf16.msra.mxu0 %v5653
    %6280 = vmatprep.subr.bf16.mxu0 %v5658
    %6281 = vmatpush1.bf16.msra.mxu0 %v5657
    %6282 = vmatprep.subr.bf16.mxu0 %v5662
    %6283 = vmatpush1.bf16.msra.mxu0 %v5661
    %6284 = vmatprep.mubr.bf16.mxu0 %v4484
    %6285 = vmatmul.mubr.bf16.gmra.mrb[0].mxu0 %v4483
    %v6286 = vpop.f32.mrb[0].mxu0
    %v6287 = vadd.f32 %v6246, %v6286
    %v6288 = vpop.f32.mrb[0].mxu0
    %v6289 = vadd.f32 %v6248, %v6288
    %v6290 = vpop.f32.mrb[0].mxu0
    %v6291 = vpop.f32.mrb[0].mxu0
    %6292 = vdwg.mxu0
    %6293 = vmatprep.subr.bf16.mxu0 %v5666
    %6294 = vmatpush1.bf16.msra.mxu0 %v5665
    %6295 = vmatprep.subr.bf16.mxu0 %v5670
    %6296 = vmatpush1.bf16.msra.mxu0 %v5669
    %6297 = vmatprep.subr.bf16.mxu0 %v5674
    %6298 = vmatpush1.bf16.msra.mxu0 %v5673
    %6299 = vmatprep.subr.bf16.mxu0 %v5678
    %6300 = vmatpush1.bf16.msra.mxu0 %v5677
    %6301 = vmatprep.subr.bf16.mxu0 %v5682
    %6302 = vmatpush1.bf16.msra.mxu0 %v5681
    %6303 = vmatprep.subr.bf16.mxu0 %v5686
    %6304 = vmatpush1.bf16.msra.mxu0 %v5685
    %6305 = vmatprep.subr.bf16.mxu0 %v5690
    %6306 = vmatpush1.bf16.msra.mxu0 %v5689
    %6307 = vmatprep.subr.bf16.mxu0 %v5694
    %6308 = vmatpush1.bf16.msra.mxu0 %v5693
    %6309 = vmatprep.subr.bf16.mxu0 %v5698
    %6310 = vmatpush1.bf16.msra.mxu0 %v5697
    %6311 = vmatprep.subr.bf16.mxu0 %v5702
    %6312 = vmatpush1.bf16.msra.mxu0 %v5701
    %6313 = vmatprep.subr.bf16.mxu0 %v5706
    %6314 = vmatpush1.bf16.msra.mxu0 %v5705
    %6315 = vmatprep.subr.bf16.mxu0 %v5710
    %6316 = vmatpush1.bf16.msra.mxu0 %v5709
    %6317 = vmatprep.subr.bf16.mxu0 %v5714
    %6318 = vmatpush1.bf16.msra.mxu0 %v5713
    %6319 = vmatprep.subr.bf16.mxu0 %v5718
    %6320 = vmatpush1.bf16.msra.mxu0 %v5717
    %6321 = vmatprep.subr.bf16.mxu0 %v5722
    %6322 = vmatpush1.bf16.msra.mxu0 %v5721
    %6323 = vmatprep.subr.bf16.mxu0 %v5726
    %6324 = vmatpush1.bf16.msra.mxu0 %v5725
    %6325 = vmatprep.mubr.bf16.mxu0 %v4486
    %6326 = vmatmul.mubr.bf16.gmra.mrb[0].mxu0 %v4485
    %v6327 = vpop.f32.mrb[0].mxu0
    %v6328 = vadd.f32 %v6287, %v6327
    %v6329 = vpop.f32.mrb[0].mxu0
    %v6330 = vadd.f32 %v6289, %v6329
    %v6331 = vpop.f32.mrb[0].mxu0
    %v6332 = vpop.f32.mrb[0].mxu0
    %6333 = vdwg.mxu0
    %6334 = vmatprep.subr.bf16.mxu0 %v5730
    %6335 = vmatpush1.bf16.msra.mxu0 %v5729
    %6336 = vmatprep.subr.bf16.mxu0 %v5734
    %6337 = vmatpush1.bf16.msra.mxu0 %v5733
    %6338 = vmatprep.subr.bf16.mxu0 %v5738
    %6339 = vmatpush1.bf16.msra.mxu0 %v5737
    %6340 = vmatprep.subr.bf16.mxu0 %v5742
    %6341 = vmatpush1.bf16.msra.mxu0 %v5741
    %6342 = vmatprep.subr.bf16.mxu0 %v5746
    %6343 = vmatpush1.bf16.msra.mxu0 %v5745
    %6344 = vmatprep.subr.bf16.mxu0 %v5750
    %6345 = vmatpush1.bf16.msra.mxu0 %v5749
    %6346 = vmatprep.subr.bf16.mxu0 %v5754
    %6347 = vmatpush1.bf16.msra.mxu0 %v5753
    %6348 = vmatprep.subr.bf16.mxu0 %v5758
    %6349 = vmatpush1.bf16.msra.mxu0 %v5757
    %6350 = vmatprep.subr.bf16.mxu0 %v5762
    %6351 = vmatpush1.bf16.msra.mxu0 %v5761
    %6352 = vmatprep.subr.bf16.mxu0 %v5766
    %6353 = vmatpush1.bf16.msra.mxu0 %v5765
    %6354 = vmatprep.subr.bf16.mxu0 %v5770
    %6355 = vmatpush1.bf16.msra.mxu0 %v5769
    %6356 = vmatprep.subr.bf16.mxu0 %v5774
    %6357 = vmatpush1.bf16.msra.mxu0 %v5773
    %6358 = vmatprep.subr.bf16.mxu0 %v5778
    %6359 = vmatpush1.bf16.msra.mxu0 %v5777
    %6360 = vmatprep.subr.bf16.mxu0 %v5782
    %6361 = vmatpush1.bf16.msra.mxu0 %v5781
    %6362 = vmatprep.subr.bf16.mxu0 %v5786
    %6363 = vmatpush1.bf16.msra.mxu0 %v5785
    %6364 = vmatprep.subr.bf16.mxu0 %v5790
    %6365 = vmatpush1.bf16.msra.mxu0 %v5789
    %6366 = vmatprep.mubr.bf16.mxu0 %v4488
    %6367 = vmatmul.mubr.bf16.gmra.mrb[0].mxu0 %v4487
    %v6368 = vpop.f32.mrb[0].mxu0
    %v6369 = vadd.f32 %v6328, %v6368
    %v6370 = vpop.f32.mrb[0].mxu0
    %v6371 = vadd.f32 %v6330, %v6370
    %v6372 = vpop.f32.mrb[0].mxu0
    %v6373 = vpop.f32.mrb[0].mxu0
    %6374 = vdwg.mxu0
    %v6375 = vmax.f32 %v6205, 0.0
    %v6376 = vmax.f32 %v6207, 0.0
    %v6377 = vmax.f32 %v6369, 0.0
    %v6378 = vmax.f32 %v6371, 0.0
    %v6379 = vpack.c.bf16 %v6375, %v6375
    %v6380 = vpack.c.bf16 %v6376, %v6376
    %v6381 = vpack.c.bf16 %v6377, %v6377
    %v6382 = vpack.c.bf16 %v6378, %v6378
    %v6383 = vld [vmem:[#allocation12] sm:$0xff]
    %v6384 = vld [vmem:[#allocation12 + $0x8] sm:$0xff]
    %v6385 = vld [vmem:[#allocation12 + $0x10] sm:$0xff]
    %v6386 = vld [vmem:[#allocation12 + $0x18] sm:$0xff]
    %v6387 = vld [vmem:[#allocation12 + $0x20] sm:$0xff]
    %v6388 = vld [vmem:[#allocation12 + $0x28] sm:$0xff]
    %v6389 = vld [vmem:[#allocation12 + $0x30] sm:$0xff]
    %v6390 = vld [vmem:[#allocation12 + $0x38] sm:$0xff]
    %v6391 = vld [vmem:[#allocation12 + $0x40] sm:$0xff]
    %v6392 = vld [vmem:[#allocation12 + $0x48] sm:$0xff]
    %v6393 = vld [vmem:[#allocation12 + $0x50] sm:$0xff]
    %v6394 = vld [vmem:[#allocation12 + $0x58] sm:$0xff]
    %v6395 = vld [vmem:[#allocation12 + $0x60] sm:$0xff]
    %v6396 = vld [vmem:[#allocation12 + $0x68] sm:$0xff]
    %v6397 = vld [vmem:[#allocation12 + $0x70] sm:$0xff]
    %v6398 = vld [vmem:[#allocation12 + $0x78] sm:$0xff]
    %v6399 = vld [vmem:[#allocation12 + $0x80] sm:$0xff]
    %v6400 = vld [vmem:[#allocation12 + $0x88] sm:$0xff]
    %v6401 = vld [vmem:[#allocation12 + $0x90] sm:$0xff]
    %v6402 = vld [vmem:[#allocation12 + $0x98] sm:$0xff]
    %v6403 = vld [vmem:[#allocation12 + $0xa0] sm:$0xff]
    %v6404 = vld [vmem:[#allocation12 + $0xa8] sm:$0xff]
    %v6405 = vld [vmem:[#allocation12 + $0xb0] sm:$0xff]
    %v6406 = vld [vmem:[#allocation12 + $0xb8] sm:$0xff]
    %v6407 = vld [vmem:[#allocation12 + $0xc0] sm:$0xff]
    %v6408 = vld [vmem:[#allocation12 + $0xc8] sm:$0xff]
    %v6409 = vld [vmem:[#allocation12 + $0xd0] sm:$0xff]
    %v6410 = vld [vmem:[#allocation12 + $0xd8] sm:$0xff]
    %v6411 = vld [vmem:[#allocation12 + $0xe0] sm:$0xff]
    %v6412 = vld [vmem:[#allocation12 + $0xe8] sm:$0xff]
    %v6413 = vld [vmem:[#allocation12 + $0xf0] sm:$0xff]
    %v6414 = vld [vmem:[#allocation12 + $0xf8] sm:$0xff]
    %v6415 = vld [vmem:[#allocation12 + $0x100] sm:$0xff]
    %v6416 = vld [vmem:[#allocation12 + $0x108] sm:$0xff]
    %v6417 = vld [vmem:[#allocation12 + $0x110] sm:$0xff]
    %v6418 = vld [vmem:[#allocation12 + $0x118] sm:$0xff]
    %v6419 = vld [vmem:[#allocation12 + $0x120] sm:$0xff]
    %v6420 = vld [vmem:[#allocation12 + $0x128] sm:$0xff]
    %v6421 = vld [vmem:[#allocation12 + $0x130] sm:$0xff]
    %v6422 = vld [vmem:[#allocation12 + $0x138] sm:$0xff]
    %v6423 = vld [vmem:[#allocation12 + $0x140] sm:$0xff]
    %v6424 = vld [vmem:[#allocation12 + $0x148] sm:$0xff]
    %v6425 = vld [vmem:[#allocation12 + $0x150] sm:$0xff]
    %v6426 = vld [vmem:[#allocation12 + $0x158] sm:$0xff]
    %v6427 = vld [vmem:[#allocation12 + $0x160] sm:$0xff]
    %v6428 = vld [vmem:[#allocation12 + $0x168] sm:$0xff]
    %v6429 = vld [vmem:[#allocation12 + $0x170] sm:$0xff]
    %v6430 = vld [vmem:[#allocation12 + $0x178] sm:$0xff]
    %v6431 = vld [vmem:[#allocation12 + $0x180] sm:$0xff]
    %v6432 = vld [vmem:[#allocation12 + $0x188] sm:$0xff]
    %v6433 = vld [vmem:[#allocation12 + $0x190] sm:$0xff]
    %v6434 = vld [vmem:[#allocation12 + $0x198] sm:$0xff]
    %v6435 = vld [vmem:[#allocation12 + $0x1a0] sm:$0xff]
    %v6436 = vld [vmem:[#allocation12 + $0x1a8] sm:$0xff]
    %v6437 = vld [vmem:[#allocation12 + $0x1b0] sm:$0xff]
    %v6438 = vld [vmem:[#allocation12 + $0x1b8] sm:$0xff]
    %v6439 = vld [vmem:[#allocation12 + $0x1c0] sm:$0xff]
    %v6440 = vld [vmem:[#allocation12 + $0x1c8] sm:$0xff]
    %v6441 = vld [vmem:[#allocation12 + $0x1d0] sm:$0xff]
    %v6442 = vld [vmem:[#allocation12 + $0x1d8] sm:$0xff]
    %v6443 = vld [vmem:[#allocation12 + $0x1e0] sm:$0xff]
    %v6444 = vld [vmem:[#allocation12 + $0x1e8] sm:$0xff]
    %v6445 = vld [vmem:[#allocation12 + $0x1f0] sm:$0xff]
    %v6446 = vld [vmem:[#allocation12 + $0x1f8] sm:$0xff]
    %v6447 = vld [vmem:[#allocation12 + $0x200] sm:$0xff]
    %v6448 = vld [vmem:[#allocation12 + $0x208] sm:$0xff]
    %v6449 = vld [vmem:[#allocation12 + $0x210] sm:$0xff]
    %v6450 = vld [vmem:[#allocation12 + $0x218] sm:$0xff]
    %v6451 = vld [vmem:[#allocation12 + $0x220] sm:$0xff]
    %v6452 = vld [vmem:[#allocation12 + $0x228] sm:$0xff]
    %v6453 = vld [vmem:[#allocation12 + $0x230] sm:$0xff]
    %v6454 = vld [vmem:[#allocation12 + $0x238] sm:$0xff]
    %v6455 = vld [vmem:[#allocation12 + $0x240] sm:$0xff]
    %v6456 = vld [vmem:[#allocation12 + $0x248] sm:$0xff]
    %v6457 = vld [vmem:[#allocation12 + $0x250] sm:$0xff]
    %v6458 = vld [vmem:[#allocation12 + $0x258] sm:$0xff]
    %v6459 = vld [vmem:[#allocation12 + $0x260] sm:$0xff]
    %v6460 = vld [vmem:[#allocation12 + $0x268] sm:$0xff]
    %v6461 = vld [vmem:[#allocation12 + $0x270] sm:$0xff]
    %v6462 = vld [vmem:[#allocation12 + $0x278] sm:$0xff]
    %v6463 = vld [vmem:[#allocation12 + $0x280] sm:$0xff]
    %v6464 = vld [vmem:[#allocation12 + $0x288] sm:$0xff]
    %v6465 = vld [vmem:[#allocation12 + $0x290] sm:$0xff]
    %v6466 = vld [vmem:[#allocation12 + $0x298] sm:$0xff]
    %v6467 = vld [vmem:[#allocation12 + $0x2a0] sm:$0xff]
    %v6468 = vld [vmem:[#allocation12 + $0x2a8] sm:$0xff]
    %v6469 = vld [vmem:[#allocation12 + $0x2b0] sm:$0xff]
    %v6470 = vld [vmem:[#allocation12 + $0x2b8] sm:$0xff]
    %v6471 = vld [vmem:[#allocation12 + $0x2c0] sm:$0xff]
    %v6472 = vld [vmem:[#allocation12 + $0x2c8] sm:$0xff]
    %v6473 = vld [vmem:[#allocation12 + $0x2d0] sm:$0xff]
    %v6474 = vld [vmem:[#allocation12 + $0x2d8] sm:$0xff]
    %v6475 = vld [vmem:[#allocation12 + $0x2e0] sm:$0xff]
    %v6476 = vld [vmem:[#allocation12 + $0x2e8] sm:$0xff]
    %v6477 = vld [vmem:[#allocation12 + $0x2f0] sm:$0xff]
    %v6478 = vld [vmem:[#allocation12 + $0x2f8] sm:$0xff]
    %v6479 = vld [vmem:[#allocation12 + $0x300] sm:$0xff]
    %v6480 = vld [vmem:[#allocation12 + $0x308] sm:$0xff]
    %v6481 = vld [vmem:[#allocation12 + $0x310] sm:$0xff]
    %v6482 = vld [vmem:[#allocation12 + $0x318] sm:$0xff]
    %v6483 = vld [vmem:[#allocation12 + $0x320] sm:$0xff]
    %v6484 = vld [vmem:[#allocation12 + $0x328] sm:$0xff]
    %v6485 = vld [vmem:[#allocation12 + $0x330] sm:$0xff]
    %v6486 = vld [vmem:[#allocation12 + $0x338] sm:$0xff]
    %v6487 = vld [vmem:[#allocation12 + $0x340] sm:$0xff]
    %v6488 = vld [vmem:[#allocation12 + $0x348] sm:$0xff]
    %v6489 = vld [vmem:[#allocation12 + $0x350] sm:$0xff]
    %v6490 = vld [vmem:[#allocation12 + $0x358] sm:$0xff]
    %v6491 = vld [vmem:[#allocation12 + $0x360] sm:$0xff]
    %v6492 = vld [vmem:[#allocation12 + $0x368] sm:$0xff]
    %v6493 = vld [vmem:[#allocation12 + $0x370] sm:$0xff]
    %v6494 = vld [vmem:[#allocation12 + $0x378] sm:$0xff]
    %v6495 = vld [vmem:[#allocation12 + $0x380] sm:$0xff]
    %v6496 = vld [vmem:[#allocation12 + $0x388] sm:$0xff]
    %v6497 = vld [vmem:[#allocation12 + $0x390] sm:$0xff]
    %v6498 = vld [vmem:[#allocation12 + $0x398] sm:$0xff]
    %v6499 = vld [vmem:[#allocation12 + $0x3a0] sm:$0xff]
    %v6500 = vld [vmem:[#allocation12 + $0x3a8] sm:$0xff]
    %v6501 = vld [vmem:[#allocation12 + $0x3b0] sm:$0xff]
    %v6502 = vld [vmem:[#allocation12 + $0x3b8] sm:$0xff]
    %v6503 = vld [vmem:[#allocation12 + $0x3c0] sm:$0xff]
    %v6504 = vld [vmem:[#allocation12 + $0x3c8] sm:$0xff]
    %v6505 = vld [vmem:[#allocation12 + $0x3d0] sm:$0xff]
    %v6506 = vld [vmem:[#allocation12 + $0x3d8] sm:$0xff]
    %v6507 = vld [vmem:[#allocation12 + $0x3e0] sm:$0xff]
    %v6508 = vld [vmem:[#allocation12 + $0x3e8] sm:$0xff]
    %v6509 = vld [vmem:[#allocation12 + $0x3f0] sm:$0xff]
    %v6510 = vld [vmem:[#allocation12 + $0x3f8] sm:$0xff]
    %v6511 = vld [vmem:[#allocation13] sm:$0xf]
    %v6513 = vlaneseq
    %v6514 = vshrl.u32 %v6513, 7
    %v6515 = vsub.s32 0, %v6514
    %v6516 = vrot.slane %v6511, %v6515
    %v6517 = vlaneseq
    %v6518 = vshrl.u32 %v6517, 7
    %v6519 = vsub.s32 1, %v6518
    %v6520 = vrot.slane %v6511, %v6519
    %v6521 = vlaneseq
    %v6522 = vshrl.u32 %v6521, 7
    %v6523 = vsub.s32 2, %v6522
    %v6524 = vrot.slane %v6511, %v6523
    %v6525 = vlaneseq
    %v6526 = vshrl.u32 %v6525, 7
    %v6527 = vsub.s32 3, %v6526
    %v6528 = vrot.slane %v6511, %v6527
    %v6661 = vunpack.c.l.b16 %v6383
    %v6662 = vunpack.c.h.b16 %v6383
    %v6663 = vunpack.c.l.b16 %v6384
    %v6664 = vunpack.c.h.b16 %v6384
    %v6665 = vunpack.c.l.b16 %v6385
    %v6666 = vunpack.c.h.b16 %v6385
    %v6667 = vunpack.c.l.b16 %v6386
    %v6668 = vunpack.c.h.b16 %v6386
    %v6669 = vunpack.c.l.b16 %v6387
    %v6670 = vunpack.c.h.b16 %v6387
    %v6671 = vunpack.c.l.b16 %v6388
    %v6672 = vunpack.c.h.b16 %v6388
    %v6673 = vunpack.c.l.b16 %v6389
    %v6674 = vunpack.c.h.b16 %v6389
    %v6675 = vunpack.c.l.b16 %v6390
    %v6676 = vunpack.c.h.b16 %v6390
    %v6677 = vunpack.c.l.b16 %v6391
    %v6678 = vunpack.c.h.b16 %v6391
    %v6679 = vunpack.c.l.b16 %v6392
    %v6680 = vunpack.c.h.b16 %v6392
    %v6681 = vunpack.c.l.b16 %v6393
    %v6682 = vunpack.c.h.b16 %v6393
    %v6683 = vunpack.c.l.b16 %v6394
    %v6684 = vunpack.c.h.b16 %v6394
    %v6685 = vunpack.c.l.b16 %v6395
    %v6686 = vunpack.c.h.b16 %v6395
    %v6687 = vunpack.c.l.b16 %v6396
    %v6688 = vunpack.c.h.b16 %v6396
    %v6689 = vunpack.c.l.b16 %v6397
    %v6690 = vunpack.c.h.b16 %v6397
    %v6691 = vunpack.c.l.b16 %v6398
    %v6692 = vunpack.c.h.b16 %v6398
    %v6693 = vunpack.c.l.b16 %v6399
    %v6694 = vunpack.c.h.b16 %v6399
    %v6695 = vunpack.c.l.b16 %v6400
    %v6696 = vunpack.c.h.b16 %v6400
    %v6697 = vunpack.c.l.b16 %v6401
    %v6698 = vunpack.c.h.b16 %v6401
    %v6699 = vunpack.c.l.b16 %v6402
    %v6700 = vunpack.c.h.b16 %v6402
    %v6701 = vunpack.c.l.b16 %v6403
    %v6702 = vunpack.c.h.b16 %v6403
    %v6703 = vunpack.c.l.b16 %v6404
    %v6704 = vunpack.c.h.b16 %v6404
    %v6705 = vunpack.c.l.b16 %v6405
    %v6706 = vunpack.c.h.b16 %v6405
    %v6707 = vunpack.c.l.b16 %v6406
    %v6708 = vunpack.c.h.b16 %v6406
    %v6709 = vunpack.c.l.b16 %v6407
    %v6710 = vunpack.c.h.b16 %v6407
    %v6711 = vunpack.c.l.b16 %v6408
    %v6712 = vunpack.c.h.b16 %v6408
    %v6713 = vunpack.c.l.b16 %v6409
    %v6714 = vunpack.c.h.b16 %v6409
    %v6715 = vunpack.c.l.b16 %v6410
    %v6716 = vunpack.c.h.b16 %v6410
    %v6717 = vunpack.c.l.b16 %v6411
    %v6718 = vunpack.c.h.b16 %v6411
    %v6719 = vunpack.c.l.b16 %v6412
    %v6720 = vunpack.c.h.b16 %v6412
    %v6721 = vunpack.c.l.b16 %v6413
    %v6722 = vunpack.c.h.b16 %v6413
    %v6723 = vunpack.c.l.b16 %v6414
    %v6724 = vunpack.c.h.b16 %v6414
    %v6725 = vunpack.c.l.b16 %v6415
    %v6726 = vunpack.c.h.b16 %v6415
    %v6727 = vunpack.c.l.b16 %v6416
    %v6728 = vunpack.c.h.b16 %v6416
    %v6729 = vunpack.c.l.b16 %v6417
    %v6730 = vunpack.c.h.b16 %v6417
    %v6731 = vunpack.c.l.b16 %v6418
    %v6732 = vunpack.c.h.b16 %v6418
    %v6733 = vunpack.c.l.b16 %v6419
    %v6734 = vunpack.c.h.b16 %v6419
    %v6735 = vunpack.c.l.b16 %v6420
    %v6736 = vunpack.c.h.b16 %v6420
    %v6737 = vunpack.c.l.b16 %v6421
    %v6738 = vunpack.c.h.b16 %v6421
    %v6739 = vunpack.c.l.b16 %v6422
    %v6740 = vunpack.c.h.b16 %v6422
    %v6741 = vunpack.c.l.b16 %v6423
    %v6742 = vunpack.c.h.b16 %v6423
    %v6743 = vunpack.c.l.b16 %v6424
    %v6744 = vunpack.c.h.b16 %v6424
    %v6745 = vunpack.c.l.b16 %v6425
    %v6746 = vunpack.c.h.b16 %v6425
    %v6747 = vunpack.c.l.b16 %v6426
    %v6748 = vunpack.c.h.b16 %v6426
    %v6749 = vunpack.c.l.b16 %v6427
    %v6750 = vunpack.c.h.b16 %v6427
    %v6751 = vunpack.c.l.b16 %v6428
    %v6752 = vunpack.c.h.b16 %v6428
    %v6753 = vunpack.c.l.b16 %v6429
    %v6754 = vunpack.c.h.b16 %v6429
    %v6755 = vunpack.c.l.b16 %v6430
    %v6756 = vunpack.c.h.b16 %v6430
    %v6757 = vunpack.c.l.b16 %v6431
    %v6758 = vunpack.c.h.b16 %v6431
    %v6759 = vunpack.c.l.b16 %v6432
    %v6760 = vunpack.c.h.b16 %v6432
    %v6761 = vunpack.c.l.b16 %v6433
    %v6762 = vunpack.c.h.b16 %v6433
    %v6763 = vunpack.c.l.b16 %v6434
    %v6764 = vunpack.c.h.b16 %v6434
    %v6765 = vunpack.c.l.b16 %v6435
    %v6766 = vunpack.c.h.b16 %v6435
    %v6767 = vunpack.c.l.b16 %v6436
    %v6768 = vunpack.c.h.b16 %v6436
    %v6769 = vunpack.c.l.b16 %v6437
    %v6770 = vunpack.c.h.b16 %v6437
    %v6771 = vunpack.c.l.b16 %v6438
    %v6772 = vunpack.c.h.b16 %v6438
    %v6773 = vunpack.c.l.b16 %v6439
    %v6774 = vunpack.c.h.b16 %v6439
    %v6775 = vunpack.c.l.b16 %v6440
    %v6776 = vunpack.c.h.b16 %v6440
    %v6777 = vunpack.c.l.b16 %v6441
    %v6778 = vunpack.c.h.b16 %v6441
    %v6779 = vunpack.c.l.b16 %v6442
    %v6780 = vunpack.c.h.b16 %v6442
    %v6781 = vunpack.c.l.b16 %v6443
    %v6782 = vunpack.c.h.b16 %v6443
    %v6783 = vunpack.c.l.b16 %v6444
    %v6784 = vunpack.c.h.b16 %v6444
    %v6785 = vunpack.c.l.b16 %v6445
    %v6786 = vunpack.c.h.b16 %v6445
    %v6787 = vunpack.c.l.b16 %v6446
    %v6788 = vunpack.c.h.b16 %v6446
    %v6789 = vunpack.c.l.b16 %v6447
    %v6790 = vunpack.c.h.b16 %v6447
    %v6791 = vunpack.c.l.b16 %v6448
    %v6792 = vunpack.c.h.b16 %v6448
    %v6793 = vunpack.c.l.b16 %v6449
    %v6794 = vunpack.c.h.b16 %v6449
    %v6795 = vunpack.c.l.b16 %v6450
    %v6796 = vunpack.c.h.b16 %v6450
    %v6797 = vunpack.c.l.b16 %v6451
    %v6798 = vunpack.c.h.b16 %v6451
    %v6799 = vunpack.c.l.b16 %v6452
    %v6800 = vunpack.c.h.b16 %v6452
    %v6801 = vunpack.c.l.b16 %v6453
    %v6802 = vunpack.c.h.b16 %v6453
    %v6803 = vunpack.c.l.b16 %v6454
    %v6804 = vunpack.c.h.b16 %v6454
    %v6805 = vunpack.c.l.b16 %v6455
    %v6806 = vunpack.c.h.b16 %v6455
    %v6807 = vunpack.c.l.b16 %v6456
    %v6808 = vunpack.c.h.b16 %v6456
    %v6809 = vunpack.c.l.b16 %v6457
    %v6810 = vunpack.c.h.b16 %v6457
    %v6811 = vunpack.c.l.b16 %v6458
    %v6812 = vunpack.c.h.b16 %v6458
    %v6813 = vunpack.c.l.b16 %v6459
    %v6814 = vunpack.c.h.b16 %v6459
    %v6815 = vunpack.c.l.b16 %v6460
    %v6816 = vunpack.c.h.b16 %v6460
    %v6817 = vunpack.c.l.b16 %v6461
    %v6818 = vunpack.c.h.b16 %v6461
    %v6819 = vunpack.c.l.b16 %v6462
    %v6820 = vunpack.c.h.b16 %v6462
    %v6821 = vunpack.c.l.b16 %v6463
    %v6822 = vunpack.c.h.b16 %v6463
    %v6823 = vunpack.c.l.b16 %v6464
    %v6824 = vunpack.c.h.b16 %v6464
    %v6825 = vunpack.c.l.b16 %v6465
    %v6826 = vunpack.c.h.b16 %v6465
    %v6827 = vunpack.c.l.b16 %v6466
    %v6828 = vunpack.c.h.b16 %v6466
    %v6829 = vunpack.c.l.b16 %v6467
    %v6830 = vunpack.c.h.b16 %v6467
    %v6831 = vunpack.c.l.b16 %v6468
    %v6832 = vunpack.c.h.b16 %v6468
    %v6833 = vunpack.c.l.b16 %v6469
    %v6834 = vunpack.c.h.b16 %v6469
    %v6835 = vunpack.c.l.b16 %v6470
    %v6836 = vunpack.c.h.b16 %v6470
    %v6837 = vunpack.c.l.b16 %v6471
    %v6838 = vunpack.c.h.b16 %v6471
    %v6839 = vunpack.c.l.b16 %v6472
    %v6840 = vunpack.c.h.b16 %v6472
    %v6841 = vunpack.c.l.b16 %v6473
    %v6842 = vunpack.c.h.b16 %v6473
    %v6843 = vunpack.c.l.b16 %v6474
    %v6844 = vunpack.c.h.b16 %v6474
    %v6845 = vunpack.c.l.b16 %v6475
    %v6846 = vunpack.c.h.b16 %v6475
    %v6847 = vunpack.c.l.b16 %v6476
    %v6848 = vunpack.c.h.b16 %v6476
    %v6849 = vunpack.c.l.b16 %v6477
    %v6850 = vunpack.c.h.b16 %v6477
    %v6851 = vunpack.c.l.b16 %v6478
    %v6852 = vunpack.c.h.b16 %v6478
    %v6853 = vunpack.c.l.b16 %v6479
    %v6854 = vunpack.c.h.b16 %v6479
    %v6855 = vunpack.c.l.b16 %v6480
    %v6856 = vunpack.c.h.b16 %v6480
    %v6857 = vunpack.c.l.b16 %v6481
    %v6858 = vunpack.c.h.b16 %v6481
    %v6859 = vunpack.c.l.b16 %v6482
    %v6860 = vunpack.c.h.b16 %v6482
    %v6861 = vunpack.c.l.b16 %v6483
    %v6862 = vunpack.c.h.b16 %v6483
    %v6863 = vunpack.c.l.b16 %v6484
    %v6864 = vunpack.c.h.b16 %v6484
    %v6865 = vunpack.c.l.b16 %v6485
    %v6866 = vunpack.c.h.b16 %v6485
    %v6867 = vunpack.c.l.b16 %v6486
    %v6868 = vunpack.c.h.b16 %v6486
    %v6869 = vunpack.c.l.b16 %v6487
    %v6870 = vunpack.c.h.b16 %v6487
    %v6871 = vunpack.c.l.b16 %v6488
    %v6872 = vunpack.c.h.b16 %v6488
    %v6873 = vunpack.c.l.b16 %v6489
    %v6874 = vunpack.c.h.b16 %v6489
    %v6875 = vunpack.c.l.b16 %v6490
    %v6876 = vunpack.c.h.b16 %v6490
    %v6877 = vunpack.c.l.b16 %v6491
    %v6878 = vunpack.c.h.b16 %v6491
    %v6879 = vunpack.c.l.b16 %v6492
    %v6880 = vunpack.c.h.b16 %v6492
    %v6881 = vunpack.c.l.b16 %v6493
    %v6882 = vunpack.c.h.b16 %v6493
    %v6883 = vunpack.c.l.b16 %v6494
    %v6884 = vunpack.c.h.b16 %v6494
    %v6885 = vunpack.c.l.b16 %v6495
    %v6886 = vunpack.c.h.b16 %v6495
    %v6887 = vunpack.c.l.b16 %v6496
    %v6888 = vunpack.c.h.b16 %v6496
    %v6889 = vunpack.c.l.b16 %v6497
    %v6890 = vunpack.c.h.b16 %v6497
    %v6891 = vunpack.c.l.b16 %v6498
    %v6892 = vunpack.c.h.b16 %v6498
    %v6893 = vunpack.c.l.b16 %v6499
    %v6894 = vunpack.c.h.b16 %v6499
    %v6895 = vunpack.c.l.b16 %v6500
    %v6896 = vunpack.c.h.b16 %v6500
    %v6897 = vunpack.c.l.b16 %v6501
    %v6898 = vunpack.c.h.b16 %v6501
    %v6899 = vunpack.c.l.b16 %v6502
    %v6900 = vunpack.c.h.b16 %v6502
    %v6901 = vunpack.c.l.b16 %v6503
    %v6902 = vunpack.c.h.b16 %v6503
    %v6903 = vunpack.c.l.b16 %v6504
    %v6904 = vunpack.c.h.b16 %v6504
    %v6905 = vunpack.c.l.b16 %v6505
    %v6906 = vunpack.c.h.b16 %v6505
    %v6907 = vunpack.c.l.b16 %v6506
    %v6908 = vunpack.c.h.b16 %v6506
    %v6909 = vunpack.c.l.b16 %v6507
    %v6910 = vunpack.c.h.b16 %v6507
    %v6911 = vunpack.c.l.b16 %v6508
    %v6912 = vunpack.c.h.b16 %v6508
    %v6913 = vunpack.c.l.b16 %v6509
    %v6914 = vunpack.c.h.b16 %v6509
    %v6915 = vunpack.c.l.b16 %v6510
    %v6916 = vunpack.c.h.b16 %v6510
    %v6917 = vpack.c.b16 %v6665, %v6661
    %v6918 = vpack.c.b16 %v6666, %v6662
    %v6919 = vpack.c.b16 %v6667, %v6663
    %v6920 = vpack.c.b16 %v6668, %v6664
    %v6921 = vpack.c.b16 %v6673, %v6669
    %v6922 = vpack.c.b16 %v6674, %v6670
    %v6923 = vpack.c.b16 %v6675, %v6671
    %v6924 = vpack.c.b16 %v6676, %v6672
    %v6925 = vpack.c.b16 %v6681, %v6677
    %v6926 = vpack.c.b16 %v6682, %v6678
    %v6927 = vpack.c.b16 %v6683, %v6679
    %v6928 = vpack.c.b16 %v6684, %v6680
    %v6929 = vpack.c.b16 %v6689, %v6685
    %v6930 = vpack.c.b16 %v6690, %v6686
    %v6931 = vpack.c.b16 %v6691, %v6687
    %v6932 = vpack.c.b16 %v6692, %v6688
    %v6933 = vpack.c.b16 %v6697, %v6693
    %v6934 = vpack.c.b16 %v6698, %v6694
    %v6935 = vpack.c.b16 %v6699, %v6695
    %v6936 = vpack.c.b16 %v6700, %v6696
    %v6937 = vpack.c.b16 %v6705, %v6701
    %v6938 = vpack.c.b16 %v6706, %v6702
    %v6939 = vpack.c.b16 %v6707, %v6703
    %v6940 = vpack.c.b16 %v6708, %v6704
    %v6941 = vpack.c.b16 %v6713, %v6709
    %v6942 = vpack.c.b16 %v6714, %v6710
    %v6943 = vpack.c.b16 %v6715, %v6711
    %v6944 = vpack.c.b16 %v6716, %v6712
    %v6945 = vpack.c.b16 %v6721, %v6717
    %v6946 = vpack.c.b16 %v6722, %v6718
    %v6947 = vpack.c.b16 %v6723, %v6719
    %v6948 = vpack.c.b16 %v6724, %v6720
    %v6949 = vpack.c.b16 %v6729, %v6725
    %v6950 = vpack.c.b16 %v6730, %v6726
    %v6951 = vpack.c.b16 %v6731, %v6727
    %v6952 = vpack.c.b16 %v6732, %v6728
    %v6953 = vpack.c.b16 %v6737, %v6733
    %v6954 = vpack.c.b16 %v6738, %v6734
    %v6955 = vpack.c.b16 %v6739, %v6735
    %v6956 = vpack.c.b16 %v6740, %v6736
    %v6957 = vpack.c.b16 %v6745, %v6741
    %v6958 = vpack.c.b16 %v6746, %v6742
    %v6959 = vpack.c.b16 %v6747, %v6743
    %v6960 = vpack.c.b16 %v6748, %v6744
    %v6961 = vpack.c.b16 %v6753, %v6749
    %v6962 = vpack.c.b16 %v6754, %v6750
    %v6963 = vpack.c.b16 %v6755, %v6751
    %v6964 = vpack.c.b16 %v6756, %v6752
    %v6965 = vpack.c.b16 %v6761, %v6757
    %v6966 = vpack.c.b16 %v6762, %v6758
    %v6967 = vpack.c.b16 %v6763, %v6759
    %v6968 = vpack.c.b16 %v6764, %v6760
    %v6969 = vpack.c.b16 %v6769, %v6765
    %v6970 = vpack.c.b16 %v6770, %v6766
    %v6971 = vpack.c.b16 %v6771, %v6767
    %v6972 = vpack.c.b16 %v6772, %v6768
    %v6973 = vpack.c.b16 %v6777, %v6773
    %v6974 = vpack.c.b16 %v6778, %v6774
    %v6975 = vpack.c.b16 %v6779, %v6775
    %v6976 = vpack.c.b16 %v6780, %v6776
    %v6977 = vpack.c.b16 %v6785, %v6781
    %v6978 = vpack.c.b16 %v6786, %v6782
    %v6979 = vpack.c.b16 %v6787, %v6783
    %v6980 = vpack.c.b16 %v6788, %v6784
    %v6981 = vpack.c.b16 %v6793, %v6789
    %v6982 = vpack.c.b16 %v6794, %v6790
    %v6983 = vpack.c.b16 %v6795, %v6791
    %v6984 = vpack.c.b16 %v6796, %v6792
    %v6985 = vpack.c.b16 %v6801, %v6797
    %v6986 = vpack.c.b16 %v6802, %v6798
    %v6987 = vpack.c.b16 %v6803, %v6799
    %v6988 = vpack.c.b16 %v6804, %v6800
    %v6989 = vpack.c.b16 %v6809, %v6805
    %v6990 = vpack.c.b16 %v6810, %v6806
    %v6991 = vpack.c.b16 %v6811, %v6807
    %v6992 = vpack.c.b16 %v6812, %v6808
    %v6993 = vpack.c.b16 %v6817, %v6813
    %v6994 = vpack.c.b16 %v6818, %v6814
    %v6995 = vpack.c.b16 %v6819, %v6815
    %v6996 = vpack.c.b16 %v6820, %v6816
    %v6997 = vpack.c.b16 %v6825, %v6821
    %v6998 = vpack.c.b16 %v6826, %v6822
    %v6999 = vpack.c.b16 %v6827, %v6823
    %v7000 = vpack.c.b16 %v6828, %v6824
    %v7001 = vpack.c.b16 %v6833, %v6829
    %v7002 = vpack.c.b16 %v6834, %v6830
    %v7003 = vpack.c.b16 %v6835, %v6831
    %v7004 = vpack.c.b16 %v6836, %v6832
    %v7005 = vpack.c.b16 %v6841, %v6837
    %v7006 = vpack.c.b16 %v6842, %v6838
    %v7007 = vpack.c.b16 %v6843, %v6839
    %v7008 = vpack.c.b16 %v6844, %v6840
    %v7009 = vpack.c.b16 %v6849, %v6845
    %v7010 = vpack.c.b16 %v6850, %v6846
    %v7011 = vpack.c.b16 %v6851, %v6847
    %v7012 = vpack.c.b16 %v6852, %v6848
    %v7013 = vpack.c.b16 %v6857, %v6853
    %v7014 = vpack.c.b16 %v6858, %v6854
    %v7015 = vpack.c.b16 %v6859, %v6855
    %v7016 = vpack.c.b16 %v6860, %v6856
    %v7017 = vpack.c.b16 %v6865, %v6861
    %v7018 = vpack.c.b16 %v6866, %v6862
    %v7019 = vpack.c.b16 %v6867, %v6863
    %v7020 = vpack.c.b16 %v6868, %v6864
    %v7021 = vpack.c.b16 %v6873, %v6869
    %v7022 = vpack.c.b16 %v6874, %v6870
    %v7023 = vpack.c.b16 %v6875, %v6871
    %v7024 = vpack.c.b16 %v6876, %v6872
    %v7025 = vpack.c.b16 %v6881, %v6877
    %v7026 = vpack.c.b16 %v6882, %v6878
    %v7027 = vpack.c.b16 %v6883, %v6879
    %v7028 = vpack.c.b16 %v6884, %v6880
    %v7029 = vpack.c.b16 %v6889, %v6885
    %v7030 = vpack.c.b16 %v6890, %v6886
    %v7031 = vpack.c.b16 %v6891, %v6887
    %v7032 = vpack.c.b16 %v6892, %v6888
    %v7033 = vpack.c.b16 %v6897, %v6893
    %v7034 = vpack.c.b16 %v6898, %v6894
    %v7035 = vpack.c.b16 %v6899, %v6895
    %v7036 = vpack.c.b16 %v6900, %v6896
    %v7037 = vpack.c.b16 %v6905, %v6901
    %v7038 = vpack.c.b16 %v6906, %v6902
    %v7039 = vpack.c.b16 %v6907, %v6903
    %v7040 = vpack.c.b16 %v6908, %v6904
    %v7041 = vpack.c.b16 %v6913, %v6909
    %v7042 = vpack.c.b16 %v6914, %v6910
    %v7043 = vpack.c.b16 %v6915, %v6911
    %v7044 = vpack.c.b16 %v6916, %v6912
    %7173 = vmatprep.subr.bf16.mxu0 %v6918
    %7174 = vmatpush1.bf16.msra.mxu0 %v6917
    %7175 = vmatprep.subr.bf16.mxu0 %v6922
    %7176 = vmatpush1.bf16.msra.mxu0 %v6921
    %7177 = vmatprep.subr.bf16.mxu0 %v6926
    %7178 = vmatpush1.bf16.msra.mxu0 %v6925
    %7179 = vmatprep.subr.bf16.mxu0 %v6930
    %7180 = vmatpush1.bf16.msra.mxu0 %v6929
    %7181 = vmatprep.subr.bf16.mxu0 %v6934
    %7182 = vmatpush1.bf16.msra.mxu0 %v6933
    %7183 = vmatprep.subr.bf16.mxu0 %v6938
    %7184 = vmatpush1.bf16.msra.mxu0 %v6937
    %7185 = vmatprep.subr.bf16.mxu0 %v6942
    %7186 = vmatpush1.bf16.msra.mxu0 %v6941
    %7187 = vmatprep.subr.bf16.mxu0 %v6946
    %7188 = vmatpush1.bf16.msra.mxu0 %v6945
    %7189 = vmatprep.subr.bf16.mxu0 %v6950
    %7190 = vmatpush1.bf16.msra.mxu0 %v6949
    %7191 = vmatprep.subr.bf16.mxu0 %v6954
    %7192 = vmatpush1.bf16.msra.mxu0 %v6953
    %7193 = vmatprep.subr.bf16.mxu0 %v6958
    %7194 = vmatpush1.bf16.msra.mxu0 %v6957
    %7195 = vmatprep.subr.bf16.mxu0 %v6962
    %7196 = vmatpush1.bf16.msra.mxu0 %v6961
    %7197 = vmatprep.subr.bf16.mxu0 %v6966
    %7198 = vmatpush1.bf16.msra.mxu0 %v6965
    %7199 = vmatprep.subr.bf16.mxu0 %v6970
    %7200 = vmatpush1.bf16.msra.mxu0 %v6969
    %7201 = vmatprep.subr.bf16.mxu0 %v6974
    %7202 = vmatpush1.bf16.msra.mxu0 %v6973
    %7203 = vmatprep.subr.bf16.mxu0 %v6978
    %7204 = vmatpush1.bf16.msra.mxu0 %v6977
    %7205 = vmatprep.mubr.bf16.mxu0 %v6380
    %7206 = vmatmul.mubr.bf16.gmra.mrb[0].mxu0 %v6379
    %v7207 = vpop.f32.mrb[0].mxu0
    %v7208 = vadd.f32 %v6516, %v7207
    %v7209 = vpop.f32.mrb[0].mxu0
    %v7210 = vadd.f32 %v6520, %v7209
    %v7211 = vpop.f32.mrb[0].mxu0
    %v7212 = vpop.f32.mrb[0].mxu0
    %7213 = vdwg.mxu0
    %7214 = vmatprep.subr.bf16.mxu0 %v6982
    %7215 = vmatpush1.bf16.msra.mxu0 %v6981
    %7216 = vmatprep.subr.bf16.mxu0 %v6986
    %7217 = vmatpush1.bf16.msra.mxu0 %v6985
    %7218 = vmatprep.subr.bf16.mxu0 %v6990
    %7219 = vmatpush1.bf16.msra.mxu0 %v6989
    %7220 = vmatprep.subr.bf16.mxu0 %v6994
    %7221 = vmatpush1.bf16.msra.mxu0 %v6993
    %7222 = vmatprep.subr.bf16.mxu0 %v6998
    %7223 = vmatpush1.bf16.msra.mxu0 %v6997
    %7224 = vmatprep.subr.bf16.mxu0 %v7002
    %7225 = vmatpush1.bf16.msra.mxu0 %v7001
    %7226 = vmatprep.subr.bf16.mxu0 %v7006
    %7227 = vmatpush1.bf16.msra.mxu0 %v7005
    %7228 = vmatprep.subr.bf16.mxu0 %v7010
    %7229 = vmatpush1.bf16.msra.mxu0 %v7009
    %7230 = vmatprep.subr.bf16.mxu0 %v7014
    %7231 = vmatpush1.bf16.msra.mxu0 %v7013
    %7232 = vmatprep.subr.bf16.mxu0 %v7018
    %7233 = vmatpush1.bf16.msra.mxu0 %v7017
    %7234 = vmatprep.subr.bf16.mxu0 %v7022
    %7235 = vmatpush1.bf16.msra.mxu0 %v7021
    %7236 = vmatprep.subr.bf16.mxu0 %v7026
    %7237 = vmatpush1.bf16.msra.mxu0 %v7025
    %7238 = vmatprep.subr.bf16.mxu0 %v7030
    %7239 = vmatpush1.bf16.msra.mxu0 %v7029
    %7240 = vmatprep.subr.bf16.mxu0 %v7034
    %7241 = vmatpush1.bf16.msra.mxu0 %v7033
    %7242 = vmatprep.subr.bf16.mxu0 %v7038
    %7243 = vmatpush1.bf16.msra.mxu0 %v7037
    %7244 = vmatprep.subr.bf16.mxu0 %v7042
    %7245 = vmatpush1.bf16.msra.mxu0 %v7041
    %7246 = vmatprep.mubr.bf16.mxu0 %v6382
    %7247 = vmatmul.mubr.bf16.gmra.mrb[0].mxu0 %v6381
    %v7248 = vpop.f32.mrb[0].mxu0
    %v7249 = vadd.f32 %v7208, %v7248
    %v7250 = vpop.f32.mrb[0].mxu0
    %v7251 = vadd.f32 %v7210, %v7250
    %v7252 = vpop.f32.mrb[0].mxu0
    %v7253 = vpop.f32.mrb[0].mxu0
    %7254 = vdwg.mxu0
    %7255 = vmatprep.subr.bf16.mxu0 %v6920
    %7256 = vmatpush1.bf16.msra.mxu0 %v6919
    %7257 = vmatprep.subr.bf16.mxu0 %v6924
    %7258 = vmatpush1.bf16.msra.mxu0 %v6923
    %7259 = vmatprep.subr.bf16.mxu0 %v6928
    %7260 = vmatpush1.bf16.msra.mxu0 %v6927
    %7261 = vmatprep.subr.bf16.mxu0 %v6932
    %7262 = vmatpush1.bf16.msra.mxu0 %v6931
    %7263 = vmatprep.subr.bf16.mxu0 %v6936
    %7264 = vmatpush1.bf16.msra.mxu0 %v6935
    %7265 = vmatprep.subr.bf16.mxu0 %v6940
    %7266 = vmatpush1.bf16.msra.mxu0 %v6939
    %7267 = vmatprep.subr.bf16.mxu0 %v6944
    %7268 = vmatpush1.bf16.msra.mxu0 %v6943
    %7269 = vmatprep.subr.bf16.mxu0 %v6948
    %7270 = vmatpush1.bf16.msra.mxu0 %v6947
    %7271 = vmatprep.subr.bf16.mxu0 %v6952
    %7272 = vmatpush1.bf16.msra.mxu0 %v6951
    %7273 = vmatprep.subr.bf16.mxu0 %v6956
    %7274 = vmatpush1.bf16.msra.mxu0 %v6955
    %7275 = vmatprep.subr.bf16.mxu0 %v6960
    %7276 = vmatpush1.bf16.msra.mxu0 %v6959
    %7277 = vmatprep.subr.bf16.mxu0 %v6964
    %7278 = vmatpush1.bf16.msra.mxu0 %v6963
    %7279 = vmatprep.subr.bf16.mxu0 %v6968
    %7280 = vmatpush1.bf16.msra.mxu0 %v6967
    %7281 = vmatprep.subr.bf16.mxu0 %v6972
    %7282 = vmatpush1.bf16.msra.mxu0 %v6971
    %7283 = vmatprep.subr.bf16.mxu0 %v6976
    %7284 = vmatpush1.bf16.msra.mxu0 %v6975
    %7285 = vmatprep.subr.bf16.mxu0 %v6980
    %7286 = vmatpush1.bf16.msra.mxu0 %v6979
    %7287 = vmatprep.mubr.bf16.mxu0 %v6380
    %7288 = vmatmul.mubr.bf16.gmra.mrb[0].mxu0 %v6379
    %v7289 = vpop.f32.mrb[0].mxu0
    %v7290 = vadd.f32 %v6524, %v7289
    %v7291 = vpop.f32.mrb[0].mxu0
    %v7292 = vadd.f32 %v6528, %v7291
    %v7293 = vpop.f32.mrb[0].mxu0
    %v7294 = vpop.f32.mrb[0].mxu0
    %7295 = vdwg.mxu0
    %7296 = vmatprep.subr.bf16.mxu0 %v6984
    %7297 = vmatpush1.bf16.msra.mxu0 %v6983
    %7298 = vmatprep.subr.bf16.mxu0 %v6988
    %7299 = vmatpush1.bf16.msra.mxu0 %v6987
    %7300 = vmatprep.subr.bf16.mxu0 %v6992
    %7301 = vmatpush1.bf16.msra.mxu0 %v6991
    %7302 = vmatprep.subr.bf16.mxu0 %v6996
    %7303 = vmatpush1.bf16.msra.mxu0 %v6995
    %7304 = vmatprep.subr.bf16.mxu0 %v7000
    %7305 = vmatpush1.bf16.msra.mxu0 %v6999
    %7306 = vmatprep.subr.bf16.mxu0 %v7004
    %7307 = vmatpush1.bf16.msra.mxu0 %v7003
    %7308 = vmatprep.subr.bf16.mxu0 %v7008
    %7309 = vmatpush1.bf16.msra.mxu0 %v7007
    %7310 = vmatprep.subr.bf16.mxu0 %v7012
    %7311 = vmatpush1.bf16.msra.mxu0 %v7011
    %7312 = vmatprep.subr.bf16.mxu0 %v7016
    %7313 = vmatpush1.bf16.msra.mxu0 %v7015
    %7314 = vmatprep.subr.bf16.mxu0 %v7020
    %7315 = vmatpush1.bf16.msra.mxu0 %v7019
    %7316 = vmatprep.subr.bf16.mxu0 %v7024
    %7317 = vmatpush1.bf16.msra.mxu0 %v7023
    %7318 = vmatprep.subr.bf16.mxu0 %v7028
    %7319 = vmatpush1.bf16.msra.mxu0 %v7027
    %7320 = vmatprep.subr.bf16.mxu0 %v7032
    %7321 = vmatpush1.bf16.msra.mxu0 %v7031
    %7322 = vmatprep.subr.bf16.mxu0 %v7036
    %7323 = vmatpush1.bf16.msra.mxu0 %v7035
    %7324 = vmatprep.subr.bf16.mxu0 %v7040
    %7325 = vmatpush1.bf16.msra.mxu0 %v7039
    %7326 = vmatprep.subr.bf16.mxu0 %v7044
    %7327 = vmatpush1.bf16.msra.mxu0 %v7043
    %7328 = vmatprep.mubr.bf16.mxu0 %v6382
    %7329 = vmatmul.mubr.bf16.gmra.mrb[0].mxu0 %v6381
    %v7330 = vpop.f32.mrb[0].mxu0
    %v7331 = vadd.f32 %v7290, %v7330
    %v7332 = vpop.f32.mrb[0].mxu0
    %v7333 = vadd.f32 %v7292, %v7332
    %v7334 = vpop.f32.mrb[0].mxu0
    %v7335 = vpop.f32.mrb[0].mxu0
    %7336 = vdwg.mxu0
    %v7337 = vmax.f32 %v7249, 0.0
    %v7338 = vmax.f32 %v7251, 0.0
    %v7339 = vmax.f32 %v7331, 0.0
    %v7340 = vmax.f32 %v7333, 0.0
    %v7341 = vpack.c.bf16 %v7337, %v7337
    %v7342 = vpack.c.bf16 %v7338, %v7338
    %v7343 = vpack.c.bf16 %v7339, %v7339
    %v7344 = vpack.c.bf16 %v7340, %v7340
    %v7345 = vld [vmem:[#allocation15] sm:$0xf]
    %v7346 = vld [vmem:[#allocation15 + $0x4] sm:$0xf]
    %v7347 = vld [vmem:[#allocation15 + $0x8] sm:$0xf]
    %v7348 = vld [vmem:[#allocation15 + $0xc] sm:$0xf]
    %v7349 = vld [vmem:[#allocation15 + $0x10] sm:$0xf]
    %v7350 = vld [vmem:[#allocation15 + $0x14] sm:$0xf]
    %v7351 = vld [vmem:[#allocation15 + $0x18] sm:$0xf]
    %v7352 = vld [vmem:[#allocation15 + $0x1c] sm:$0xf]
    %v7353 = vld [vmem:[#allocation15 + $0x20] sm:$0xf]
    %v7354 = vld [vmem:[#allocation15 + $0x24] sm:$0xf]
    %v7355 = vld [vmem:[#allocation15 + $0x28] sm:$0xf]
    %v7356 = vld [vmem:[#allocation15 + $0x2c] sm:$0xf]
    %v7357 = vld [vmem:[#allocation15 + $0x30] sm:$0xf]
    %v7358 = vld [vmem:[#allocation15 + $0x34] sm:$0xf]
    %v7359 = vld [vmem:[#allocation15 + $0x38] sm:$0xf]
    %v7360 = vld [vmem:[#allocation15 + $0x3c] sm:$0xf]
    %v7361 = vld [vmem:[#allocation15 + $0x40] sm:$0xf]
    %v7362 = vld [vmem:[#allocation15 + $0x44] sm:$0xf]
    %v7363 = vld [vmem:[#allocation15 + $0x48] sm:$0xf]
    %v7364 = vld [vmem:[#allocation15 + $0x4c] sm:$0xf]
    %v7365 = vld [vmem:[#allocation15 + $0x50] sm:$0xf]
    %v7366 = vld [vmem:[#allocation15 + $0x54] sm:$0xf]
    %v7367 = vld [vmem:[#allocation15 + $0x58] sm:$0xf]
    %v7368 = vld [vmem:[#allocation15 + $0x5c] sm:$0xf]
    %v7369 = vld [vmem:[#allocation15 + $0x60] sm:$0xf]
    %v7370 = vld [vmem:[#allocation15 + $0x64] sm:$0xf]
    %v7371 = vld [vmem:[#allocation15 + $0x68] sm:$0xf]
    %v7372 = vld [vmem:[#allocation15 + $0x6c] sm:$0xf]
    %v7373 = vld [vmem:[#allocation15 + $0x70] sm:$0xf]
    %v7374 = vld [vmem:[#allocation15 + $0x74] sm:$0xf]
    %v7375 = vld [vmem:[#allocation15 + $0x78] sm:$0xf]
    %v7376 = vld [vmem:[#allocation15 + $0x7c] sm:$0xf]
    %v7377 = vld [vmem:[#allocation15 + $0x80] sm:$0xf]
    %v7378 = vld [vmem:[#allocation15 + $0x84] sm:$0xf]
    %v7379 = vld [vmem:[#allocation15 + $0x88] sm:$0xf]
    %v7380 = vld [vmem:[#allocation15 + $0x8c] sm:$0xf]
    %v7381 = vld [vmem:[#allocation15 + $0x90] sm:$0xf]
    %v7382 = vld [vmem:[#allocation15 + $0x94] sm:$0xf]
    %v7383 = vld [vmem:[#allocation15 + $0x98] sm:$0xf]
    %v7384 = vld [vmem:[#allocation15 + $0x9c] sm:$0xf]
    %v7385 = vld [vmem:[#allocation15 + $0xa0] sm:$0xf]
    %v7386 = vld [vmem:[#allocation15 + $0xa4] sm:$0xf]
    %v7387 = vld [vmem:[#allocation15 + $0xa8] sm:$0xf]
    %v7388 = vld [vmem:[#allocation15 + $0xac] sm:$0xf]
    %v7389 = vld [vmem:[#allocation15 + $0xb0] sm:$0xf]
    %v7390 = vld [vmem:[#allocation15 + $0xb4] sm:$0xf]
    %v7391 = vld [vmem:[#allocation15 + $0xb8] sm:$0xf]
    %v7392 = vld [vmem:[#allocation15 + $0xbc] sm:$0xf]
    %v7393 = vld [vmem:[#allocation15 + $0xc0] sm:$0xf]
    %v7394 = vld [vmem:[#allocation15 + $0xc4] sm:$0xf]
    %v7395 = vld [vmem:[#allocation15 + $0xc8] sm:$0xf]
    %v7396 = vld [vmem:[#allocation15 + $0xcc] sm:$0xf]
    %v7397 = vld [vmem:[#allocation15 + $0xd0] sm:$0xf]
    %v7398 = vld [vmem:[#allocation15 + $0xd4] sm:$0xf]
    %v7399 = vld [vmem:[#allocation15 + $0xd8] sm:$0xf]
    %v7400 = vld [vmem:[#allocation15 + $0xdc] sm:$0xf]
    %v7401 = vld [vmem:[#allocation15 + $0xe0] sm:$0xf]
    %v7402 = vld [vmem:[#allocation15 + $0xe4] sm:$0xf]
    %v7403 = vld [vmem:[#allocation15 + $0xe8] sm:$0xf]
    %v7404 = vld [vmem:[#allocation15 + $0xec] sm:$0xf]
    %v7405 = vld [vmem:[#allocation15 + $0xf0] sm:$0xf]
    %v7406 = vld [vmem:[#allocation15 + $0xf4] sm:$0xf]
    %v7407 = vld [vmem:[#allocation15 + $0xf8] sm:$0xf]
    %v7408 = vld [vmem:[#allocation15 + $0xfc] sm:$0xf]
    %v7409 = vld [vmem:[#allocation16] sm:$0x1]
    %v7411 = vlaneseq
    %v7412 = vshrl.u32 %v7411, 7
    %v7413 = vsub.s32 0, %v7412
    %v7414 = vrot.slane %v7409, %v7413
    %v7480 = vunpack.c.l.b16 %v7345
    %v7481 = vunpack.c.l.b16 %v7346
    %v7482 = vunpack.c.l.b16 %v7347
    %v7483 = vunpack.c.l.b16 %v7348
    %v7484 = vunpack.c.l.b16 %v7349
    %v7485 = vunpack.c.l.b16 %v7350
    %v7486 = vunpack.c.l.b16 %v7351
    %v7487 = vunpack.c.l.b16 %v7352
    %v7488 = vunpack.c.l.b16 %v7353
    %v7489 = vunpack.c.l.b16 %v7354
    %v7490 = vunpack.c.l.b16 %v7355
    %v7491 = vunpack.c.l.b16 %v7356
    %v7492 = vunpack.c.l.b16 %v7357
    %v7493 = vunpack.c.l.b16 %v7358
    %v7494 = vunpack.c.l.b16 %v7359
    %v7495 = vunpack.c.l.b16 %v7360
    %v7496 = vunpack.c.l.b16 %v7361
    %v7497 = vunpack.c.l.b16 %v7362
    %v7498 = vunpack.c.l.b16 %v7363
    %v7499 = vunpack.c.l.b16 %v7364
    %v7500 = vunpack.c.l.b16 %v7365
    %v7501 = vunpack.c.l.b16 %v7366
    %v7502 = vunpack.c.l.b16 %v7367
    %v7503 = vunpack.c.l.b16 %v7368
    %v7504 = vunpack.c.l.b16 %v7369
    %v7505 = vunpack.c.l.b16 %v7370
    %v7506 = vunpack.c.l.b16 %v7371
    %v7507 = vunpack.c.l.b16 %v7372
    %v7508 = vunpack.c.l.b16 %v7373
    %v7509 = vunpack.c.l.b16 %v7374
    %v7510 = vunpack.c.l.b16 %v7375
    %v7511 = vunpack.c.l.b16 %v7376
    %v7512 = vunpack.c.l.b16 %v7377
    %v7513 = vunpack.c.l.b16 %v7378
    %v7514 = vunpack.c.l.b16 %v7379
    %v7515 = vunpack.c.l.b16 %v7380
    %v7516 = vunpack.c.l.b16 %v7381
    %v7517 = vunpack.c.l.b16 %v7382
    %v7518 = vunpack.c.l.b16 %v7383
    %v7519 = vunpack.c.l.b16 %v7384
    %v7520 = vunpack.c.l.b16 %v7385
    %v7521 = vunpack.c.l.b16 %v7386
    %v7522 = vunpack.c.l.b16 %v7387
    %v7523 = vunpack.c.l.b16 %v7388
    %v7524 = vunpack.c.l.b16 %v7389
    %v7525 = vunpack.c.l.b16 %v7390
    %v7526 = vunpack.c.l.b16 %v7391
    %v7527 = vunpack.c.l.b16 %v7392
    %v7528 = vunpack.c.l.b16 %v7393
    %v7529 = vunpack.c.l.b16 %v7394
    %v7530 = vunpack.c.l.b16 %v7395
    %v7531 = vunpack.c.l.b16 %v7396
    %v7532 = vunpack.c.l.b16 %v7397
    %v7533 = vunpack.c.l.b16 %v7398
    %v7534 = vunpack.c.l.b16 %v7399
    %v7535 = vunpack.c.l.b16 %v7400
    %v7536 = vunpack.c.l.b16 %v7401
    %v7537 = vunpack.c.l.b16 %v7402
    %v7538 = vunpack.c.l.b16 %v7403
    %v7539 = vunpack.c.l.b16 %v7404
    %v7540 = vunpack.c.l.b16 %v7405
    %v7541 = vunpack.c.l.b16 %v7406
    %v7542 = vunpack.c.l.b16 %v7407
    %v7543 = vunpack.c.l.b16 %v7408
    %v7544 = vpack.c.b16 %v7481, %v7480
    %v7545 = vpack.c.b16 %v7483, %v7482
    %v7546 = vpack.c.b16 %v7485, %v7484
    %v7547 = vpack.c.b16 %v7487, %v7486
    %v7548 = vpack.c.b16 %v7489, %v7488
    %v7549 = vpack.c.b16 %v7491, %v7490
    %v7550 = vpack.c.b16 %v7493, %v7492
    %v7551 = vpack.c.b16 %v7495, %v7494
    %v7552 = vpack.c.b16 %v7497, %v7496
    %v7553 = vpack.c.b16 %v7499, %v7498
    %v7554 = vpack.c.b16 %v7501, %v7500
    %v7555 = vpack.c.b16 %v7503, %v7502
    %v7556 = vpack.c.b16 %v7505, %v7504
    %v7557 = vpack.c.b16 %v7507, %v7506
    %v7558 = vpack.c.b16 %v7509, %v7508
    %v7559 = vpack.c.b16 %v7511, %v7510
    %v7560 = vpack.c.b16 %v7513, %v7512
    %v7561 = vpack.c.b16 %v7515, %v7514
    %v7562 = vpack.c.b16 %v7517, %v7516
    %v7563 = vpack.c.b16 %v7519, %v7518
    %v7564 = vpack.c.b16 %v7521, %v7520
    %v7565 = vpack.c.b16 %v7523, %v7522
    %v7566 = vpack.c.b16 %v7525, %v7524
    %v7567 = vpack.c.b16 %v7527, %v7526
    %v7568 = vpack.c.b16 %v7529, %v7528
    %v7569 = vpack.c.b16 %v7531, %v7530
    %v7570 = vpack.c.b16 %v7533, %v7532
    %v7571 = vpack.c.b16 %v7535, %v7534
    %v7572 = vpack.c.b16 %v7537, %v7536
    %v7573 = vpack.c.b16 %v7539, %v7538
    %v7574 = vpack.c.b16 %v7541, %v7540
    %v7575 = vpack.c.b16 %v7543, %v7542
    %7608 = vmatprep.subr.bf16.mxu0 0
    %7609 = vmatpush1.bf16.msra.mxu0 %v7544
    %7610 = vmatprep.subr.bf16.mxu0 0
    %7611 = vmatpush1.bf16.msra.mxu0 %v7545
    %7612 = vmatprep.subr.bf16.mxu0 0
    %7613 = vmatpush1.bf16.msra.mxu0 %v7546
    %7614 = vmatprep.subr.bf16.mxu0 0
    %7615 = vmatpush1.bf16.msra.mxu0 %v7547
    %7616 = vmatprep.subr.bf16.mxu0 0
    %7617 = vmatpush1.bf16.msra.mxu0 %v7548
    %7618 = vmatprep.subr.bf16.mxu0 0
    %7619 = vmatpush1.bf16.msra.mxu0 %v7549
    %7620 = vmatprep.subr.bf16.mxu0 0
    %7621 = vmatpush1.bf16.msra.mxu0 %v7550
    %7622 = vmatprep.subr.bf16.mxu0 0
    %7623 = vmatpush1.bf16.msra.mxu0 %v7551
    %7624 = vmatprep.subr.bf16.mxu0 0
    %7625 = vmatpush1.bf16.msra.mxu0 %v7552
    %7626 = vmatprep.subr.bf16.mxu0 0
    %7627 = vmatpush1.bf16.msra.mxu0 %v7553
    %7628 = vmatprep.subr.bf16.mxu0 0
    %7629 = vmatpush1.bf16.msra.mxu0 %v7554
    %7630 = vmatprep.subr.bf16.mxu0 0
    %7631 = vmatpush1.bf16.msra.mxu0 %v7555
    %7632 = vmatprep.subr.bf16.mxu0 0
    %7633 = vmatpush1.bf16.msra.mxu0 %v7556
    %7634 = vmatprep.subr.bf16.mxu0 0
    %7635 = vmatpush1.bf16.msra.mxu0 %v7557
    %7636 = vmatprep.subr.bf16.mxu0 0
    %7637 = vmatpush1.bf16.msra.mxu0 %v7558
    %7638 = vmatprep.subr.bf16.mxu0 0
    %7639 = vmatpush1.bf16.msra.mxu0 %v7559
    %7640 = vmatprep.mubr.bf16.mxu0 %v7342
    %7641 = vmatmul.mubr.bf16.gmra.mrb[0].mxu0 %v7341
    %v7642 = vpop.f32.mrb[0].mxu0
    %v7643 = vadd.f32 %v7414, %v7642
    %v7644 = vpop.f32.mrb[0].mxu0
    %v7645 = vpop.f32.mrb[0].mxu0
    %v7646 = vpop.f32.mrb[0].mxu0
    %7647 = vdwg.mxu0
    %7648 = vmatprep.subr.bf16.mxu0 0
    %7649 = vmatpush1.bf16.msra.mxu0 %v7560
    %7650 = vmatprep.subr.bf16.mxu0 0
    %7651 = vmatpush1.bf16.msra.mxu0 %v7561
    %7652 = vmatprep.subr.bf16.mxu0 0
    %7653 = vmatpush1.bf16.msra.mxu0 %v7562
    %7654 = vmatprep.subr.bf16.mxu0 0
    %7655 = vmatpush1.bf16.msra.mxu0 %v7563
    %7656 = vmatprep.subr.bf16.mxu0 0
    %7657 = vmatpush1.bf16.msra.mxu0 %v7564
    %7658 = vmatprep.subr.bf16.mxu0 0
    %7659 = vmatpush1.bf16.msra.mxu0 %v7565
    %7660 = vmatprep.subr.bf16.mxu0 0
    %7661 = vmatpush1.bf16.msra.mxu0 %v7566
    %7662 = vmatprep.subr.bf16.mxu0 0
    %7663 = vmatpush1.bf16.msra.mxu0 %v7567
    %7664 = vmatprep.subr.bf16.mxu0 0
    %7665 = vmatpush1.bf16.msra.mxu0 %v7568
    %7666 = vmatprep.subr.bf16.mxu0 0
    %7667 = vmatpush1.bf16.msra.mxu0 %v7569
    %7668 = vmatprep.subr.bf16.mxu0 0
    %7669 = vmatpush1.bf16.msra.mxu0 %v7570
    %7670 = vmatprep.subr.bf16.mxu0 0
    %7671 = vmatpush1.bf16.msra.mxu0 %v7571
    %7672 = vmatprep.subr.bf16.mxu0 0
    %7673 = vmatpush1.bf16.msra.mxu0 %v7572
    %7674 = vmatprep.subr.bf16.mxu0 0
    %7675 = vmatpush1.bf16.msra.mxu0 %v7573
    %7676 = vmatprep.subr.bf16.mxu0 0
    %7677 = vmatpush1.bf16.msra.mxu0 %v7574
    %7678 = vmatprep.subr.bf16.mxu0 0
    %7679 = vmatpush1.bf16.msra.mxu0 %v7575
    %7680 = vmatprep.mubr.bf16.mxu0 %v7344
    %7681 = vmatmul.mubr.bf16.gmra.mrb[0].mxu0 %v7343
    %v7682 = vpop.f32.mrb[0].mxu0
    %v7683 = vadd.f32 %v7643, %v7682
    %v7684 = vpop.f32.mrb[0].mxu0
    %v7685 = vpop.f32.mrb[0].mxu0
    %v7686 = vpop.f32.mrb[0].mxu0
    %7687 = vdwg.mxu0
    %7688 = vst [vmem:[%s11] sm:$0xff] %v7683
    // Predicated region
    $region86: #{qnetwork_forward.1} parent=1 // pred_check
      _
    $region87: #{qnetwork_forward.1} parent=1 // pred_check_branch
      %7690 = sbr.rel (0) target = $region89
    $region88: #{qnetwork_forward.1} parent=1 // pred_region
      _
    $region89: #{qnetwork_forward.1} parent=1 // pred_fallthru
      _
    // Predicated region
    $region90: #{qnetwork_forward.1} parent=1 // pred_check
      _
    $region91: #{qnetwork_forward.1} parent=1 // pred_check_branch
      %7692 = sbr.rel (0) target = $region93
    $region92: #{qnetwork_forward.1} parent=1 // pred_region
      _
    $region93: #{qnetwork_forward.1} parent=1 // pred_fallthru
      _
    %7693 = vsyncpa [#allocation3], 1
    %7694 = vsyncpa [#allocation5], 1
    %7695 = vsyncpa [#allocation8], 1
    %7696 = vsyncpa [#allocation11], 1
    %7697 = vsyncpa [#allocation14], 1
    %7698 = vsyncpa [#allocation17], 1

</llo_original>
